<compile_context>
chip_gen: v7x
topology: tpu7x:2x2x1
jax: 0.10.0
libtpu: 0.0.40
codegen_flags: <defaults>
</compile_context>

<pallas_src>
import numpy as np
import jax
import jax.numpy as jnp
from jax import lax
from jax.experimental import pallas as pl
from jax.experimental.pallas import tpu as pltpu


B_TILE = 8  # images per grid step


# --------------------------------------------------------------------------
# Pallas kernel: forward pass for B_TILE images per grid step
# --------------------------------------------------------------------------
def _binary_classifier_kernel(x_ref, at_ref, as_ref, w1_ref, b1_ref,
                              w2_ref, b2_ref, w3_ref, b3_ref,
                              p2_ref, p3_ref, o_ref):
    f32 = jnp.float32
    B = o_ref.shape[0]                                   # images in this step

    # --- AvgPool2d(8, s=4, p=2), pass 1 (pool over w), batched, bf16 MXU ----
    xb = x_ref[...].astype(jnp.bfloat16)                 # (B*256, 256)
    t = jnp.dot(xb, at_ref[...], preferred_element_type=f32)   # (B*256, 64)
    tb = t.astype(jnp.bfloat16)

    # --- pass 2 (pool over h), per image; LHS rows are dh-major so conv1's
    #     stride-4 row gather becomes contiguous 16-row slices ---------------
    ys = [jnp.dot(as_ref[...], tb[b * 256:(b + 1) * 256, :],
                  preferred_element_type=f32) for b in range(B)]  # (64, 64) ea

    # --- Conv2d(1, 4, 4, stride=4) + ReLU: 4 batched matmuls ----------------
    f1 = jnp.zeros((B * 16, 64), f32)
    for dh in range(4):
        g = jnp.concatenate([ys[b][dh * 16:(dh + 1) * 16, :] for b in range(B)],
                            axis=0)                               # (B*16, 64)
        f1 = f1 + jnp.dot(g, w1_ref[dh * 64:(dh + 1) * 64, :],
                          preferred_element_type=f32)
    f1 = jnp.maximum(f1 + b1_ref[...], 0.0)              # F1[b*16+oh, co*16+ow]

    # --- Conv2d(4, 4, 4, stride=4) + ReLU -----------------------------------
    # permutation matmul regroups rows to (dh, b, oh2) so each dh is contiguous
    g2 = jnp.dot(p2_ref[...], f1, preferred_element_type=f32)    # (B*16, 64)
    f2 = jnp.zeros((B * 4, 16), f32)
    for dh in range(4):
        f2 = f2 + jnp.dot(g2[dh * (B * 4):(dh + 1) * (B * 4), :],
                          w2_ref[dh * 64:(dh + 1) * 64, :],
                          preferred_element_type=f32)
    f2 = jnp.maximum(f2 + b2_ref[...], 0.0)              # F2[b*4+oh, co*4+ow]

    # --- Conv2d(4, 2, 4, stride=1) (4x4 -> 1x1) + ReLU ----------------------
    g3 = jnp.dot(p3_ref[...], f2, preferred_element_type=f32)    # (B*4, 16)
    logits = jnp.zeros((B, 2), f32)
    for dh in range(4):
        logits = logits + jnp.dot(g3[dh * B:(dh + 1) * B, :],
                                  w3_ref[dh * 16:(dh + 1) * 16, :],
                                  preferred_element_type=f32)
    logits = jnp.maximum(logits + b3_ref[...], 0.0)      # (B, 2)

    # --- Softmax over the 2 output channels ---------------------------------
    m = jnp.max(logits, axis=-1, keepdims=True)
    e = jnp.exp(logits - m)
    p = e / jnp.sum(e, axis=-1, keepdims=True)

    # --- lane-dense output: pad (B, 2) -> (B, 128), one unmasked vreg store -
    lane = lax.broadcasted_iota(jnp.int32, (B, 128), 1)
    o_ref[...] = jnp.where(lane == 0, p[:, 0:1],
                           jnp.where(lane == 1, p[:, 1:2], 0.0))


# --------------------------------------------------------------------------
# Glue: pack PyTorch-layout weights into matmul operands (pure numpy)
# --------------------------------------------------------------------------
def build_constants(W1, b1, W2, b2, W3, b3, block_b=B_TILE):
    # AvgPool matrix (1/8 per row/col pass -> 1/64 total; zero padding handled
    # by clipping the window => exact count_include_pad=True semantics).
    A = np.zeros((64, 256), np.float32)
    for i in range(64):
        lo, hi = 4 * i - 2, 4 * i + 6
        A[i, max(lo, 0):min(hi, 256)] = 1.0 / 8.0
    AT = A.T.copy()
    # dh-major row order: As[dh*16+oh, :] = A[4*oh+dh, :]
    As = np.zeros((64, 256), np.float32)
    for dh in range(4):
        for oh in range(16):
            As[dh * 16 + oh, :] = A[4 * oh + dh, :]

    # Conv1 (in=1, out=4, k=s=4): per-dh blocks contract over w=4*ow+dw
    W1T = np.zeros((256, 64), np.float32)
    for dh in range(4):
        for co in range(4):
            for ow in range(16):
                for dw in range(4):
                    W1T[dh * 64 + 4 * ow + dw, co * 16 + ow] = W1[co, 0, dh, dw]
    B1 = np.zeros((1, 64), np.float32)
    for co in range(4):
        B1[0, co * 16:(co + 1) * 16] = b1[co]

    # Conv2 (in=4, out=4, k=s=4): per-dh blocks contract over (ci, 4*ow+dw)
    W2T = np.zeros((256, 16), np.float32)
    for dh in range(4):
        for co in range(4):
            for ci in range(4):
                for ow in range(4):
                    for dw in range(4):
                        W2T[dh * 64 + ci * 16 + 4 * ow + dw, co * 4 + ow] = \
                            W2[co, ci, dh, dw]
    B2 = np.zeros((1, 16), np.float32)
    for co in range(4):
        B2[0, co * 4:(co + 1) * 4] = b2[co]

    # Conv3 (in=4, out=2, k=4, s=1): per-dh blocks contract over (ci, dw)
    W3T = np.zeros((64, 2), np.float32)
    for dh in range(4):
        for co in range(2):
            for ci in range(4):
                for dw in range(4):
                    W3T[dh * 16 + ci * 4 + dw, co] = W3[co, ci, dh, dw]
    B3 = b3.reshape(1, 2).astype(np.float32)

    # Row-permutation matrices for the conv2 / conv3 batched gathers.
    P2 = np.zeros((block_b * 16, block_b * 16), np.float32)
    for dh in range(4):
        for b in range(block_b):
            for oh2 in range(4):
                P2[dh * (block_b * 4) + b * 4 + oh2, b * 16 + 4 * oh2 + dh] = 1.0
    P3 = np.zeros((block_b * 4, block_b * 4), np.float32)
    for dh in range(4):
        for b in range(block_b):
            P3[dh * block_b + b, b * 4 + dh] = 1.0

    return (jnp.asarray(AT, jnp.bfloat16), jnp.asarray(As, jnp.bfloat16),
            jnp.asarray(W1T), jnp.asarray(B1),
            jnp.asarray(W2T), jnp.asarray(B2),
            jnp.asarray(W3T), jnp.asarray(B3),
            jnp.asarray(P2), jnp.asarray(P3))


# --------------------------------------------------------------------------
# Wrapper calling pallas_call
# --------------------------------------------------------------------------
def binary_classifier_forward(x_nchw, consts, block_b=B_TILE):
    N, C, H, W = x_nchw.shape
    assert C == 1 and H == 256 and W == 256, "module requires (N,1,256,256)"
    AT, As, W1T, B1, W2T, B2, W3T, B3, P2, P3 = consts

    S = pl.cdiv(N, block_b)
    Np = S * block_b
    x3 = x_nchw.reshape(N, H, W)
    if Np != N:
        x3 = jnp.concatenate(
            [x3, jnp.zeros((Np - N, H, W), x3.dtype)], axis=0)
    x2d = x3.reshape(Np * H, W)            # free reshape, row-major contiguous

    def const_spec(shape):
        return pl.BlockSpec(shape, lambda s: (0,) * len(shape))

    out = pl.pallas_call(
        _binary_classifier_kernel,
        out_shape=jax.ShapeDtypeStruct((Np, 128), jnp.float32),
        grid=(S,),
        in_specs=[
            pl.BlockSpec((block_b * H, W), lambda s: (s, 0)),  # B images / step
            const_spec((256, 64)),              # A^T (bf16)
            const_spec((64, 256)),              # A, dh-major rows (bf16)
            const_spec((256, 64)),              # W1T
            const_spec((1, 64)),                # bias1 (broadcast row)
            const_spec((256, 16)),              # W2T
            const_spec((1, 16)),                # bias2
            const_spec((64, 2)),                # W3T
            const_spec((1, 2)),                 # bias3
            const_spec((block_b * 16, block_b * 16)),  # P2 row permutation
            const_spec((block_b * 4, block_b * 4)),    # P3 row permutation
        ],
        out_specs=pl.BlockSpec((block_b, 128), lambda s: (s, 0)),
        compiler_params=pltpu.CompilerParams(
            dimension_semantics=("parallel",),
            vmem_limit_bytes=32 * 1024 * 1024),
    )(x2d, AT, As, W1T, B1, W2T, B2, W3T, B3, P2, P3)

    return out[:N, :2].reshape(N, 2, 1)


# --------------------------------------------------------------------------
# Pure-JAX reference (mirrors the PyTorch module exactly)
# --------------------------------------------------------------------------
def reference_forward(x_nchw, W1, b1, W2, b2, W3, b3):
    N = x_nchw.shape[0]
    x = x_nchw[:, 0]                                           # (N, 256, 256)
    y = lax.reduce_window(x, 0.0, lax.add, (1, 8, 8), (1, 4, 4),
                          [(0, 0), (2, 2), (2, 2)]) / 64.0     # (N, 64, 64)
    h = y[:, None]                                             # (N, 1, 64, 64)
    dn = ('NCHW', 'OIHW', 'NCHW')
    hp = lax.Precision.HIGHEST
    h = lax.conv_general_dilated(h, W1, (4, 4), 'VALID', dimension_numbers=dn,
                                 precision=hp) + b1[None, :, None, None]
    h = jnp.maximum(h, 0.0)
    h = lax.conv_general_dilated(h, W2, (4, 4), 'VALID', dimension_numbers=dn,
                                 precision=hp) + b2[None, :, None, None]
    h = jnp.maximum(h, 0.0)
    h = lax.conv_general_dilated(h, W3, (1, 1), 'VALID', dimension_numbers=dn,
                                 precision=hp) + b3[None, :, None, None]
    h = jnp.maximum(h, 0.0)                                    # (N, 2, 1, 1)
    p = jax.nn.softmax(h, axis=1)
    return p.reshape(N, 2, 1)


if __name__ == "__main__":
    key = jax.random.PRNGKey(0)
    kx, k1, k2, k3, k4, k5, k6 = jax.random.split(key, 7)

    N = 16                                    # 2 grid steps of B_TILE=8 images
    x = jax.random.normal(kx, (N, 1, 256, 256), jnp.float32)

    # Deterministic synthetic parameters (PyTorch Conv2d weight layout OIHW).
    W1 = 0.25 * jax.random.normal(k1, (4, 1, 4, 4), jnp.float32)
    b1 = 0.1 * jax.random.normal(k2, (4,), jnp.float32)
    W2 = 0.125 * jax.random.normal(k3, (4, 4, 4, 4), jnp.float32)
    b2 = 0.1 * jax.random.normal(k4, (4,), jnp.float32)
    W3 = 0.125 * jax.random.normal(k5, (2, 4, 4, 4), jnp.float32)
    b3 = 0.1 * jax.random.normal(k6, (2,), jnp.float32)

    consts = build_constants(np.asarray(W1), np.asarray(b1),
                             np.asarray(W2), np.asarray(b2),
                             np.asarray(W3), np.asarray(b3),
                             block_b=B_TILE)

    out = binary_classifier_forward(x, consts)
    out = jax.block_until_ready(out)

    ref = jax.block_until_ready(reference_forward(x, W1, b1, W2, b2, W3, b3))

    assert out.shape == (N, 2, 1)
    np.testing.assert_allclose(np.asarray(out), np.asarray(ref),
                               atol=5e-3, rtol=0)
    print("KERNEL_OK")
</pallas_src>

<mosaic_0001>
module attributes {stable_mosaic.version = 11 : i64} {
  func.func @_binary_classifier_kernel(%arg0: i32, %arg1: memref<2048x256xf32, #tpu.memory_space<vmem>>, %arg2: memref<256x64xbf16, #tpu.memory_space<vmem>>, %arg3: memref<64x256xbf16, #tpu.memory_space<vmem>>, %arg4: memref<256x64xf32, #tpu.memory_space<vmem>>, %arg5: memref<1x64xf32, #tpu.memory_space<vmem>>, %arg6: memref<256x16xf32, #tpu.memory_space<vmem>>, %arg7: memref<1x16xf32, #tpu.memory_space<vmem>>, %arg8: memref<64x2xf32, #tpu.memory_space<vmem>>, %arg9: memref<1x2xf32, #tpu.memory_space<vmem>>, %arg10: memref<128x128xf32, #tpu.memory_space<vmem>>, %arg11: memref<32x32xf32, #tpu.memory_space<vmem>>, %arg12: memref<8x128xf32, #tpu.memory_space<vmem>>) attributes {dimension_semantics = [#tpu.dimension_semantics<parallel>], iteration_bounds = array<i64: 2>, scalar_prefetch = 0 : i64, scratch_operands = 0 : i64, tpu.core_type = #tpu.core_type<tc>, window_params = [{transform_indices = @transform_0, window_bounds = array<i64: 2048, 256>}, {pipeline_mode = #tpu.pipeline_mode<synchronous>, transform_indices = @transform_1, window_bounds = array<i64: 256, 64>}, {pipeline_mode = #tpu.pipeline_mode<synchronous>, transform_indices = @transform_2, window_bounds = array<i64: 64, 256>}, {pipeline_mode = #tpu.pipeline_mode<synchronous>, transform_indices = @transform_3, window_bounds = array<i64: 256, 64>}, {pipeline_mode = #tpu.pipeline_mode<synchronous>, transform_indices = @transform_4, window_bounds = array<i64: 1, 64>}, {pipeline_mode = #tpu.pipeline_mode<synchronous>, transform_indices = @transform_5, window_bounds = array<i64: 256, 16>}, {pipeline_mode = #tpu.pipeline_mode<synchronous>, transform_indices = @transform_6, window_bounds = array<i64: 1, 16>}, {pipeline_mode = #tpu.pipeline_mode<synchronous>, transform_indices = @transform_7, window_bounds = array<i64: 64, 2>}, {pipeline_mode = #tpu.pipeline_mode<synchronous>, transform_indices = @transform_8, window_bounds = array<i64: 1, 2>}, {pipeline_mode = #tpu.pipeline_mode<synchronous>, transform_indices = @transform_9, window_bounds = array<i64: 128, 128>}, {pipeline_mode = #tpu.pipeline_mode<synchronous>, transform_indices = @transform_10, window_bounds = array<i64: 32, 32>}, {transform_indices = @transform_11, window_bounds = array<i64: 8, 128>}]} {
    %c0 = arith.constant 0 : index
    %c0_0 = arith.constant 0 : index
    %0 = vector.load %arg1[%c0, %c0_0] : memref<2048x256xf32, #tpu.memory_space<vmem>>, vector<2048x256xf32>
    %1 = arith.truncf %0 : vector<2048x256xf32> to vector<2048x256xbf16>
    %c0_1 = arith.constant 0 : index
    %c0_2 = arith.constant 0 : index
    %2 = vector.load %arg2[%c0_1, %c0_2] : memref<256x64xbf16, #tpu.memory_space<vmem>>, vector<256x64xbf16>
    %cst = arith.constant dense<0.000000e+00> : vector<2048x64xf32>
    %3 = tpu.matmul %1, %2, %cst {dimension_numbers = #tpu.dot_dimension_numbers<[1], [0], [0], [1], [0, 0, 1, 1], [], []>} : vector<2048x256xbf16>, vector<256x64xbf16>, vector<2048x64xf32> -> vector<2048x64xf32>
    %4 = arith.truncf %3 : vector<2048x64xf32> to vector<2048x64xbf16>
    %c0_3 = arith.constant 0 : index
    %c0_4 = arith.constant 0 : index
    %5 = vector.load %arg3[%c0_3, %c0_4] : memref<64x256xbf16, #tpu.memory_space<vmem>>, vector<64x256xbf16>
    %6 = vector.extract_strided_slice %4 {offsets = [0, 0], sizes = [256, 64], strides = [1, 1]} : vector<2048x64xbf16> to vector<256x64xbf16>
    %cst_5 = arith.constant dense<0.000000e+00> : vector<64x64xf32>
    %7 = tpu.matmul %5, %6, %cst_5 {dimension_numbers = #tpu.dot_dimension_numbers<[1], [0], [0], [1], [0, 0, 1, 1], [], []>} : vector<64x256xbf16>, vector<256x64xbf16>, vector<64x64xf32> -> vector<64x64xf32>
    %c0_6 = arith.constant 0 : index
    %c0_7 = arith.constant 0 : index
    %8 = vector.load %arg3[%c0_6, %c0_7] : memref<64x256xbf16, #tpu.memory_space<vmem>>, vector<64x256xbf16>
    %9 = vector.extract_strided_slice %4 {offsets = [256, 0], sizes = [256, 64], strides = [1, 1]} : vector<2048x64xbf16> to vector<256x64xbf16>
    %cst_8 = arith.constant dense<0.000000e+00> : vector<64x64xf32>
    %10 = tpu.matmul %8, %9, %cst_8 {dimension_numbers = #tpu.dot_dimension_numbers<[1], [0], [0], [1], [0, 0, 1, 1], [], []>} : vector<64x256xbf16>, vector<256x64xbf16>, vector<64x64xf32> -> vector<64x64xf32>
    %c0_9 = arith.constant 0 : index
    %c0_10 = arith.constant 0 : index
    %11 = vector.load %arg3[%c0_9, %c0_10] : memref<64x256xbf16, #tpu.memory_space<vmem>>, vector<64x256xbf16>
    %12 = vector.extract_strided_slice %4 {offsets = [512, 0], sizes = [256, 64], strides = [1, 1]} : vector<2048x64xbf16> to vector<256x64xbf16>
    %cst_11 = arith.constant dense<0.000000e+00> : vector<64x64xf32>
    %13 = tpu.matmul %11, %12, %cst_11 {dimension_numbers = #tpu.dot_dimension_numbers<[1], [0], [0], [1], [0, 0, 1, 1], [], []>} : vector<64x256xbf16>, vector<256x64xbf16>, vector<64x64xf32> -> vector<64x64xf32>
    %c0_12 = arith.constant 0 : index
    %c0_13 = arith.constant 0 : index
    %14 = vector.load %arg3[%c0_12, %c0_13] : memref<64x256xbf16, #tpu.memory_space<vmem>>, vector<64x256xbf16>
    %15 = vector.extract_strided_slice %4 {offsets = [768, 0], sizes = [256, 64], strides = [1, 1]} : vector<2048x64xbf16> to vector<256x64xbf16>
    %cst_14 = arith.constant dense<0.000000e+00> : vector<64x64xf32>
    %16 = tpu.matmul %14, %15, %cst_14 {dimension_numbers = #tpu.dot_dimension_numbers<[1], [0], [0], [1], [0, 0, 1, 1], [], []>} : vector<64x256xbf16>, vector<256x64xbf16>, vector<64x64xf32> -> vector<64x64xf32>
    %c0_15 = arith.constant 0 : index
    %c0_16 = arith.constant 0 : index
    %17 = vector.load %arg3[%c0_15, %c0_16] : memref<64x256xbf16, #tpu.memory_space<vmem>>, vector<64x256xbf16>
    %18 = vector.extract_strided_slice %4 {offsets = [1024, 0], sizes = [256, 64], strides = [1, 1]} : vector<2048x64xbf16> to vector<256x64xbf16>
    %cst_17 = arith.constant dense<0.000000e+00> : vector<64x64xf32>
    %19 = tpu.matmul %17, %18, %cst_17 {dimension_numbers = #tpu.dot_dimension_numbers<[1], [0], [0], [1], [0, 0, 1, 1], [], []>} : vector<64x256xbf16>, vector<256x64xbf16>, vector<64x64xf32> -> vector<64x64xf32>
    %c0_18 = arith.constant 0 : index
    %c0_19 = arith.constant 0 : index
    %20 = vector.load %arg3[%c0_18, %c0_19] : memref<64x256xbf16, #tpu.memory_space<vmem>>, vector<64x256xbf16>
    %21 = vector.extract_strided_slice %4 {offsets = [1280, 0], sizes = [256, 64], strides = [1, 1]} : vector<2048x64xbf16> to vector<256x64xbf16>
    %cst_20 = arith.constant dense<0.000000e+00> : vector<64x64xf32>
    %22 = tpu.matmul %20, %21, %cst_20 {dimension_numbers = #tpu.dot_dimension_numbers<[1], [0], [0], [1], [0, 0, 1, 1], [], []>} : vector<64x256xbf16>, vector<256x64xbf16>, vector<64x64xf32> -> vector<64x64xf32>
    %c0_21 = arith.constant 0 : index
    %c0_22 = arith.constant 0 : index
    %23 = vector.load %arg3[%c0_21, %c0_22] : memref<64x256xbf16, #tpu.memory_space<vmem>>, vector<64x256xbf16>
    %24 = vector.extract_strided_slice %4 {offsets = [1536, 0], sizes = [256, 64], strides = [1, 1]} : vector<2048x64xbf16> to vector<256x64xbf16>
    %cst_23 = arith.constant dense<0.000000e+00> : vector<64x64xf32>
    %25 = tpu.matmul %23, %24, %cst_23 {dimension_numbers = #tpu.dot_dimension_numbers<[1], [0], [0], [1], [0, 0, 1, 1], [], []>} : vector<64x256xbf16>, vector<256x64xbf16>, vector<64x64xf32> -> vector<64x64xf32>
    %c0_24 = arith.constant 0 : index
    %c0_25 = arith.constant 0 : index
    %26 = vector.load %arg3[%c0_24, %c0_25] : memref<64x256xbf16, #tpu.memory_space<vmem>>, vector<64x256xbf16>
    %27 = vector.extract_strided_slice %4 {offsets = [1792, 0], sizes = [256, 64], strides = [1, 1]} : vector<2048x64xbf16> to vector<256x64xbf16>
    %cst_26 = arith.constant dense<0.000000e+00> : vector<64x64xf32>
    %28 = tpu.matmul %26, %27, %cst_26 {dimension_numbers = #tpu.dot_dimension_numbers<[1], [0], [0], [1], [0, 0, 1, 1], [], []>} : vector<64x256xbf16>, vector<256x64xbf16>, vector<64x64xf32> -> vector<64x64xf32>
    %cst_27 = arith.constant 0.000000e+00 : f32
    %29 = vector.broadcast %cst_27 : f32 to vector<128x64xf32>
    %30 = vector.extract_strided_slice %7 {offsets = [0, 0], sizes = [16, 64], strides = [1, 1]} : vector<64x64xf32> to vector<16x64xf32>
    %31 = vector.extract_strided_slice %10 {offsets = [0, 0], sizes = [16, 64], strides = [1, 1]} : vector<64x64xf32> to vector<16x64xf32>
    %32 = vector.extract_strided_slice %13 {offsets = [0, 0], sizes = [16, 64], strides = [1, 1]} : vector<64x64xf32> to vector<16x64xf32>
    %33 = vector.extract_strided_slice %16 {offsets = [0, 0], sizes = [16, 64], strides = [1, 1]} : vector<64x64xf32> to vector<16x64xf32>
    %34 = vector.extract_strided_slice %19 {offsets = [0, 0], sizes = [16, 64], strides = [1, 1]} : vector<64x64xf32> to vector<16x64xf32>
    %35 = vector.extract_strided_slice %22 {offsets = [0, 0], sizes = [16, 64], strides = [1, 1]} : vector<64x64xf32> to vector<16x64xf32>
    %36 = vector.extract_strided_slice %25 {offsets = [0, 0], sizes = [16, 64], strides = [1, 1]} : vector<64x64xf32> to vector<16x64xf32>
    %37 = vector.extract_strided_slice %28 {offsets = [0, 0], sizes = [16, 64], strides = [1, 1]} : vector<64x64xf32> to vector<16x64xf32>
    %38 = tpu.concatenate %30, %31, %32, %33, %34, %35, %36, %37 in 0 : vector<16x64xf32>, vector<16x64xf32>, vector<16x64xf32>, vector<16x64xf32>, vector<16x64xf32>, vector<16x64xf32>, vector<16x64xf32>, vector<16x64xf32> -> vector<128x64xf32>
    %c0_28 = arith.constant 0 : index
    %c0_29 = arith.constant 0 : index
    %39 = vector.load %arg4[%c0_28, %c0_29] : memref<256x64xf32, #tpu.memory_space<vmem>>, vector<64x64xf32>
    %cst_30 = arith.constant dense<0.000000e+00> : vector<128x64xf32>
    %40 = tpu.matmul %38, %39, %cst_30 {dimension_numbers = #tpu.dot_dimension_numbers<[1], [0], [0], [1], [0, 0, 1, 1], [], []>} : vector<128x64xf32>, vector<64x64xf32>, vector<128x64xf32> -> vector<128x64xf32>
    %41 = arith.addf %29, %40 : vector<128x64xf32>
    %42 = vector.extract_strided_slice %7 {offsets = [16, 0], sizes = [16, 64], strides = [1, 1]} : vector<64x64xf32> to vector<16x64xf32>
    %43 = vector.extract_strided_slice %10 {offsets = [16, 0], sizes = [16, 64], strides = [1, 1]} : vector<64x64xf32> to vector<16x64xf32>
    %44 = vector.extract_strided_slice %13 {offsets = [16, 0], sizes = [16, 64], strides = [1, 1]} : vector<64x64xf32> to vector<16x64xf32>
    %45 = vector.extract_strided_slice %16 {offsets = [16, 0], sizes = [16, 64], strides = [1, 1]} : vector<64x64xf32> to vector<16x64xf32>
    %46 = vector.extract_strided_slice %19 {offsets = [16, 0], sizes = [16, 64], strides = [1, 1]} : vector<64x64xf32> to vector<16x64xf32>
    %47 = vector.extract_strided_slice %22 {offsets = [16, 0], sizes = [16, 64], strides = [1, 1]} : vector<64x64xf32> to vector<16x64xf32>
    %48 = vector.extract_strided_slice %25 {offsets = [16, 0], sizes = [16, 64], strides = [1, 1]} : vector<64x64xf32> to vector<16x64xf32>
    %49 = vector.extract_strided_slice %28 {offsets = [16, 0], sizes = [16, 64], strides = [1, 1]} : vector<64x64xf32> to vector<16x64xf32>
    %50 = tpu.concatenate %42, %43, %44, %45, %46, %47, %48, %49 in 0 : vector<16x64xf32>, vector<16x64xf32>, vector<16x64xf32>, vector<16x64xf32>, vector<16x64xf32>, vector<16x64xf32>, vector<16x64xf32>, vector<16x64xf32> -> vector<128x64xf32>
    %c64 = arith.constant 64 : index
    %c0_31 = arith.constant 0 : index
    %51 = vector.load %arg4[%c64, %c0_31] : memref<256x64xf32, #tpu.memory_space<vmem>>, vector<64x64xf32>
    %cst_32 = arith.constant dense<0.000000e+00> : vector<128x64xf32>
    %52 = tpu.matmul %50, %51, %cst_32 {dimension_numbers = #tpu.dot_dimension_numbers<[1], [0], [0], [1], [0, 0, 1, 1], [], []>} : vector<128x64xf32>, vector<64x64xf32>, vector<128x64xf32> -> vector<128x64xf32>
    %53 = arith.addf %41, %52 : vector<128x64xf32>
    %54 = vector.extract_strided_slice %7 {offsets = [32, 0], sizes = [16, 64], strides = [1, 1]} : vector<64x64xf32> to vector<16x64xf32>
    %55 = vector.extract_strided_slice %10 {offsets = [32, 0], sizes = [16, 64], strides = [1, 1]} : vector<64x64xf32> to vector<16x64xf32>
    %56 = vector.extract_strided_slice %13 {offsets = [32, 0], sizes = [16, 64], strides = [1, 1]} : vector<64x64xf32> to vector<16x64xf32>
    %57 = vector.extract_strided_slice %16 {offsets = [32, 0], sizes = [16, 64], strides = [1, 1]} : vector<64x64xf32> to vector<16x64xf32>
    %58 = vector.extract_strided_slice %19 {offsets = [32, 0], sizes = [16, 64], strides = [1, 1]} : vector<64x64xf32> to vector<16x64xf32>
    %59 = vector.extract_strided_slice %22 {offsets = [32, 0], sizes = [16, 64], strides = [1, 1]} : vector<64x64xf32> to vector<16x64xf32>
    %60 = vector.extract_strided_slice %25 {offsets = [32, 0], sizes = [16, 64], strides = [1, 1]} : vector<64x64xf32> to vector<16x64xf32>
    %61 = vector.extract_strided_slice %28 {offsets = [32, 0], sizes = [16, 64], strides = [1, 1]} : vector<64x64xf32> to vector<16x64xf32>
    %62 = tpu.concatenate %54, %55, %56, %57, %58, %59, %60, %61 in 0 : vector<16x64xf32>, vector<16x64xf32>, vector<16x64xf32>, vector<16x64xf32>, vector<16x64xf32>, vector<16x64xf32>, vector<16x64xf32>, vector<16x64xf32> -> vector<128x64xf32>
    %c128 = arith.constant 128 : index
    %c0_33 = arith.constant 0 : index
    %63 = vector.load %arg4[%c128, %c0_33] : memref<256x64xf32, #tpu.memory_space<vmem>>, vector<64x64xf32>
    %cst_34 = arith.constant dense<0.000000e+00> : vector<128x64xf32>
    %64 = tpu.matmul %62, %63, %cst_34 {dimension_numbers = #tpu.dot_dimension_numbers<[1], [0], [0], [1], [0, 0, 1, 1], [], []>} : vector<128x64xf32>, vector<64x64xf32>, vector<128x64xf32> -> vector<128x64xf32>
    %65 = arith.addf %53, %64 : vector<128x64xf32>
    %66 = vector.extract_strided_slice %7 {offsets = [48, 0], sizes = [16, 64], strides = [1, 1]} : vector<64x64xf32> to vector<16x64xf32>
    %67 = vector.extract_strided_slice %10 {offsets = [48, 0], sizes = [16, 64], strides = [1, 1]} : vector<64x64xf32> to vector<16x64xf32>
    %68 = vector.extract_strided_slice %13 {offsets = [48, 0], sizes = [16, 64], strides = [1, 1]} : vector<64x64xf32> to vector<16x64xf32>
    %69 = vector.extract_strided_slice %16 {offsets = [48, 0], sizes = [16, 64], strides = [1, 1]} : vector<64x64xf32> to vector<16x64xf32>
    %70 = vector.extract_strided_slice %19 {offsets = [48, 0], sizes = [16, 64], strides = [1, 1]} : vector<64x64xf32> to vector<16x64xf32>
    %71 = vector.extract_strided_slice %22 {offsets = [48, 0], sizes = [16, 64], strides = [1, 1]} : vector<64x64xf32> to vector<16x64xf32>
    %72 = vector.extract_strided_slice %25 {offsets = [48, 0], sizes = [16, 64], strides = [1, 1]} : vector<64x64xf32> to vector<16x64xf32>
    %73 = vector.extract_strided_slice %28 {offsets = [48, 0], sizes = [16, 64], strides = [1, 1]} : vector<64x64xf32> to vector<16x64xf32>
    %74 = tpu.concatenate %66, %67, %68, %69, %70, %71, %72, %73 in 0 : vector<16x64xf32>, vector<16x64xf32>, vector<16x64xf32>, vector<16x64xf32>, vector<16x64xf32>, vector<16x64xf32>, vector<16x64xf32>, vector<16x64xf32> -> vector<128x64xf32>
    %c192 = arith.constant 192 : index
    %c0_35 = arith.constant 0 : index
    %75 = vector.load %arg4[%c192, %c0_35] : memref<256x64xf32, #tpu.memory_space<vmem>>, vector<64x64xf32>
    %cst_36 = arith.constant dense<0.000000e+00> : vector<128x64xf32>
    %76 = tpu.matmul %74, %75, %cst_36 {dimension_numbers = #tpu.dot_dimension_numbers<[1], [0], [0], [1], [0, 0, 1, 1], [], []>} : vector<128x64xf32>, vector<64x64xf32>, vector<128x64xf32> -> vector<128x64xf32>
    %77 = arith.addf %65, %76 : vector<128x64xf32>
    %c0_37 = arith.constant 0 : index
    %c0_38 = arith.constant 0 : index
    %78 = vector.load %arg5[%c0_37, %c0_38] : memref<1x64xf32, #tpu.memory_space<vmem>>, vector<1x64xf32>
    %79 = vector.broadcast %78 : vector<1x64xf32> to vector<128x64xf32>
    %80 = arith.addf %77, %79 : vector<128x64xf32>
    %cst_39 = arith.constant 0.000000e+00 : f32
    %81 = vector.broadcast %cst_39 : f32 to vector<128x64xf32>
    %82 = arith.maximumf %80, %81 : vector<128x64xf32>
    %c0_40 = arith.constant 0 : index
    %c0_41 = arith.constant 0 : index
    %83 = vector.load %arg10[%c0_40, %c0_41] : memref<128x128xf32, #tpu.memory_space<vmem>>, vector<128x128xf32>
    %cst_42 = arith.constant dense<0.000000e+00> : vector<128x64xf32>
    %84 = tpu.matmul %83, %82, %cst_42 {dimension_numbers = #tpu.dot_dimension_numbers<[1], [0], [0], [1], [0, 0, 1, 1], [], []>} : vector<128x128xf32>, vector<128x64xf32>, vector<128x64xf32> -> vector<128x64xf32>
    %cst_43 = arith.constant 0.000000e+00 : f32
    %85 = vector.broadcast %cst_43 : f32 to vector<32x16xf32>
    %86 = vector.extract_strided_slice %84 {offsets = [0, 0], sizes = [32, 64], strides = [1, 1]} : vector<128x64xf32> to vector<32x64xf32>
    %c0_44 = arith.constant 0 : index
    %c0_45 = arith.constant 0 : index
    %87 = vector.load %arg6[%c0_44, %c0_45] : memref<256x16xf32, #tpu.memory_space<vmem>>, vector<64x16xf32>
    %cst_46 = arith.constant dense<0.000000e+00> : vector<32x16xf32>
    %88 = tpu.matmul %86, %87, %cst_46 {dimension_numbers = #tpu.dot_dimension_numbers<[1], [0], [0], [1], [0, 0, 1, 1], [], []>} : vector<32x64xf32>, vector<64x16xf32>, vector<32x16xf32> -> vector<32x16xf32>
    %89 = arith.addf %85, %88 : vector<32x16xf32>
    %90 = vector.extract_strided_slice %84 {offsets = [32, 0], sizes = [32, 64], strides = [1, 1]} : vector<128x64xf32> to vector<32x64xf32>
    %c64_47 = arith.constant 64 : index
    %c0_48 = arith.constant 0 : index
    %91 = vector.load %arg6[%c64_47, %c0_48] : memref<256x16xf32, #tpu.memory_space<vmem>>, vector<64x16xf32>
    %cst_49 = arith.constant dense<0.000000e+00> : vector<32x16xf32>
    %92 = tpu.matmul %90, %91, %cst_49 {dimension_numbers = #tpu.dot_dimension_numbers<[1], [0], [0], [1], [0, 0, 1, 1], [], []>} : vector<32x64xf32>, vector<64x16xf32>, vector<32x16xf32> -> vector<32x16xf32>
    %93 = arith.addf %89, %92 : vector<32x16xf32>
    %94 = vector.extract_strided_slice %84 {offsets = [64, 0], sizes = [32, 64], strides = [1, 1]} : vector<128x64xf32> to vector<32x64xf32>
    %c128_50 = arith.constant 128 : index
    %c0_51 = arith.constant 0 : index
    %95 = vector.load %arg6[%c128_50, %c0_51] : memref<256x16xf32, #tpu.memory_space<vmem>>, vector<64x16xf32>
    %cst_52 = arith.constant dense<0.000000e+00> : vector<32x16xf32>
    %96 = tpu.matmul %94, %95, %cst_52 {dimension_numbers = #tpu.dot_dimension_numbers<[1], [0], [0], [1], [0, 0, 1, 1], [], []>} : vector<32x64xf32>, vector<64x16xf32>, vector<32x16xf32> -> vector<32x16xf32>
    %97 = arith.addf %93, %96 : vector<32x16xf32>
    %98 = vector.extract_strided_slice %84 {offsets = [96, 0], sizes = [32, 64], strides = [1, 1]} : vector<128x64xf32> to vector<32x64xf32>
    %c192_53 = arith.constant 192 : index
    %c0_54 = arith.constant 0 : index
    %99 = vector.load %arg6[%c192_53, %c0_54] : memref<256x16xf32, #tpu.memory_space<vmem>>, vector<64x16xf32>
    %cst_55 = arith.constant dense<0.000000e+00> : vector<32x16xf32>
    %100 = tpu.matmul %98, %99, %cst_55 {dimension_numbers = #tpu.dot_dimension_numbers<[1], [0], [0], [1], [0, 0, 1, 1], [], []>} : vector<32x64xf32>, vector<64x16xf32>, vector<32x16xf32> -> vector<32x16xf32>
    %101 = arith.addf %97, %100 : vector<32x16xf32>
    %c0_56 = arith.constant 0 : index
    %c0_57 = arith.constant 0 : index
    %102 = vector.load %arg7[%c0_56, %c0_57] : memref<1x16xf32, #tpu.memory_space<vmem>>, vector<1x16xf32>
    %103 = vector.broadcast %102 : vector<1x16xf32> to vector<32x16xf32>
    %104 = arith.addf %101, %103 : vector<32x16xf32>
    %cst_58 = arith.constant 0.000000e+00 : f32
    %105 = vector.broadcast %cst_58 : f32 to vector<32x16xf32>
    %106 = arith.maximumf %104, %105 : vector<32x16xf32>
    %c0_59 = arith.constant 0 : index
    %c0_60 = arith.constant 0 : index
    %107 = vector.load %arg11[%c0_59, %c0_60] : memref<32x32xf32, #tpu.memory_space<vmem>>, vector<32x32xf32>
    %cst_61 = arith.constant dense<0.000000e+00> : vector<32x16xf32>
    %108 = tpu.matmul %107, %106, %cst_61 {dimension_numbers = #tpu.dot_dimension_numbers<[1], [0], [0], [1], [0, 0, 1, 1], [], []>} : vector<32x32xf32>, vector<32x16xf32>, vector<32x16xf32> -> vector<32x16xf32>
    %cst_62 = arith.constant 0.000000e+00 : f32
    %109 = vector.broadcast %cst_62 : f32 to vector<8x2xf32>
    %110 = vector.extract_strided_slice %108 {offsets = [0, 0], sizes = [8, 16], strides = [1, 1]} : vector<32x16xf32> to vector<8x16xf32>
    %c0_63 = arith.constant 0 : index
    %c0_64 = arith.constant 0 : index
    %111 = vector.load %arg8[%c0_63, %c0_64] : memref<64x2xf32, #tpu.memory_space<vmem>>, vector<16x2xf32>
    %cst_65 = arith.constant dense<0.000000e+00> : vector<8x2xf32>
    %112 = tpu.matmul %110, %111, %cst_65 {dimension_numbers = #tpu.dot_dimension_numbers<[1], [0], [0], [1], [0, 0, 1, 1], [], []>} : vector<8x16xf32>, vector<16x2xf32>, vector<8x2xf32> -> vector<8x2xf32>
    %113 = arith.addf %109, %112 : vector<8x2xf32>
    %114 = vector.extract_strided_slice %108 {offsets = [8, 0], sizes = [8, 16], strides = [1, 1]} : vector<32x16xf32> to vector<8x16xf32>
    %c16 = arith.constant 16 : index
    %c0_66 = arith.constant 0 : index
    %115 = vector.load %arg8[%c16, %c0_66] : memref<64x2xf32, #tpu.memory_space<vmem>>, vector<16x2xf32>
    %cst_67 = arith.constant dense<0.000000e+00> : vector<8x2xf32>
    %116 = tpu.matmul %114, %115, %cst_67 {dimension_numbers = #tpu.dot_dimension_numbers<[1], [0], [0], [1], [0, 0, 1, 1], [], []>} : vector<8x16xf32>, vector<16x2xf32>, vector<8x2xf32> -> vector<8x2xf32>
    %117 = arith.addf %113, %116 : vector<8x2xf32>
    %118 = vector.extract_strided_slice %108 {offsets = [16, 0], sizes = [8, 16], strides = [1, 1]} : vector<32x16xf32> to vector<8x16xf32>
    %c32 = arith.constant 32 : index
    %c0_68 = arith.constant 0 : index
    %119 = vector.load %arg8[%c32, %c0_68] : memref<64x2xf32, #tpu.memory_space<vmem>>, vector<16x2xf32>
    %cst_69 = arith.constant dense<0.000000e+00> : vector<8x2xf32>
    %120 = tpu.matmul %118, %119, %cst_69 {dimension_numbers = #tpu.dot_dimension_numbers<[1], [0], [0], [1], [0, 0, 1, 1], [], []>} : vector<8x16xf32>, vector<16x2xf32>, vector<8x2xf32> -> vector<8x2xf32>
    %121 = arith.addf %117, %120 : vector<8x2xf32>
    %122 = vector.extract_strided_slice %108 {offsets = [24, 0], sizes = [8, 16], strides = [1, 1]} : vector<32x16xf32> to vector<8x16xf32>
    %c48 = arith.constant 48 : index
    %c0_70 = arith.constant 0 : index
    %123 = vector.load %arg8[%c48, %c0_70] : memref<64x2xf32, #tpu.memory_space<vmem>>, vector<16x2xf32>
    %cst_71 = arith.constant dense<0.000000e+00> : vector<8x2xf32>
    %124 = tpu.matmul %122, %123, %cst_71 {dimension_numbers = #tpu.dot_dimension_numbers<[1], [0], [0], [1], [0, 0, 1, 1], [], []>} : vector<8x16xf32>, vector<16x2xf32>, vector<8x2xf32> -> vector<8x2xf32>
    %125 = arith.addf %121, %124 : vector<8x2xf32>
    %c0_72 = arith.constant 0 : index
    %c0_73 = arith.constant 0 : index
    %126 = vector.load %arg9[%c0_72, %c0_73] : memref<1x2xf32, #tpu.memory_space<vmem>>, vector<1x2xf32>
    %127 = vector.broadcast %126 : vector<1x2xf32> to vector<8x2xf32>
    %128 = arith.addf %125, %127 : vector<8x2xf32>
    %cst_74 = arith.constant 0.000000e+00 : f32
    %129 = vector.broadcast %cst_74 : f32 to vector<8x2xf32>
    %130 = arith.maximumf %128, %129 : vector<8x2xf32>
    %cst_75 = arith.constant dense<0xFF800000> : vector<8xf32>
    %131 = vector.multi_reduction <maximumf>, %130, %cst_75 [1] : vector<8x2xf32> to vector<8xf32>
    %132 = vector.shape_cast %131 : vector<8xf32> to vector<8x1xf32>
    %133 = vector.broadcast %132 : vector<8x1xf32> to vector<8x2xf32>
    %134 = arith.subf %130, %133 : vector<8x2xf32>
    %135 = math.exp %134 : vector<8x2xf32>
    %cst_76 = arith.constant dense<0.000000e+00> : vector<8xf32>
    %136 = vector.multi_reduction <add>, %135, %cst_76 [1] : vector<8x2xf32> to vector<8xf32>
    %137 = vector.shape_cast %136 : vector<8xf32> to vector<8x1xf32>
    %138 = vector.broadcast %137 : vector<8x1xf32> to vector<8x2xf32>
    %139 = arith.divf %135, %138 : vector<8x2xf32>
    %140 = tpu.iota {dimensions = array<i32: 1>} : vector<8x128xi32>
    %c0_i32 = arith.constant 0 : i32
    %141 = vector.broadcast %c0_i32 : i32 to vector<8x128xi32>
    %142 = arith.cmpi eq, %140, %141 : vector<8x128xi32>
    %143 = vector.extract_strided_slice %139 {offsets = [0, 0], sizes = [8, 1], strides = [1, 1]} : vector<8x2xf32> to vector<8x1xf32>
    %c1_i32 = arith.constant 1 : i32
    %144 = vector.broadcast %c1_i32 : i32 to vector<8x128xi32>
    %145 = arith.cmpi eq, %140, %144 : vector<8x128xi32>
    %146 = vector.extract_strided_slice %139 {offsets = [0, 1], sizes = [8, 1], strides = [1, 1]} : vector<8x2xf32> to vector<8x1xf32>
    %cst_77 = arith.constant 0.000000e+00 : f32
    %147 = vector.shape_cast %146 : vector<8x1xf32> to vector<8x1xf32>
    %148 = vector.broadcast %147 : vector<8x1xf32> to vector<8x128xf32>
    %149 = vector.broadcast %cst_77 : f32 to vector<8x128xf32>
    %150 = arith.select %145, %148, %149 : vector<8x128xi1>, vector<8x128xf32>
    %151 = vector.shape_cast %143 : vector<8x1xf32> to vector<8x1xf32>
    %152 = vector.broadcast %151 : vector<8x1xf32> to vector<8x128xf32>
    %153 = arith.select %142, %152, %150 : vector<8x128xi1>, vector<8x128xf32>
    %c0_78 = arith.constant 0 : index
    %c0_79 = arith.constant 0 : index
    %154 = vector.load %arg12[%c0_78, %c0_79] : memref<8x128xf32, #tpu.memory_space<vmem>>, vector<8x128xf32>
    tpu.vector_store %arg12[%c0_78, %c0_79], %153 {strides = array<i32>} : memref<8x128xf32, #tpu.memory_space<vmem>>, vector<8x128xf32>,
    return
  }
  func.func @transform_0(%arg0: i32) -> (i32, i32) {
    %c0_i32 = arith.constant 0 : i32
    %c0_i32_0 = arith.constant 0 : i32
    return %arg0, %c0_i32 : i32, i32
  }
  func.func @transform_1(%arg0: i32) -> (i32, i32) {
    %c0_i32 = arith.constant 0 : i32
    %c0_i32_0 = arith.constant 0 : i32
    %c0_i32_1 = arith.constant 0 : i32
    return %c0_i32, %c0_i32_0 : i32, i32
  }
  func.func @transform_2(%arg0: i32) -> (i32, i32) {
    %c0_i32 = arith.constant 0 : i32
    %c0_i32_0 = arith.constant 0 : i32
    %c0_i32_1 = arith.constant 0 : i32
    return %c0_i32, %c0_i32_0 : i32, i32
  }
  func.func @transform_3(%arg0: i32) -> (i32, i32) {
    %c0_i32 = arith.constant 0 : i32
    %c0_i32_0 = arith.constant 0 : i32
    %c0_i32_1 = arith.constant 0 : i32
    return %c0_i32, %c0_i32_0 : i32, i32
  }
  func.func @transform_4(%arg0: i32) -> (i32, i32) {
    %c0_i32 = arith.constant 0 : i32
    %c0_i32_0 = arith.constant 0 : i32
    %c0_i32_1 = arith.constant 0 : i32
    return %c0_i32, %c0_i32_0 : i32, i32
  }
  func.func @transform_5(%arg0: i32) -> (i32, i32) {
    %c0_i32 = arith.constant 0 : i32
    %c0_i32_0 = arith.constant 0 : i32
    %c0_i32_1 = arith.constant 0 : i32
    return %c0_i32, %c0_i32_0 : i32, i32
  }
  func.func @transform_6(%arg0: i32) -> (i32, i32) {
    %c0_i32 = arith.constant 0 : i32
    %c0_i32_0 = arith.constant 0 : i32
    %c0_i32_1 = arith.constant 0 : i32
    return %c0_i32, %c0_i32_0 : i32, i32
  }
  func.func @transform_7(%arg0: i32) -> (i32, i32) {
    %c0_i32 = arith.constant 0 : i32
    %c0_i32_0 = arith.constant 0 : i32
    %c0_i32_1 = arith.constant 0 : i32
    return %c0_i32, %c0_i32_0 : i32, i32
  }
  func.func @transform_8(%arg0: i32) -> (i32, i32) {
    %c0_i32 = arith.constant 0 : i32
    %c0_i32_0 = arith.constant 0 : i32
    %c0_i32_1 = arith.constant 0 : i32
    return %c0_i32, %c0_i32_0 : i32, i32
  }
  func.func @transform_9(%arg0: i32) -> (i32, i32) {
    %c0_i32 = arith.constant 0 : i32
    %c0_i32_0 = arith.constant 0 : i32
    %c0_i32_1 = arith.constant 0 : i32
    return %c0_i32, %c0_i32_0 : i32, i32
  }
  func.func @transform_10(%arg0: i32) -> (i32, i32) {
    %c0_i32 = arith.constant 0 : i32
    %c0_i32_0 = arith.constant 0 : i32
    %c0_i32_1 = arith.constant 0 : i32
    return %c0_i32, %c0_i32_0 : i32, i32
  }
  func.func @transform_11(%arg0: i32) -> (i32, i32) {
    %c0_i32 = arith.constant 0 : i32
    %c0_i32_0 = arith.constant 0 : i32
    return %arg0, %c0_i32 : i32, i32
  }
}

</mosaic_0001>

<llo_original>
// kernel: tpu_custom_call.1
$region0: #{tpu_custom_call.1}
  #allocation0 [shape = 'u32[]', space=smem, size = 0x4, offset = 0x4, fixed_abs, tag = 'smem constant byte address 0x4 - core index']
  #allocation1 [shape = 'u32[144,128]{1,0:T(1,128)}', space=vmem, size = 0x12000, scoped, tag = 'internal scratch']
  %s0 = inlined_call_operand.hbm [shape: f32[4096,256], index: 0, kind: input, shape index: {}]
  %s1 = inlined_call_operand.vmem [shape: bf16[256,64], index: 1, kind: input, shape index: {}]
  %s2 = inlined_call_operand.hbm [shape: bf16[64,256], index: 2, kind: input, shape index: {}]
  %s3 = inlined_call_operand.vmem [shape: f32[256,64], index: 3, kind: input, shape index: {}]
  %s4 = inlined_call_operand.hbm [shape: f32[1,64], index: 4, kind: input, shape index: {}]
  %s5 = inlined_call_operand.vmem [shape: f32[256,16], index: 5, kind: input, shape index: {}]
  %s6 = inlined_call_operand.hbm [shape: f32[1,16], index: 6, kind: input, shape index: {}]
  %s7 = inlined_call_operand.vmem [shape: f32[64,2], index: 7, kind: input, shape index: {}]
  %s8 = inlined_call_operand.hbm [shape: f32[1,2], index: 8, kind: input, shape index: {}]
  %s9 = inlined_call_operand.hbm [shape: f32[128,128], index: 9, kind: input, shape index: {}]
  %s10 = inlined_call_operand.hbm [shape: f32[32,32], index: 10, kind: input, shape index: {}]
  %s11 = inlined_call_operand.hbm [shape: f32[16,128], index: 11, kind: output, shape index: {}]
  %s12 = sld [smem:[#allocation0]]
  $region105: #{tpu_custom_call.1} parent=0
    _
  %s14 = ssub.s32 1, %s12
  %s15 = scalar_select 0, %s14, %s12
  $region1: #{tpu_custom_call.1} parent=0
    #allocation2 [shape = 'u8[4194304]{0}', space=vmem, size = 0x400000, scoped, tag = 'input window, operand 0']
    #allocation3 [shape = 's32[2]{0}', space=sflag, size = 0x8, scoped, tag = 'scoped memory for tpu_custom_call.1']
    #allocation4 [shape = 's32[2]{0}', space=sflag, size = 0x8, scoped, tag = 'scoped memory for tpu_custom_call.1']
    #allocation5 [shape = 'u8[32768]{0}', space=vmem, size = 0x8000, scoped, tag = 'input window, operand 2, single buffered']
    #allocation6 [shape = 's32[1]{0}', space=sflag, size = 0x4, scoped, tag = 'scoped memory for tpu_custom_call.1']
    #allocation7 [shape = 'u8[512]{0}', space=vmem, size = 0x400, scoped, tag = 'input window, operand 4, single buffered']
    #allocation8 [shape = 'u8[512]{0}', space=vmem, size = 0x400, scoped, tag = 'input window, operand 6, single buffered']
    #allocation9 [shape = 's32[1]{0}', space=sflag, size = 0x4, scoped, tag = 'scoped memory for tpu_custom_call.1']
    #allocation10 [shape = 'u8[512]{0}', space=vmem, size = 0x400, scoped, tag = 'input window, operand 8, single buffered']
    #allocation11 [shape = 'u8[65536]{0}', space=vmem, size = 0x10000, scoped, tag = 'input window, operand 9, single buffered']
    #allocation12 [shape = 's32[1]{0}', space=sflag, size = 0x4, scoped, tag = 'scoped memory for tpu_custom_call.1']
    #allocation13 [shape = 'u8[16384]{0}', space=vmem, size = 0x4000, scoped, tag = 'input window, operand 10, single buffered']
    #allocation14 [shape = 'u8[8192]{0}', space=vmem, size = 0x2000, scoped, tag = 'output window, operand 0']
    %16 = vsyncpa [#allocation3], 0
    %s17 = scalar_lea.sflag [#allocation3], 1
    %18 = vsyncpa %s17, 0
    %19 = vsyncpa [#allocation6], 0
    %20 = vsyncpa [#allocation9], 0
    %21 = vsyncpa [#allocation12], 0
    %22 = vsyncpa [#allocation4], 0
    %s23 = scalar_lea.sflag [#allocation4], 1
    %24 = vsyncpa %s23, 0
    loop: start=0, step=1, limit=4
    $region2: #{tpu_custom_call.1} parent=1 // loop_pre_header
      _
    $region3: #{tpu_custom_call.1} parent=1 // loop_header
      %s26 = sphi 0, %s30
      %p27 = scmp.ge.s32.totalorder %s26, 4
      %s36 = sphi 0, %s38
      %s39 = sphi 0, %s36
      %s40 = sphi 0, %s39
      %s56 = sphi 0, %s40
      %s60 = sphi 0, %s60
      %s62 = sphi 0, %s60
      %s63 = sphi 0, %s62
      %s77 = sphi 0, %s63
      %s81 = sphi 0, %s81
      %s83 = sphi 0, %s81
      %s84 = sphi 0, %s83
      %s98 = sphi 0, %s84
      %s102 = sphi 0, %s102
      %s104 = sphi 0, %s102
      %s105 = sphi 0, %s104
      %s119 = sphi 0, %s105
      %s123 = sphi 0, %s123
      %s125 = sphi 0, %s123
      %s126 = sphi 0, %s125
      %s140 = sphi 0, %s126
      %s144 = sphi 0, %s144
      %s146 = sphi 0, %s144
      %s147 = sphi 0, %s146
      %s161 = sphi 0, %s147
      %s165 = sphi 0, %s165
      %s167 = sphi 0, %s165
      %s168 = sphi 0, %s167
      %s182 = sphi 0, %s168
      %s186 = sphi 0, %s186
      %s188 = sphi 0, %s186
      %s189 = sphi 0, %s188
      %s203 = sphi 0, %s189
      %s207 = sphi 0, %s207
      %s209 = sphi 0, %s207
      %s210 = sphi 0, %s209
      %s224 = sphi 0, %s210
      %s228 = sphi 0, %s228
      %s230 = sphi 0, %s228
      %s231 = sphi 0, %s230
      %s245 = sphi 0, %s231
      %s249 = sphi 0, %s249
      %s251 = sphi 0, %s249
      %s252 = sphi 0, %s251
      %s266 = sphi 0, %s252
      %s272 = sphi 0, %s274
      %s275 = sphi 0, %s272
      %s276 = sphi 0, %s275
      %s292 = sphi 0, %s276
    $region4: #{tpu_custom_call.1} parent=1 // loop_header_branch
      %29 = sbr.rel (%p27) target = $region8
    $region5: #{tpu_custom_call.1} parent=1 // loop_body
      %s31 = ssub.s32 %s26, 1
      %s32 = ssub.s32 %s26, 2
      %s33 = sadd.s32 %s26, 1
      %s34 = ssub.s32 %s26, %s33
      %p35 = scmp.eq.s32.totalorder %s34, 0
      %s37 = sadd.s32 %s36, 1
      %s38 = scalar_select %p35, %s36, %s37
      %p41 = pneg %p35
      %p42 = scmp.eq.s32.totalorder %s26, 1
      %p43 = por %p41, %p42
      %p44 = scmp.ne.s32.totalorder %s36, %s39
      %p45 = scmp.eq.s32.totalorder %s26, 0
      %p46 = por %p44, %p45
      %p47 = scmp.ne.s32.totalorder %s36, %s39
      %p48 = scmp.eq.s32.totalorder %s31, 1
      %p49 = por %p47, %p48
      %p50 = scmp.ne.s32.totalorder %s39, %s40
      %p51 = scmp.eq.s32.totalorder %s31, 0
      %p52 = por %p50, %p51
      %p53 = scmp.ne.s32.totalorder %s39, %s40
      %p54 = scmp.eq.s32.totalorder %s32, 1
      %p55 = por %p53, %p54
      %p57 = scmp.ne.s32.totalorder %s40, %s56
      %p58 = scmp.eq.s32.totalorder %s32, 0
      %p59 = por %p57, %p58
      %s61 = sadd.s32 %s60, 1
      %p64 = scmp.eq.s32.totalorder %s26, 1
      %p65 = scmp.ne.s32.totalorder %s60, %s62
      %p66 = scmp.eq.s32.totalorder %s26, 0
      %p67 = por %p65, %p66
      %p68 = scmp.ne.s32.totalorder %s60, %s62
      %p69 = scmp.eq.s32.totalorder %s31, 1
      %p70 = por %p68, %p69
      %p71 = scmp.ne.s32.totalorder %s62, %s63
      %p72 = scmp.eq.s32.totalorder %s31, 0
      %p73 = por %p71, %p72
      %p74 = scmp.ne.s32.totalorder %s62, %s63
      %p75 = scmp.eq.s32.totalorder %s32, 1
      %p76 = por %p74, %p75
      %p78 = scmp.ne.s32.totalorder %s63, %s77
      %p79 = scmp.eq.s32.totalorder %s32, 0
      %p80 = por %p78, %p79
      %s82 = sadd.s32 %s81, 1
      %p85 = scmp.eq.s32.totalorder %s26, 1
      %p86 = scmp.ne.s32.totalorder %s81, %s83
      %p87 = scmp.eq.s32.totalorder %s26, 0
      %p88 = por %p86, %p87
      %p89 = scmp.ne.s32.totalorder %s81, %s83
      %p90 = scmp.eq.s32.totalorder %s31, 1
      %p91 = por %p89, %p90
      %p92 = scmp.ne.s32.totalorder %s83, %s84
      %p93 = scmp.eq.s32.totalorder %s31, 0
      %p94 = por %p92, %p93
      %p95 = scmp.ne.s32.totalorder %s83, %s84
      %p96 = scmp.eq.s32.totalorder %s32, 1
      %p97 = por %p95, %p96
      %p99 = scmp.ne.s32.totalorder %s84, %s98
      %p100 = scmp.eq.s32.totalorder %s32, 0
      %p101 = por %p99, %p100
      %s103 = sadd.s32 %s102, 1
      %p106 = scmp.eq.s32.totalorder %s26, 1
      %p107 = scmp.ne.s32.totalorder %s102, %s104
      %p108 = scmp.eq.s32.totalorder %s26, 0
      %p109 = por %p107, %p108
      %p110 = scmp.ne.s32.totalorder %s102, %s104
      %p111 = scmp.eq.s32.totalorder %s31, 1
      %p112 = por %p110, %p111
      %p113 = scmp.ne.s32.totalorder %s104, %s105
      %p114 = scmp.eq.s32.totalorder %s31, 0
      %p115 = por %p113, %p114
      %p116 = scmp.ne.s32.totalorder %s104, %s105
      %p117 = scmp.eq.s32.totalorder %s32, 1
      %p118 = por %p116, %p117
      %p120 = scmp.ne.s32.totalorder %s105, %s119
      %p121 = scmp.eq.s32.totalorder %s32, 0
      %p122 = por %p120, %p121
      %s124 = sadd.s32 %s123, 1
      %p127 = scmp.eq.s32.totalorder %s26, 1
      %p128 = scmp.ne.s32.totalorder %s123, %s125
      %p129 = scmp.eq.s32.totalorder %s26, 0
      %p130 = por %p128, %p129
      %p131 = scmp.ne.s32.totalorder %s123, %s125
      %p132 = scmp.eq.s32.totalorder %s31, 1
      %p133 = por %p131, %p132
      %p134 = scmp.ne.s32.totalorder %s125, %s126
      %p135 = scmp.eq.s32.totalorder %s31, 0
      %p136 = por %p134, %p135
      %p137 = scmp.ne.s32.totalorder %s125, %s126
      %p138 = scmp.eq.s32.totalorder %s32, 1
      %p139 = por %p137, %p138
      %p141 = scmp.ne.s32.totalorder %s126, %s140
      %p142 = scmp.eq.s32.totalorder %s32, 0
      %p143 = por %p141, %p142
      %s145 = sadd.s32 %s144, 1
      %p148 = scmp.eq.s32.totalorder %s26, 1
      %p149 = scmp.ne.s32.totalorder %s144, %s146
      %p150 = scmp.eq.s32.totalorder %s26, 0
      %p151 = por %p149, %p150
      %p152 = scmp.ne.s32.totalorder %s144, %s146
      %p153 = scmp.eq.s32.totalorder %s31, 1
      %p154 = por %p152, %p153
      %p155 = scmp.ne.s32.totalorder %s146, %s147
      %p156 = scmp.eq.s32.totalorder %s31, 0
      %p157 = por %p155, %p156
      %p158 = scmp.ne.s32.totalorder %s146, %s147
      %p159 = scmp.eq.s32.totalorder %s32, 1
      %p160 = por %p158, %p159
      %p162 = scmp.ne.s32.totalorder %s147, %s161
      %p163 = scmp.eq.s32.totalorder %s32, 0
      %p164 = por %p162, %p163
      %s166 = sadd.s32 %s165, 1
      %p169 = scmp.eq.s32.totalorder %s26, 1
      %p170 = scmp.ne.s32.totalorder %s165, %s167
      %p171 = scmp.eq.s32.totalorder %s26, 0
      %p172 = por %p170, %p171
      %p173 = scmp.ne.s32.totalorder %s165, %s167
      %p174 = scmp.eq.s32.totalorder %s31, 1
      %p175 = por %p173, %p174
      %p176 = scmp.ne.s32.totalorder %s167, %s168
      %p177 = scmp.eq.s32.totalorder %s31, 0
      %p178 = por %p176, %p177
      %p179 = scmp.ne.s32.totalorder %s167, %s168
      %p180 = scmp.eq.s32.totalorder %s32, 1
      %p181 = por %p179, %p180
      %p183 = scmp.ne.s32.totalorder %s168, %s182
      %p184 = scmp.eq.s32.totalorder %s32, 0
      %p185 = por %p183, %p184
      %s187 = sadd.s32 %s186, 1
      %p190 = scmp.eq.s32.totalorder %s26, 1
      %p191 = scmp.ne.s32.totalorder %s186, %s188
      %p192 = scmp.eq.s32.totalorder %s26, 0
      %p193 = por %p191, %p192
      %p194 = scmp.ne.s32.totalorder %s186, %s188
      %p195 = scmp.eq.s32.totalorder %s31, 1
      %p196 = por %p194, %p195
      %p197 = scmp.ne.s32.totalorder %s188, %s189
      %p198 = scmp.eq.s32.totalorder %s31, 0
      %p199 = por %p197, %p198
      %p200 = scmp.ne.s32.totalorder %s188, %s189
      %p201 = scmp.eq.s32.totalorder %s32, 1
      %p202 = por %p200, %p201
      %p204 = scmp.ne.s32.totalorder %s189, %s203
      %p205 = scmp.eq.s32.totalorder %s32, 0
      %p206 = por %p204, %p205
      %s208 = sadd.s32 %s207, 1
      %p211 = scmp.eq.s32.totalorder %s26, 1
      %p212 = scmp.ne.s32.totalorder %s207, %s209
      %p213 = scmp.eq.s32.totalorder %s26, 0
      %p214 = por %p212, %p213
      %p215 = scmp.ne.s32.totalorder %s207, %s209
      %p216 = scmp.eq.s32.totalorder %s31, 1
      %p217 = por %p215, %p216
      %p218 = scmp.ne.s32.totalorder %s209, %s210
      %p219 = scmp.eq.s32.totalorder %s31, 0
      %p220 = por %p218, %p219
      %p221 = scmp.ne.s32.totalorder %s209, %s210
      %p222 = scmp.eq.s32.totalorder %s32, 1
      %p223 = por %p221, %p222
      %p225 = scmp.ne.s32.totalorder %s210, %s224
      %p226 = scmp.eq.s32.totalorder %s32, 0
      %p227 = por %p225, %p226
      %s229 = sadd.s32 %s228, 1
      %p232 = scmp.eq.s32.totalorder %s26, 1
      %p233 = scmp.ne.s32.totalorder %s228, %s230
      %p234 = scmp.eq.s32.totalorder %s26, 0
      %p235 = por %p233, %p234
      %p236 = scmp.ne.s32.totalorder %s228, %s230
      %p237 = scmp.eq.s32.totalorder %s31, 1
      %p238 = por %p236, %p237
      %p239 = scmp.ne.s32.totalorder %s230, %s231
      %p240 = scmp.eq.s32.totalorder %s31, 0
      %p241 = por %p239, %p240
      %p242 = scmp.ne.s32.totalorder %s230, %s231
      %p243 = scmp.eq.s32.totalorder %s32, 1
      %p244 = por %p242, %p243
      %p246 = scmp.ne.s32.totalorder %s231, %s245
      %p247 = scmp.eq.s32.totalorder %s32, 0
      %p248 = por %p246, %p247
      %s250 = sadd.s32 %s249, 1
      %p253 = scmp.eq.s32.totalorder %s26, 1
      %p254 = scmp.ne.s32.totalorder %s249, %s251
      %p255 = scmp.eq.s32.totalorder %s26, 0
      %p256 = por %p254, %p255
      %p257 = scmp.ne.s32.totalorder %s249, %s251
      %p258 = scmp.eq.s32.totalorder %s31, 1
      %p259 = por %p257, %p258
      %p260 = scmp.ne.s32.totalorder %s251, %s252
      %p261 = scmp.eq.s32.totalorder %s31, 0
      %p262 = por %p260, %p261
      %p263 = scmp.ne.s32.totalorder %s251, %s252
      %p264 = scmp.eq.s32.totalorder %s32, 1
      %p265 = por %p263, %p264
      %p267 = scmp.ne.s32.totalorder %s252, %s266
      %p268 = scmp.eq.s32.totalorder %s32, 0
      %p269 = por %p267, %p268
      %s270 = ssub.s32 %s26, %s33
      %p271 = scmp.eq.s32.totalorder %s270, 0
      %s273 = sadd.s32 %s272, 1
      %s274 = scalar_select %p271, %s272, %s273
      %p277 = pneg %p271
      %p278 = scmp.eq.s32.totalorder %s26, 1
      %p279 = por %p277, %p278
      %p280 = scmp.ne.s32.totalorder %s272, %s275
      %p281 = scmp.eq.s32.totalorder %s26, 0
      %p282 = por %p280, %p281
      %p283 = scmp.ne.s32.totalorder %s272, %s275
      %p284 = scmp.eq.s32.totalorder %s31, 1
      %p285 = por %p283, %p284
      %p286 = scmp.ne.s32.totalorder %s275, %s276
      %p287 = scmp.eq.s32.totalorder %s31, 0
      %p288 = por %p286, %p287
      %p289 = scmp.ne.s32.totalorder %s275, %s276
      %p290 = scmp.eq.s32.totalorder %s32, 1
      %p291 = por %p289, %p290
      %p293 = scmp.ne.s32.totalorder %s276, %s292
      %p294 = scmp.eq.s32.totalorder %s32, 0
      %p295 = por %p293, %p294
      %p296 = scmp.le.s32.totalorder 1, %s26
      %p297 = scmp.lt.s32.totalorder %s26, 3
      %p298 = pnand %p296, %p297
      %p299 = pneg %p298
      // Predicated region
      $region9: #{tpu_custom_call.1} parent=5 // pred_check
        _
      $region10: #{tpu_custom_call.1} parent=5 // pred_check_branch
        %301 = sbr.rel (%p298) target = $region12
      $region11: #{tpu_custom_call.1} parent=5 // pred_region
        %s302 = ssub.s32 %s26, 1
        // Predicated region
        $region13: #{tpu_custom_call.1} parent=11 // pred_check
          %p303 = pneg %p73
        $region14: #{tpu_custom_call.1} parent=11 // pred_check_branch
          %305 = sbr.rel (%p303) target = $region16
        $region15: #{tpu_custom_call.1} parent=11 // pred_region
          _
        $region16: #{tpu_custom_call.1} parent=11 // pred_fallthru
          _
        // Predicated region
        $region17: #{tpu_custom_call.1} parent=11 // pred_check
          %p306 = pneg %p94
        $region18: #{tpu_custom_call.1} parent=11 // pred_check_branch
          %308 = sbr.rel (%p306) target = $region20
        $region19: #{tpu_custom_call.1} parent=11 // pred_region
          %s310 = ssub.s32 1024, 1024
          %311 = vsyncadd [#allocation6], %s310
          %s312 = sshll.u32 [#allocation5], 4
          %s313 = int_to_ptr.vmem [resolvable:$true] %s312
          %318 = dma.hbm_to_vmem [thread:$0]  %s2, 1024, %s313, [#allocation6], 128, 128, 8
        $region20: #{tpu_custom_call.1} parent=11 // pred_fallthru
          _
        // Predicated region
        $region21: #{tpu_custom_call.1} parent=11 // pred_check
          %p319 = pneg %p115
        $region22: #{tpu_custom_call.1} parent=11 // pred_check_branch
          %321 = sbr.rel (%p319) target = $region24
        $region23: #{tpu_custom_call.1} parent=11 // pred_region
          _
        $region24: #{tpu_custom_call.1} parent=11 // pred_fallthru
          _
        // Predicated region
        $region25: #{tpu_custom_call.1} parent=11 // pred_check
          %p322 = pneg %p136
        $region26: #{tpu_custom_call.1} parent=11 // pred_check_branch
          %324 = sbr.rel (%p322) target = $region28
        $region27: #{tpu_custom_call.1} parent=11 // pred_region
          %s326 = ssub.s32 16, 16
          %327 = vsyncadd [#allocation6], %s326
          %s329 = sshll.u32 [#allocation7], 4
          %s330 = int_to_ptr.vmem [resolvable:$true] %s329
          %332 = dma.hbm_to_vmem [thread:$0]  %s4, 16, %s330, [#allocation6]
        $region28: #{tpu_custom_call.1} parent=11 // pred_fallthru
          _
        // Predicated region
        $region29: #{tpu_custom_call.1} parent=11 // pred_check
          %p333 = pneg %p157
        $region30: #{tpu_custom_call.1} parent=11 // pred_check_branch
          %335 = sbr.rel (%p333) target = $region32
        $region31: #{tpu_custom_call.1} parent=11 // pred_region
          _
        $region32: #{tpu_custom_call.1} parent=11 // pred_fallthru
          _
        // Predicated region
        $region33: #{tpu_custom_call.1} parent=11 // pred_check
          %p336 = pneg %p178
        $region34: #{tpu_custom_call.1} parent=11 // pred_check_branch
          %338 = sbr.rel (%p336) target = $region36
        $region35: #{tpu_custom_call.1} parent=11 // pred_region
          %s340 = ssub.s32 16, 16
          %341 = vsyncadd [#allocation9], %s340
          %s343 = sshll.u32 [#allocation8], 4
          %s344 = int_to_ptr.vmem [resolvable:$true] %s343
          %346 = dma.hbm_to_vmem [thread:$0]  %s6, 16, %s344, [#allocation9]
        $region36: #{tpu_custom_call.1} parent=11 // pred_fallthru
          _
        // Predicated region
        $region37: #{tpu_custom_call.1} parent=11 // pred_check
          %p347 = pneg %p199
        $region38: #{tpu_custom_call.1} parent=11 // pred_check_branch
          %349 = sbr.rel (%p347) target = $region40
        $region39: #{tpu_custom_call.1} parent=11 // pred_region
          _
        $region40: #{tpu_custom_call.1} parent=11 // pred_fallthru
          _
        // Predicated region
        $region41: #{tpu_custom_call.1} parent=11 // pred_check
          %p350 = pneg %p220
        $region42: #{tpu_custom_call.1} parent=11 // pred_check_branch
          %352 = sbr.rel (%p350) target = $region44
        $region43: #{tpu_custom_call.1} parent=11 // pred_region
          %s354 = ssub.s32 16, 16
          %355 = vsyncadd [#allocation9], %s354
          %s357 = sshll.u32 [#allocation10], 4
          %s358 = int_to_ptr.vmem [resolvable:$true] %s357
          %360 = dma.hbm_to_vmem [thread:$0]  %s8, 16, %s358, [#allocation9]
        $region44: #{tpu_custom_call.1} parent=11 // pred_fallthru
          _
        // Predicated region
        $region45: #{tpu_custom_call.1} parent=11 // pred_check
          %p361 = pneg %p241
        $region46: #{tpu_custom_call.1} parent=11 // pred_check_branch
          %363 = sbr.rel (%p361) target = $region48
        $region47: #{tpu_custom_call.1} parent=11 // pred_region
          %s365 = ssub.s32 2048, 2048
          %366 = vsyncadd [#allocation12], %s365
          %s367 = sshll.u32 [#allocation11], 4
          %s368 = int_to_ptr.vmem [resolvable:$true] %s367
          %373 = dma.hbm_to_vmem [thread:$0]  %s9, 2048, %s368, [#allocation12], 128, 128, 8
        $region48: #{tpu_custom_call.1} parent=11 // pred_fallthru
          _
        // Predicated region
        $region49: #{tpu_custom_call.1} parent=11 // pred_check
          %p374 = pneg %p262
        $region50: #{tpu_custom_call.1} parent=11 // pred_check_branch
          %376 = sbr.rel (%p374) target = $region52
        $region51: #{tpu_custom_call.1} parent=11 // pred_region
          %s378 = ssub.s32 512, 512
          %379 = vsyncadd [#allocation12], %s378
          %s380 = sshll.u32 [#allocation13], 4
          %s381 = int_to_ptr.vmem [resolvable:$true] %s380
          %386 = dma.hbm_to_vmem [thread:$0]  %s10, 512, %s381, [#allocation12], 128, 128, 8
        $region52: #{tpu_custom_call.1} parent=11 // pred_fallthru
          _
      $region12: #{tpu_custom_call.1} parent=5 // pred_fallthru
        _
      %p387 = scmp.lt.s32.totalorder %s26, 2
      // Predicated region
      $region53: #{tpu_custom_call.1} parent=5 // pred_check
        %p388 = pneg %p387
      $region54: #{tpu_custom_call.1} parent=5 // pred_check_branch
        %390 = sbr.rel (%p388) target = $region56
      $region55: #{tpu_custom_call.1} parent=5 // pred_region
        // Predicated region
        $region57: #{tpu_custom_call.1} parent=55 // pred_check
          %p391 = pneg %p46
        $region58: #{tpu_custom_call.1} parent=55 // pred_check_branch
          %393 = sbr.rel (%p391) target = $region60
        $region59: #{tpu_custom_call.1} parent=55 // pred_region
          %s394 = sand.u32 %s36, 1
          %s395 = scalar_lea.sflag [#allocation3], %s394
          %s396 = sand.u32 %s36, 1
          %s397 = smul.addr %s396, 4096
          %s398 = scalar_lea.vmem [#allocation2], %s397
          %s399 = smul.u32 256, %s26
          %s401 = ssub.s32 65536, 65536
          %402 = vsyncadd %s395, %s401
          %s403 = smul.addr %s399, 2
          %s404 = smul.addr %s403, 128
          %s405 = scalar_lea.hbm %s0, %s404
          %s406 = sshll.u32 %s398, 4
          %s407 = int_to_ptr.vmem [resolvable:$true] %s406
          %412 = dma.hbm_to_vmem [thread:$0]  %s405, 65536, %s407, %s395, 256, 256, 16
        $region60: #{tpu_custom_call.1} parent=55 // pred_fallthru
          _
      $region56: #{tpu_custom_call.1} parent=5 // pred_fallthru
        _
      %p413 = scmp.le.s32.totalorder 1, %s26
      %p414 = scmp.lt.s32.totalorder %s26, 3
      %p415 = pnand %p413, %p414
      %p416 = pneg %p415
      // Predicated region
      $region61: #{tpu_custom_call.1} parent=5 // pred_check
        _
      $region62: #{tpu_custom_call.1} parent=5 // pred_check_branch
        %418 = sbr.rel (%p415) target = $region64
      $region63: #{tpu_custom_call.1} parent=5 // pred_region
        %s419 = ssub.s32 %s26, 1
        %s420 = sand.u32 %s39, 1
        %s421 = scalar_lea.sflag [#allocation3], %s420
        %s422 = sand.u32 %s39, 1
        %s423 = smul.addr %s422, 4096
        %s424 = scalar_lea.vmem [#allocation2], %s423
        // Predicated region
        $region65: #{tpu_custom_call.1} parent=63 // pred_check
          %p425 = pneg %p52
        $region66: #{tpu_custom_call.1} parent=63 // pred_check_branch
          %427 = sbr.rel (%p425) target = $region68
        $region67: #{tpu_custom_call.1} parent=63 // pred_region
          %428 = dma.done %s421, 65536
        $region68: #{tpu_custom_call.1} parent=63 // pred_fallthru
          _
        // Predicated region
        $region69: #{tpu_custom_call.1} parent=63 // pred_check
          %p429 = pneg %p94
        $region70: #{tpu_custom_call.1} parent=63 // pred_check_branch
          %431 = sbr.rel (%p429) target = $region72
        $region71: #{tpu_custom_call.1} parent=63 // pred_region
          %432 = dma.done [#allocation6], 1024
        $region72: #{tpu_custom_call.1} parent=63 // pred_fallthru
          _
        // Predicated region
        $region73: #{tpu_custom_call.1} parent=63 // pred_check
          %p433 = pneg %p136
        $region74: #{tpu_custom_call.1} parent=63 // pred_check_branch
          %435 = sbr.rel (%p433) target = $region76
        $region75: #{tpu_custom_call.1} parent=63 // pred_region
          %436 = dma.done [#allocation6], 16
        $region76: #{tpu_custom_call.1} parent=63 // pred_fallthru
          _
        // Predicated region
        $region77: #{tpu_custom_call.1} parent=63 // pred_check
          %p437 = pneg %p178
        $region78: #{tpu_custom_call.1} parent=63 // pred_check_branch
          %439 = sbr.rel (%p437) target = $region80
        $region79: #{tpu_custom_call.1} parent=63 // pred_region
          %440 = dma.done [#allocation9], 16
        $region80: #{tpu_custom_call.1} parent=63 // pred_fallthru
          _
        // Predicated region
        $region81: #{tpu_custom_call.1} parent=63 // pred_check
          %p441 = pneg %p220
        $region82: #{tpu_custom_call.1} parent=63 // pred_check_branch
          %443 = sbr.rel (%p441) target = $region84
        $region83: #{tpu_custom_call.1} parent=63 // pred_region
          %444 = dma.done [#allocation9], 16
        $region84: #{tpu_custom_call.1} parent=63 // pred_fallthru
          _
        // Predicated region
        $region85: #{tpu_custom_call.1} parent=63 // pred_check
          %p445 = pneg %p241
        $region86: #{tpu_custom_call.1} parent=63 // pred_check_branch
          %447 = sbr.rel (%p445) target = $region88
        $region87: #{tpu_custom_call.1} parent=63 // pred_region
          %448 = dma.done [#allocation12], 2048
        $region88: #{tpu_custom_call.1} parent=63 // pred_fallthru
          _
        // Predicated region
        $region89: #{tpu_custom_call.1} parent=63 // pred_check
          %p449 = pneg %p262
        $region90: #{tpu_custom_call.1} parent=63 // pred_check_branch
          %451 = sbr.rel (%p449) target = $region92
        $region91: #{tpu_custom_call.1} parent=63 // pred_region
          %452 = dma.done [#allocation12], 512
        $region92: #{tpu_custom_call.1} parent=63 // pred_fallthru
          _
        %s453 = sand.u32 %s39, 1
        %s454 = scalar_lea.sflag [#allocation3], %s453
        %s455 = sand.u32 %s39, 1
        %s456 = smul.addr %s455, 4096
        %s457 = scalar_lea.vmem [#allocation2], %s456
        %p458 = pneg %p52
        %p459 = pneg %p49
        %p460 = pneg %p73
        %p461 = pneg %p70
        %p462 = pneg %p94
        %p463 = pneg %p91
        %p464 = pneg %p115
        %p465 = pneg %p112
        %p466 = pneg %p136
        %p467 = pneg %p133
        %p468 = pneg %p157
        %p469 = pneg %p154
        %p470 = pneg %p178
        %p471 = pneg %p175
        %p472 = pneg %p199
        %p473 = pneg %p196
        %p474 = pneg %p220
        %p475 = pneg %p217
        %p476 = pneg %p241
        %p477 = pneg %p238
        %p478 = pneg %p262
        %p479 = pneg %p259
        %p480 = pneg %p288
        %p481 = pneg %p285
        %s482 = sand.u32 %s275, 1
        %s483 = scalar_lea.sflag [#allocation4], %s482
        %s484 = sand.u32 %s275, 1
        %s485 = smul.addr %s484, 8
        %s486 = scalar_lea.vmem [#allocation14], %s485
        %s487 = smul.u32 256, %s31
        %v489 = vld [vmem:[%s424] sm:$0xff]
        %v490 = vld [vmem:[%s424 + $0x8] sm:$0xff]
        %v491 = vld [vmem:[%s424 + $0x10] sm:$0xff]
        %v492 = vld [vmem:[%s424 + $0x18] sm:$0xff]
        %v493 = vld [vmem:[%s424 + $0x20] sm:$0xff]
        %v494 = vld [vmem:[%s424 + $0x28] sm:$0xff]
        %v495 = vld [vmem:[%s424 + $0x30] sm:$0xff]
        %v496 = vld [vmem:[%s424 + $0x38] sm:$0xff]
        %v497 = vld [vmem:[%s424 + $0x40] sm:$0xff]
        %v498 = vld [vmem:[%s424 + $0x48] sm:$0xff]
        %v499 = vld [vmem:[%s424 + $0x50] sm:$0xff]
        %v500 = vld [vmem:[%s424 + $0x58] sm:$0xff]
        %v501 = vld [vmem:[%s424 + $0x60] sm:$0xff]
        %v502 = vld [vmem:[%s424 + $0x68] sm:$0xff]
        %v503 = vld [vmem:[%s424 + $0x70] sm:$0xff]
        %v504 = vld [vmem:[%s424 + $0x78] sm:$0xff]
        %v505 = vld [vmem:[%s424 + $0x80] sm:$0xff]
        %v506 = vld [vmem:[%s424 + $0x88] sm:$0xff]
        %v507 = vld [vmem:[%s424 + $0x90] sm:$0xff]
        %v508 = vld [vmem:[%s424 + $0x98] sm:$0xff]
        %v509 = vld [vmem:[%s424 + $0xa0] sm:$0xff]
        %v510 = vld [vmem:[%s424 + $0xa8] sm:$0xff]
        %v511 = vld [vmem:[%s424 + $0xb0] sm:$0xff]
        %v512 = vld [vmem:[%s424 + $0xb8] sm:$0xff]
        %v513 = vld [vmem:[%s424 + $0xc0] sm:$0xff]
        %v514 = vld [vmem:[%s424 + $0xc8] sm:$0xff]
        %v515 = vld [vmem:[%s424 + $0xd0] sm:$0xff]
        %v516 = vld [vmem:[%s424 + $0xd8] sm:$0xff]
        %v517 = vld [vmem:[%s424 + $0xe0] sm:$0xff]
        %v518 = vld [vmem:[%s424 + $0xe8] sm:$0xff]
        %v519 = vld [vmem:[%s424 + $0xf0] sm:$0xff]
        %v520 = vld [vmem:[%s424 + $0xf8] sm:$0xff]
        %v521 = vld [vmem:[%s424 + $0x100] sm:$0xff]
        %v522 = vld [vmem:[%s424 + $0x108] sm:$0xff]
        %v523 = vld [vmem:[%s424 + $0x110] sm:$0xff]
        %v524 = vld [vmem:[%s424 + $0x118] sm:$0xff]
        %v525 = vld [vmem:[%s424 + $0x120] sm:$0xff]
        %v526 = vld [vmem:[%s424 + $0x128] sm:$0xff]
        %v527 = vld [vmem:[%s424 + $0x130] sm:$0xff]
        %v528 = vld [vmem:[%s424 + $0x138] sm:$0xff]
        %v529 = vld [vmem:[%s424 + $0x140] sm:$0xff]
        %v530 = vld [vmem:[%s424 + $0x148] sm:$0xff]
        %v531 = vld [vmem:[%s424 + $0x150] sm:$0xff]
        %v532 = vld [vmem:[%s424 + $0x158] sm:$0xff]
        %v533 = vld [vmem:[%s424 + $0x160] sm:$0xff]
        %v534 = vld [vmem:[%s424 + $0x168] sm:$0xff]
        %v535 = vld [vmem:[%s424 + $0x170] sm:$0xff]
        %v536 = vld [vmem:[%s424 + $0x178] sm:$0xff]
        %v537 = vld [vmem:[%s424 + $0x180] sm:$0xff]
        %v538 = vld [vmem:[%s424 + $0x188] sm:$0xff]
        %v539 = vld [vmem:[%s424 + $0x190] sm:$0xff]
        %v540 = vld [vmem:[%s424 + $0x198] sm:$0xff]
        %v541 = vld [vmem:[%s424 + $0x1a0] sm:$0xff]
        %v542 = vld [vmem:[%s424 + $0x1a8] sm:$0xff]
        %v543 = vld [vmem:[%s424 + $0x1b0] sm:$0xff]
        %v544 = vld [vmem:[%s424 + $0x1b8] sm:$0xff]
        %v545 = vld [vmem:[%s424 + $0x1c0] sm:$0xff]
        %v546 = vld [vmem:[%s424 + $0x1c8] sm:$0xff]
        %v547 = vld [vmem:[%s424 + $0x1d0] sm:$0xff]
        %v548 = vld [vmem:[%s424 + $0x1d8] sm:$0xff]
        %v549 = vld [vmem:[%s424 + $0x1e0] sm:$0xff]
        %v550 = vld [vmem:[%s424 + $0x1e8] sm:$0xff]
        %v551 = vld [vmem:[%s424 + $0x1f0] sm:$0xff]
        %v552 = vld [vmem:[%s424 + $0x1f8] sm:$0xff]
        %v553 = vld [vmem:[%s424 + $0x200] sm:$0xff]
        %v554 = vld [vmem:[%s424 + $0x208] sm:$0xff]
        %v555 = vld [vmem:[%s424 + $0x210] sm:$0xff]
        %v556 = vld [vmem:[%s424 + $0x218] sm:$0xff]
        %v557 = vld [vmem:[%s424 + $0x220] sm:$0xff]
        %v558 = vld [vmem:[%s424 + $0x228] sm:$0xff]
        %v559 = vld [vmem:[%s424 + $0x230] sm:$0xff]
        %v560 = vld [vmem:[%s424 + $0x238] sm:$0xff]
        %v561 = vld [vmem:[%s424 + $0x240] sm:$0xff]
        %v562 = vld [vmem:[%s424 + $0x248] sm:$0xff]
        %v563 = vld [vmem:[%s424 + $0x250] sm:$0xff]
        %v564 = vld [vmem:[%s424 + $0x258] sm:$0xff]
        %v565 = vld [vmem:[%s424 + $0x260] sm:$0xff]
        %v566 = vld [vmem:[%s424 + $0x268] sm:$0xff]
        %v567 = vld [vmem:[%s424 + $0x270] sm:$0xff]
        %v568 = vld [vmem:[%s424 + $0x278] sm:$0xff]
        %v569 = vld [vmem:[%s424 + $0x280] sm:$0xff]
        %v570 = vld [vmem:[%s424 + $0x288] sm:$0xff]
        %v571 = vld [vmem:[%s424 + $0x290] sm:$0xff]
        %v572 = vld [vmem:[%s424 + $0x298] sm:$0xff]
        %v573 = vld [vmem:[%s424 + $0x2a0] sm:$0xff]
        %v574 = vld [vmem:[%s424 + $0x2a8] sm:$0xff]
        %v575 = vld [vmem:[%s424 + $0x2b0] sm:$0xff]
        %v576 = vld [vmem:[%s424 + $0x2b8] sm:$0xff]
        %v577 = vld [vmem:[%s424 + $0x2c0] sm:$0xff]
        %v578 = vld [vmem:[%s424 + $0x2c8] sm:$0xff]
        %v579 = vld [vmem:[%s424 + $0x2d0] sm:$0xff]
        %v580 = vld [vmem:[%s424 + $0x2d8] sm:$0xff]
        %v581 = vld [vmem:[%s424 + $0x2e0] sm:$0xff]
        %v582 = vld [vmem:[%s424 + $0x2e8] sm:$0xff]
        %v583 = vld [vmem:[%s424 + $0x2f0] sm:$0xff]
        %v584 = vld [vmem:[%s424 + $0x2f8] sm:$0xff]
        %v585 = vld [vmem:[%s424 + $0x300] sm:$0xff]
        %v586 = vld [vmem:[%s424 + $0x308] sm:$0xff]
        %v587 = vld [vmem:[%s424 + $0x310] sm:$0xff]
        %v588 = vld [vmem:[%s424 + $0x318] sm:$0xff]
        %v589 = vld [vmem:[%s424 + $0x320] sm:$0xff]
        %v590 = vld [vmem:[%s424 + $0x328] sm:$0xff]
        %v591 = vld [vmem:[%s424 + $0x330] sm:$0xff]
        %v592 = vld [vmem:[%s424 + $0x338] sm:$0xff]
        %v593 = vld [vmem:[%s424 + $0x340] sm:$0xff]
        %v594 = vld [vmem:[%s424 + $0x348] sm:$0xff]
        %v595 = vld [vmem:[%s424 + $0x350] sm:$0xff]
        %v596 = vld [vmem:[%s424 + $0x358] sm:$0xff]
        %v597 = vld [vmem:[%s424 + $0x360] sm:$0xff]
        %v598 = vld [vmem:[%s424 + $0x368] sm:$0xff]
        %v599 = vld [vmem:[%s424 + $0x370] sm:$0xff]
        %v600 = vld [vmem:[%s424 + $0x378] sm:$0xff]
        %v601 = vld [vmem:[%s424 + $0x380] sm:$0xff]
        %v602 = vld [vmem:[%s424 + $0x388] sm:$0xff]
        %v603 = vld [vmem:[%s424 + $0x390] sm:$0xff]
        %v604 = vld [vmem:[%s424 + $0x398] sm:$0xff]
        %v605 = vld [vmem:[%s424 + $0x3a0] sm:$0xff]
        %v606 = vld [vmem:[%s424 + $0x3a8] sm:$0xff]
        %v607 = vld [vmem:[%s424 + $0x3b0] sm:$0xff]
        %v608 = vld [vmem:[%s424 + $0x3b8] sm:$0xff]
        %v609 = vld [vmem:[%s424 + $0x3c0] sm:$0xff]
        %v610 = vld [vmem:[%s424 + $0x3c8] sm:$0xff]
        %v611 = vld [vmem:[%s424 + $0x3d0] sm:$0xff]
        %v612 = vld [vmem:[%s424 + $0x3d8] sm:$0xff]
        %v613 = vld [vmem:[%s424 + $0x3e0] sm:$0xff]
        %v614 = vld [vmem:[%s424 + $0x3e8] sm:$0xff]
        %v615 = vld [vmem:[%s424 + $0x3f0] sm:$0xff]
        %v616 = vld [vmem:[%s424 + $0x3f8] sm:$0xff]
        %v617 = vld [vmem:[%s424 + $0x400] sm:$0xff]
        %v618 = vld [vmem:[%s424 + $0x408] sm:$0xff]
        %v619 = vld [vmem:[%s424 + $0x410] sm:$0xff]
        %v620 = vld [vmem:[%s424 + $0x418] sm:$0xff]
        %v621 = vld [vmem:[%s424 + $0x420] sm:$0xff]
        %v622 = vld [vmem:[%s424 + $0x428] sm:$0xff]
        %v623 = vld [vmem:[%s424 + $0x430] sm:$0xff]
        %v624 = vld [vmem:[%s424 + $0x438] sm:$0xff]
        %v625 = vld [vmem:[%s424 + $0x440] sm:$0xff]
        %v626 = vld [vmem:[%s424 + $0x448] sm:$0xff]
        %v627 = vld [vmem:[%s424 + $0x450] sm:$0xff]
        %v628 = vld [vmem:[%s424 + $0x458] sm:$0xff]
        %v629 = vld [vmem:[%s424 + $0x460] sm:$0xff]
        %v630 = vld [vmem:[%s424 + $0x468] sm:$0xff]
        %v631 = vld [vmem:[%s424 + $0x470] sm:$0xff]
        %v632 = vld [vmem:[%s424 + $0x478] sm:$0xff]
        %v633 = vld [vmem:[%s424 + $0x480] sm:$0xff]
        %v634 = vld [vmem:[%s424 + $0x488] sm:$0xff]
        %v635 = vld [vmem:[%s424 + $0x490] sm:$0xff]
        %v636 = vld [vmem:[%s424 + $0x498] sm:$0xff]
        %v637 = vld [vmem:[%s424 + $0x4a0] sm:$0xff]
        %v638 = vld [vmem:[%s424 + $0x4a8] sm:$0xff]
        %v639 = vld [vmem:[%s424 + $0x4b0] sm:$0xff]
        %v640 = vld [vmem:[%s424 + $0x4b8] sm:$0xff]
        %v641 = vld [vmem:[%s424 + $0x4c0] sm:$0xff]
        %v642 = vld [vmem:[%s424 + $0x4c8] sm:$0xff]
        %v643 = vld [vmem:[%s424 + $0x4d0] sm:$0xff]
        %v644 = vld [vmem:[%s424 + $0x4d8] sm:$0xff]
        %v645 = vld [vmem:[%s424 + $0x4e0] sm:$0xff]
        %v646 = vld [vmem:[%s424 + $0x4e8] sm:$0xff]
        %v647 = vld [vmem:[%s424 + $0x4f0] sm:$0xff]
        %v648 = vld [vmem:[%s424 + $0x4f8] sm:$0xff]
        %v649 = vld [vmem:[%s424 + $0x500] sm:$0xff]
        %v650 = vld [vmem:[%s424 + $0x508] sm:$0xff]
        %v651 = vld [vmem:[%s424 + $0x510] sm:$0xff]
        %v652 = vld [vmem:[%s424 + $0x518] sm:$0xff]
        %v653 = vld [vmem:[%s424 + $0x520] sm:$0xff]
        %v654 = vld [vmem:[%s424 + $0x528] sm:$0xff]
        %v655 = vld [vmem:[%s424 + $0x530] sm:$0xff]
        %v656 = vld [vmem:[%s424 + $0x538] sm:$0xff]
        %v657 = vld [vmem:[%s424 + $0x540] sm:$0xff]
        %v658 = vld [vmem:[%s424 + $0x548] sm:$0xff]
        %v659 = vld [vmem:[%s424 + $0x550] sm:$0xff]
        %v660 = vld [vmem:[%s424 + $0x558] sm:$0xff]
        %v661 = vld [vmem:[%s424 + $0x560] sm:$0xff]
        %v662 = vld [vmem:[%s424 + $0x568] sm:$0xff]
        %v663 = vld [vmem:[%s424 + $0x570] sm:$0xff]
        %v664 = vld [vmem:[%s424 + $0x578] sm:$0xff]
        %v665 = vld [vmem:[%s424 + $0x580] sm:$0xff]
        %v666 = vld [vmem:[%s424 + $0x588] sm:$0xff]
        %v667 = vld [vmem:[%s424 + $0x590] sm:$0xff]
        %v668 = vld [vmem:[%s424 + $0x598] sm:$0xff]
        %v669 = vld [vmem:[%s424 + $0x5a0] sm:$0xff]
        %v670 = vld [vmem:[%s424 + $0x5a8] sm:$0xff]
        %v671 = vld [vmem:[%s424 + $0x5b0] sm:$0xff]
        %v672 = vld [vmem:[%s424 + $0x5b8] sm:$0xff]
        %v673 = vld [vmem:[%s424 + $0x5c0] sm:$0xff]
        %v674 = vld [vmem:[%s424 + $0x5c8] sm:$0xff]
        %v675 = vld [vmem:[%s424 + $0x5d0] sm:$0xff]
        %v676 = vld [vmem:[%s424 + $0x5d8] sm:$0xff]
        %v677 = vld [vmem:[%s424 + $0x5e0] sm:$0xff]
        %v678 = vld [vmem:[%s424 + $0x5e8] sm:$0xff]
        %v679 = vld [vmem:[%s424 + $0x5f0] sm:$0xff]
        %v680 = vld [vmem:[%s424 + $0x5f8] sm:$0xff]
        %v681 = vld [vmem:[%s424 + $0x600] sm:$0xff]
        %v682 = vld [vmem:[%s424 + $0x608] sm:$0xff]
        %v683 = vld [vmem:[%s424 + $0x610] sm:$0xff]
        %v684 = vld [vmem:[%s424 + $0x618] sm:$0xff]
        %v685 = vld [vmem:[%s424 + $0x620] sm:$0xff]
        %v686 = vld [vmem:[%s424 + $0x628] sm:$0xff]
        %v687 = vld [vmem:[%s424 + $0x630] sm:$0xff]
        %v688 = vld [vmem:[%s424 + $0x638] sm:$0xff]
        %v689 = vld [vmem:[%s424 + $0x640] sm:$0xff]
        %v690 = vld [vmem:[%s424 + $0x648] sm:$0xff]
        %v691 = vld [vmem:[%s424 + $0x650] sm:$0xff]
        %v692 = vld [vmem:[%s424 + $0x658] sm:$0xff]
        %v693 = vld [vmem:[%s424 + $0x660] sm:$0xff]
        %v694 = vld [vmem:[%s424 + $0x668] sm:$0xff]
        %v695 = vld [vmem:[%s424 + $0x670] sm:$0xff]
        %v696 = vld [vmem:[%s424 + $0x678] sm:$0xff]
        %v697 = vld [vmem:[%s424 + $0x680] sm:$0xff]
        %v698 = vld [vmem:[%s424 + $0x688] sm:$0xff]
        %v699 = vld [vmem:[%s424 + $0x690] sm:$0xff]
        %v700 = vld [vmem:[%s424 + $0x698] sm:$0xff]
        %v701 = vld [vmem:[%s424 + $0x6a0] sm:$0xff]
        %v702 = vld [vmem:[%s424 + $0x6a8] sm:$0xff]
        %v703 = vld [vmem:[%s424 + $0x6b0] sm:$0xff]
        %v704 = vld [vmem:[%s424 + $0x6b8] sm:$0xff]
        %v705 = vld [vmem:[%s424 + $0x6c0] sm:$0xff]
        %v706 = vld [vmem:[%s424 + $0x6c8] sm:$0xff]
        %v707 = vld [vmem:[%s424 + $0x6d0] sm:$0xff]
        %v708 = vld [vmem:[%s424 + $0x6d8] sm:$0xff]
        %v709 = vld [vmem:[%s424 + $0x6e0] sm:$0xff]
        %v710 = vld [vmem:[%s424 + $0x6e8] sm:$0xff]
        %v711 = vld [vmem:[%s424 + $0x6f0] sm:$0xff]
        %v712 = vld [vmem:[%s424 + $0x6f8] sm:$0xff]
        %v713 = vld [vmem:[%s424 + $0x700] sm:$0xff]
        %v714 = vld [vmem:[%s424 + $0x708] sm:$0xff]
        %v715 = vld [vmem:[%s424 + $0x710] sm:$0xff]
        %v716 = vld [vmem:[%s424 + $0x718] sm:$0xff]
        %v717 = vld [vmem:[%s424 + $0x720] sm:$0xff]
        %v718 = vld [vmem:[%s424 + $0x728] sm:$0xff]
        %v719 = vld [vmem:[%s424 + $0x730] sm:$0xff]
        %v720 = vld [vmem:[%s424 + $0x738] sm:$0xff]
        %v721 = vld [vmem:[%s424 + $0x740] sm:$0xff]
        %v722 = vld [vmem:[%s424 + $0x748] sm:$0xff]
        %v723 = vld [vmem:[%s424 + $0x750] sm:$0xff]
        %v724 = vld [vmem:[%s424 + $0x758] sm:$0xff]
        %v725 = vld [vmem:[%s424 + $0x760] sm:$0xff]
        %v726 = vld [vmem:[%s424 + $0x768] sm:$0xff]
        %v727 = vld [vmem:[%s424 + $0x770] sm:$0xff]
        %v728 = vld [vmem:[%s424 + $0x778] sm:$0xff]
        %v729 = vld [vmem:[%s424 + $0x780] sm:$0xff]
        %v730 = vld [vmem:[%s424 + $0x788] sm:$0xff]
        %v731 = vld [vmem:[%s424 + $0x790] sm:$0xff]
        %v732 = vld [vmem:[%s424 + $0x798] sm:$0xff]
        %v733 = vld [vmem:[%s424 + $0x7a0] sm:$0xff]
        %v734 = vld [vmem:[%s424 + $0x7a8] sm:$0xff]
        %v735 = vld [vmem:[%s424 + $0x7b0] sm:$0xff]
        %v736 = vld [vmem:[%s424 + $0x7b8] sm:$0xff]
        %v737 = vld [vmem:[%s424 + $0x7c0] sm:$0xff]
        %v738 = vld [vmem:[%s424 + $0x7c8] sm:$0xff]
        %v739 = vld [vmem:[%s424 + $0x7d0] sm:$0xff]
        %v740 = vld [vmem:[%s424 + $0x7d8] sm:$0xff]
        %v741 = vld [vmem:[%s424 + $0x7e0] sm:$0xff]
        %v742 = vld [vmem:[%s424 + $0x7e8] sm:$0xff]
        %v743 = vld [vmem:[%s424 + $0x7f0] sm:$0xff]
        %v744 = vld [vmem:[%s424 + $0x7f8] sm:$0xff]
        %v745 = vld [vmem:[%s424 + $0x800] sm:$0xff]
        %v746 = vld [vmem:[%s424 + $0x808] sm:$0xff]
        %v747 = vld [vmem:[%s424 + $0x810] sm:$0xff]
        %v748 = vld [vmem:[%s424 + $0x818] sm:$0xff]
        %v749 = vld [vmem:[%s424 + $0x820] sm:$0xff]
        %v750 = vld [vmem:[%s424 + $0x828] sm:$0xff]
        %v751 = vld [vmem:[%s424 + $0x830] sm:$0xff]
        %v752 = vld [vmem:[%s424 + $0x838] sm:$0xff]
        %v753 = vld [vmem:[%s424 + $0x840] sm:$0xff]
        %v754 = vld [vmem:[%s424 + $0x848] sm:$0xff]
        %v755 = vld [vmem:[%s424 + $0x850] sm:$0xff]
        %v756 = vld [vmem:[%s424 + $0x858] sm:$0xff]
        %v757 = vld [vmem:[%s424 + $0x860] sm:$0xff]
        %v758 = vld [vmem:[%s424 + $0x868] sm:$0xff]
        %v759 = vld [vmem:[%s424 + $0x870] sm:$0xff]
        %v760 = vld [vmem:[%s424 + $0x878] sm:$0xff]
        %v761 = vld [vmem:[%s424 + $0x880] sm:$0xff]
        %v762 = vld [vmem:[%s424 + $0x888] sm:$0xff]
        %v763 = vld [vmem:[%s424 + $0x890] sm:$0xff]
        %v764 = vld [vmem:[%s424 + $0x898] sm:$0xff]
        %v765 = vld [vmem:[%s424 + $0x8a0] sm:$0xff]
        %v766 = vld [vmem:[%s424 + $0x8a8] sm:$0xff]
        %v767 = vld [vmem:[%s424 + $0x8b0] sm:$0xff]
        %v768 = vld [vmem:[%s424 + $0x8b8] sm:$0xff]
        %v769 = vld [vmem:[%s424 + $0x8c0] sm:$0xff]
        %v770 = vld [vmem:[%s424 + $0x8c8] sm:$0xff]
        %v771 = vld [vmem:[%s424 + $0x8d0] sm:$0xff]
        %v772 = vld [vmem:[%s424 + $0x8d8] sm:$0xff]
        %v773 = vld [vmem:[%s424 + $0x8e0] sm:$0xff]
        %v774 = vld [vmem:[%s424 + $0x8e8] sm:$0xff]
        %v775 = vld [vmem:[%s424 + $0x8f0] sm:$0xff]
        %v776 = vld [vmem:[%s424 + $0x8f8] sm:$0xff]
        %v777 = vld [vmem:[%s424 + $0x900] sm:$0xff]
        %v778 = vld [vmem:[%s424 + $0x908] sm:$0xff]
        %v779 = vld [vmem:[%s424 + $0x910] sm:$0xff]
        %v780 = vld [vmem:[%s424 + $0x918] sm:$0xff]
        %v781 = vld [vmem:[%s424 + $0x920] sm:$0xff]
        %v782 = vld [vmem:[%s424 + $0x928] sm:$0xff]
        %v783 = vld [vmem:[%s424 + $0x930] sm:$0xff]
        %v784 = vld [vmem:[%s424 + $0x938] sm:$0xff]
        %v785 = vld [vmem:[%s424 + $0x940] sm:$0xff]
        %v786 = vld [vmem:[%s424 + $0x948] sm:$0xff]
        %v787 = vld [vmem:[%s424 + $0x950] sm:$0xff]
        %v788 = vld [vmem:[%s424 + $0x958] sm:$0xff]
        %v789 = vld [vmem:[%s424 + $0x960] sm:$0xff]
        %v790 = vld [vmem:[%s424 + $0x968] sm:$0xff]
        %v791 = vld [vmem:[%s424 + $0x970] sm:$0xff]
        %v792 = vld [vmem:[%s424 + $0x978] sm:$0xff]
        %v793 = vld [vmem:[%s424 + $0x980] sm:$0xff]
        %v794 = vld [vmem:[%s424 + $0x988] sm:$0xff]
        %v795 = vld [vmem:[%s424 + $0x990] sm:$0xff]
        %v796 = vld [vmem:[%s424 + $0x998] sm:$0xff]
        %v797 = vld [vmem:[%s424 + $0x9a0] sm:$0xff]
        %v798 = vld [vmem:[%s424 + $0x9a8] sm:$0xff]
        %v799 = vld [vmem:[%s424 + $0x9b0] sm:$0xff]
        %v800 = vld [vmem:[%s424 + $0x9b8] sm:$0xff]
        %v801 = vld [vmem:[%s424 + $0x9c0] sm:$0xff]
        %v802 = vld [vmem:[%s424 + $0x9c8] sm:$0xff]
        %v803 = vld [vmem:[%s424 + $0x9d0] sm:$0xff]
        %v804 = vld [vmem:[%s424 + $0x9d8] sm:$0xff]
        %v805 = vld [vmem:[%s424 + $0x9e0] sm:$0xff]
        %v806 = vld [vmem:[%s424 + $0x9e8] sm:$0xff]
        %v807 = vld [vmem:[%s424 + $0x9f0] sm:$0xff]
        %v808 = vld [vmem:[%s424 + $0x9f8] sm:$0xff]
        %v809 = vld [vmem:[%s424 + $0xa00] sm:$0xff]
        %v810 = vld [vmem:[%s424 + $0xa08] sm:$0xff]
        %v811 = vld [vmem:[%s424 + $0xa10] sm:$0xff]
        %v812 = vld [vmem:[%s424 + $0xa18] sm:$0xff]
        %v813 = vld [vmem:[%s424 + $0xa20] sm:$0xff]
        %v814 = vld [vmem:[%s424 + $0xa28] sm:$0xff]
        %v815 = vld [vmem:[%s424 + $0xa30] sm:$0xff]
        %v816 = vld [vmem:[%s424 + $0xa38] sm:$0xff]
        %v817 = vld [vmem:[%s424 + $0xa40] sm:$0xff]
        %v818 = vld [vmem:[%s424 + $0xa48] sm:$0xff]
        %v819 = vld [vmem:[%s424 + $0xa50] sm:$0xff]
        %v820 = vld [vmem:[%s424 + $0xa58] sm:$0xff]
        %v821 = vld [vmem:[%s424 + $0xa60] sm:$0xff]
        %v822 = vld [vmem:[%s424 + $0xa68] sm:$0xff]
        %v823 = vld [vmem:[%s424 + $0xa70] sm:$0xff]
        %v824 = vld [vmem:[%s424 + $0xa78] sm:$0xff]
        %v825 = vld [vmem:[%s424 + $0xa80] sm:$0xff]
        %v826 = vld [vmem:[%s424 + $0xa88] sm:$0xff]
        %v827 = vld [vmem:[%s424 + $0xa90] sm:$0xff]
        %v828 = vld [vmem:[%s424 + $0xa98] sm:$0xff]
        %v829 = vld [vmem:[%s424 + $0xaa0] sm:$0xff]
        %v830 = vld [vmem:[%s424 + $0xaa8] sm:$0xff]
        %v831 = vld [vmem:[%s424 + $0xab0] sm:$0xff]
        %v832 = vld [vmem:[%s424 + $0xab8] sm:$0xff]
        %v833 = vld [vmem:[%s424 + $0xac0] sm:$0xff]
        %v834 = vld [vmem:[%s424 + $0xac8] sm:$0xff]
        %v835 = vld [vmem:[%s424 + $0xad0] sm:$0xff]
        %v836 = vld [vmem:[%s424 + $0xad8] sm:$0xff]
        %v837 = vld [vmem:[%s424 + $0xae0] sm:$0xff]
        %v838 = vld [vmem:[%s424 + $0xae8] sm:$0xff]
        %v839 = vld [vmem:[%s424 + $0xaf0] sm:$0xff]
        %v840 = vld [vmem:[%s424 + $0xaf8] sm:$0xff]
        %v841 = vld [vmem:[%s424 + $0xb00] sm:$0xff]
        %v842 = vld [vmem:[%s424 + $0xb08] sm:$0xff]
        %v843 = vld [vmem:[%s424 + $0xb10] sm:$0xff]
        %v844 = vld [vmem:[%s424 + $0xb18] sm:$0xff]
        %v845 = vld [vmem:[%s424 + $0xb20] sm:$0xff]
        %v846 = vld [vmem:[%s424 + $0xb28] sm:$0xff]
        %v847 = vld [vmem:[%s424 + $0xb30] sm:$0xff]
        %v848 = vld [vmem:[%s424 + $0xb38] sm:$0xff]
        %v849 = vld [vmem:[%s424 + $0xb40] sm:$0xff]
        %v850 = vld [vmem:[%s424 + $0xb48] sm:$0xff]
        %v851 = vld [vmem:[%s424 + $0xb50] sm:$0xff]
        %v852 = vld [vmem:[%s424 + $0xb58] sm:$0xff]
        %v853 = vld [vmem:[%s424 + $0xb60] sm:$0xff]
        %v854 = vld [vmem:[%s424 + $0xb68] sm:$0xff]
        %v855 = vld [vmem:[%s424 + $0xb70] sm:$0xff]
        %v856 = vld [vmem:[%s424 + $0xb78] sm:$0xff]
        %v857 = vld [vmem:[%s424 + $0xb80] sm:$0xff]
        %v858 = vld [vmem:[%s424 + $0xb88] sm:$0xff]
        %v859 = vld [vmem:[%s424 + $0xb90] sm:$0xff]
        %v860 = vld [vmem:[%s424 + $0xb98] sm:$0xff]
        %v861 = vld [vmem:[%s424 + $0xba0] sm:$0xff]
        %v862 = vld [vmem:[%s424 + $0xba8] sm:$0xff]
        %v863 = vld [vmem:[%s424 + $0xbb0] sm:$0xff]
        %v864 = vld [vmem:[%s424 + $0xbb8] sm:$0xff]
        %v865 = vld [vmem:[%s424 + $0xbc0] sm:$0xff]
        %v866 = vld [vmem:[%s424 + $0xbc8] sm:$0xff]
        %v867 = vld [vmem:[%s424 + $0xbd0] sm:$0xff]
        %v868 = vld [vmem:[%s424 + $0xbd8] sm:$0xff]
        %v869 = vld [vmem:[%s424 + $0xbe0] sm:$0xff]
        %v870 = vld [vmem:[%s424 + $0xbe8] sm:$0xff]
        %v871 = vld [vmem:[%s424 + $0xbf0] sm:$0xff]
        %v872 = vld [vmem:[%s424 + $0xbf8] sm:$0xff]
        %v873 = vld [vmem:[%s424 + $0xc00] sm:$0xff]
        %v874 = vld [vmem:[%s424 + $0xc08] sm:$0xff]
        %v875 = vld [vmem:[%s424 + $0xc10] sm:$0xff]
        %v876 = vld [vmem:[%s424 + $0xc18] sm:$0xff]
        %v877 = vld [vmem:[%s424 + $0xc20] sm:$0xff]
        %v878 = vld [vmem:[%s424 + $0xc28] sm:$0xff]
        %v879 = vld [vmem:[%s424 + $0xc30] sm:$0xff]
        %v880 = vld [vmem:[%s424 + $0xc38] sm:$0xff]
        %v881 = vld [vmem:[%s424 + $0xc40] sm:$0xff]
        %v882 = vld [vmem:[%s424 + $0xc48] sm:$0xff]
        %v883 = vld [vmem:[%s424 + $0xc50] sm:$0xff]
        %v884 = vld [vmem:[%s424 + $0xc58] sm:$0xff]
        %v885 = vld [vmem:[%s424 + $0xc60] sm:$0xff]
        %v886 = vld [vmem:[%s424 + $0xc68] sm:$0xff]
        %v887 = vld [vmem:[%s424 + $0xc70] sm:$0xff]
        %v888 = vld [vmem:[%s424 + $0xc78] sm:$0xff]
        %v889 = vld [vmem:[%s424 + $0xc80] sm:$0xff]
        %v890 = vld [vmem:[%s424 + $0xc88] sm:$0xff]
        %v891 = vld [vmem:[%s424 + $0xc90] sm:$0xff]
        %v892 = vld [vmem:[%s424 + $0xc98] sm:$0xff]
        %v893 = vld [vmem:[%s424 + $0xca0] sm:$0xff]
        %v894 = vld [vmem:[%s424 + $0xca8] sm:$0xff]
        %v895 = vld [vmem:[%s424 + $0xcb0] sm:$0xff]
        %v896 = vld [vmem:[%s424 + $0xcb8] sm:$0xff]
        %v897 = vld [vmem:[%s424 + $0xcc0] sm:$0xff]
        %v898 = vld [vmem:[%s424 + $0xcc8] sm:$0xff]
        %v899 = vld [vmem:[%s424 + $0xcd0] sm:$0xff]
        %v900 = vld [vmem:[%s424 + $0xcd8] sm:$0xff]
        %v901 = vld [vmem:[%s424 + $0xce0] sm:$0xff]
        %v902 = vld [vmem:[%s424 + $0xce8] sm:$0xff]
        %v903 = vld [vmem:[%s424 + $0xcf0] sm:$0xff]
        %v904 = vld [vmem:[%s424 + $0xcf8] sm:$0xff]
        %v905 = vld [vmem:[%s424 + $0xd00] sm:$0xff]
        %v906 = vld [vmem:[%s424 + $0xd08] sm:$0xff]
        %v907 = vld [vmem:[%s424 + $0xd10] sm:$0xff]
        %v908 = vld [vmem:[%s424 + $0xd18] sm:$0xff]
        %v909 = vld [vmem:[%s424 + $0xd20] sm:$0xff]
        %v910 = vld [vmem:[%s424 + $0xd28] sm:$0xff]
        %v911 = vld [vmem:[%s424 + $0xd30] sm:$0xff]
        %v912 = vld [vmem:[%s424 + $0xd38] sm:$0xff]
        %v913 = vld [vmem:[%s424 + $0xd40] sm:$0xff]
        %v914 = vld [vmem:[%s424 + $0xd48] sm:$0xff]
        %v915 = vld [vmem:[%s424 + $0xd50] sm:$0xff]
        %v916 = vld [vmem:[%s424 + $0xd58] sm:$0xff]
        %v917 = vld [vmem:[%s424 + $0xd60] sm:$0xff]
        %v918 = vld [vmem:[%s424 + $0xd68] sm:$0xff]
        %v919 = vld [vmem:[%s424 + $0xd70] sm:$0xff]
        %v920 = vld [vmem:[%s424 + $0xd78] sm:$0xff]
        %v921 = vld [vmem:[%s424 + $0xd80] sm:$0xff]
        %v922 = vld [vmem:[%s424 + $0xd88] sm:$0xff]
        %v923 = vld [vmem:[%s424 + $0xd90] sm:$0xff]
        %v924 = vld [vmem:[%s424 + $0xd98] sm:$0xff]
        %v925 = vld [vmem:[%s424 + $0xda0] sm:$0xff]
        %v926 = vld [vmem:[%s424 + $0xda8] sm:$0xff]
        %v927 = vld [vmem:[%s424 + $0xdb0] sm:$0xff]
        %v928 = vld [vmem:[%s424 + $0xdb8] sm:$0xff]
        %v929 = vld [vmem:[%s424 + $0xdc0] sm:$0xff]
        %v930 = vld [vmem:[%s424 + $0xdc8] sm:$0xff]
        %v931 = vld [vmem:[%s424 + $0xdd0] sm:$0xff]
        %v932 = vld [vmem:[%s424 + $0xdd8] sm:$0xff]
        %v933 = vld [vmem:[%s424 + $0xde0] sm:$0xff]
        %v934 = vld [vmem:[%s424 + $0xde8] sm:$0xff]
        %v935 = vld [vmem:[%s424 + $0xdf0] sm:$0xff]
        %v936 = vld [vmem:[%s424 + $0xdf8] sm:$0xff]
        %v937 = vld [vmem:[%s424 + $0xe00] sm:$0xff]
        %v938 = vld [vmem:[%s424 + $0xe08] sm:$0xff]
        %v939 = vld [vmem:[%s424 + $0xe10] sm:$0xff]
        %v940 = vld [vmem:[%s424 + $0xe18] sm:$0xff]
        %v941 = vld [vmem:[%s424 + $0xe20] sm:$0xff]
        %v942 = vld [vmem:[%s424 + $0xe28] sm:$0xff]
        %v943 = vld [vmem:[%s424 + $0xe30] sm:$0xff]
        %v944 = vld [vmem:[%s424 + $0xe38] sm:$0xff]
        %v945 = vld [vmem:[%s424 + $0xe40] sm:$0xff]
        %v946 = vld [vmem:[%s424 + $0xe48] sm:$0xff]
        %v947 = vld [vmem:[%s424 + $0xe50] sm:$0xff]
        %v948 = vld [vmem:[%s424 + $0xe58] sm:$0xff]
        %v949 = vld [vmem:[%s424 + $0xe60] sm:$0xff]
        %v950 = vld [vmem:[%s424 + $0xe68] sm:$0xff]
        %v951 = vld [vmem:[%s424 + $0xe70] sm:$0xff]
        %v952 = vld [vmem:[%s424 + $0xe78] sm:$0xff]
        %v953 = vld [vmem:[%s424 + $0xe80] sm:$0xff]
        %v954 = vld [vmem:[%s424 + $0xe88] sm:$0xff]
        %v955 = vld [vmem:[%s424 + $0xe90] sm:$0xff]
        %v956 = vld [vmem:[%s424 + $0xe98] sm:$0xff]
        %v957 = vld [vmem:[%s424 + $0xea0] sm:$0xff]
        %v958 = vld [vmem:[%s424 + $0xea8] sm:$0xff]
        %v959 = vld [vmem:[%s424 + $0xeb0] sm:$0xff]
        %v960 = vld [vmem:[%s424 + $0xeb8] sm:$0xff]
        %v961 = vld [vmem:[%s424 + $0xec0] sm:$0xff]
        %v962 = vld [vmem:[%s424 + $0xec8] sm:$0xff]
        %v963 = vld [vmem:[%s424 + $0xed0] sm:$0xff]
        %v964 = vld [vmem:[%s424 + $0xed8] sm:$0xff]
        %v965 = vld [vmem:[%s424 + $0xee0] sm:$0xff]
        %v966 = vld [vmem:[%s424 + $0xee8] sm:$0xff]
        %v967 = vld [vmem:[%s424 + $0xef0] sm:$0xff]
        %v968 = vld [vmem:[%s424 + $0xef8] sm:$0xff]
        %v969 = vld [vmem:[%s424 + $0xf00] sm:$0xff]
        %v970 = vld [vmem:[%s424 + $0xf08] sm:$0xff]
        %v971 = vld [vmem:[%s424 + $0xf10] sm:$0xff]
        %v972 = vld [vmem:[%s424 + $0xf18] sm:$0xff]
        %v973 = vld [vmem:[%s424 + $0xf20] sm:$0xff]
        %v974 = vld [vmem:[%s424 + $0xf28] sm:$0xff]
        %v975 = vld [vmem:[%s424 + $0xf30] sm:$0xff]
        %v976 = vld [vmem:[%s424 + $0xf38] sm:$0xff]
        %v977 = vld [vmem:[%s424 + $0xf40] sm:$0xff]
        %v978 = vld [vmem:[%s424 + $0xf48] sm:$0xff]
        %v979 = vld [vmem:[%s424 + $0xf50] sm:$0xff]
        %v980 = vld [vmem:[%s424 + $0xf58] sm:$0xff]
        %v981 = vld [vmem:[%s424 + $0xf60] sm:$0xff]
        %v982 = vld [vmem:[%s424 + $0xf68] sm:$0xff]
        %v983 = vld [vmem:[%s424 + $0xf70] sm:$0xff]
        %v984 = vld [vmem:[%s424 + $0xf78] sm:$0xff]
        %v985 = vld [vmem:[%s424 + $0xf80] sm:$0xff]
        %v986 = vld [vmem:[%s424 + $0xf88] sm:$0xff]
        %v987 = vld [vmem:[%s424 + $0xf90] sm:$0xff]
        %v988 = vld [vmem:[%s424 + $0xf98] sm:$0xff]
        %v989 = vld [vmem:[%s424 + $0xfa0] sm:$0xff]
        %v990 = vld [vmem:[%s424 + $0xfa8] sm:$0xff]
        %v991 = vld [vmem:[%s424 + $0xfb0] sm:$0xff]
        %v992 = vld [vmem:[%s424 + $0xfb8] sm:$0xff]
        %v993 = vld [vmem:[%s424 + $0xfc0] sm:$0xff]
        %v994 = vld [vmem:[%s424 + $0xfc8] sm:$0xff]
        %v995 = vld [vmem:[%s424 + $0xfd0] sm:$0xff]
        %v996 = vld [vmem:[%s424 + $0xfd8] sm:$0xff]
        %v997 = vld [vmem:[%s424 + $0xfe0] sm:$0xff]
        %v998 = vld [vmem:[%s424 + $0xfe8] sm:$0xff]
        %v999 = vld [vmem:[%s424 + $0xff0] sm:$0xff]
        %v1000 = vld [vmem:[%s424 + $0xff8] sm:$0xff]
        %v1001 = vpack.c.bf16 %v491, %v489
        %v1002 = vpack.c.bf16 %v492, %v490
        %v1003 = vpack.c.bf16 %v495, %v493
        %v1004 = vpack.c.bf16 %v496, %v494
        %v1005 = vpack.c.bf16 %v499, %v497
        %v1006 = vpack.c.bf16 %v500, %v498
        %v1007 = vpack.c.bf16 %v503, %v501
        %v1008 = vpack.c.bf16 %v504, %v502
        %v1009 = vpack.c.bf16 %v507, %v505
        %v1010 = vpack.c.bf16 %v508, %v506
        %v1011 = vpack.c.bf16 %v511, %v509
        %v1012 = vpack.c.bf16 %v512, %v510
        %v1013 = vpack.c.bf16 %v515, %v513
        %v1014 = vpack.c.bf16 %v516, %v514
        %v1015 = vpack.c.bf16 %v519, %v517
        %v1016 = vpack.c.bf16 %v520, %v518
        %v1017 = vpack.c.bf16 %v523, %v521
        %v1018 = vpack.c.bf16 %v524, %v522
        %v1019 = vpack.c.bf16 %v527, %v525
        %v1020 = vpack.c.bf16 %v528, %v526
        %v1021 = vpack.c.bf16 %v531, %v529
        %v1022 = vpack.c.bf16 %v532, %v530
        %v1023 = vpack.c.bf16 %v535, %v533
        %v1024 = vpack.c.bf16 %v536, %v534
        %v1025 = vpack.c.bf16 %v539, %v537
        %v1026 = vpack.c.bf16 %v540, %v538
        %v1027 = vpack.c.bf16 %v543, %v541
        %v1028 = vpack.c.bf16 %v544, %v542
        %v1029 = vpack.c.bf16 %v547, %v545
        %v1030 = vpack.c.bf16 %v548, %v546
        %v1031 = vpack.c.bf16 %v551, %v549
        %v1032 = vpack.c.bf16 %v552, %v550
        %v1033 = vpack.c.bf16 %v555, %v553
        %v1034 = vpack.c.bf16 %v556, %v554
        %v1035 = vpack.c.bf16 %v559, %v557
        %v1036 = vpack.c.bf16 %v560, %v558
        %v1037 = vpack.c.bf16 %v563, %v561
        %v1038 = vpack.c.bf16 %v564, %v562
        %v1039 = vpack.c.bf16 %v567, %v565
        %v1040 = vpack.c.bf16 %v568, %v566
        %v1041 = vpack.c.bf16 %v571, %v569
        %v1042 = vpack.c.bf16 %v572, %v570
        %v1043 = vpack.c.bf16 %v575, %v573
        %v1044 = vpack.c.bf16 %v576, %v574
        %v1045 = vpack.c.bf16 %v579, %v577
        %v1046 = vpack.c.bf16 %v580, %v578
        %v1047 = vpack.c.bf16 %v583, %v581
        %v1048 = vpack.c.bf16 %v584, %v582
        %v1049 = vpack.c.bf16 %v587, %v585
        %v1050 = vpack.c.bf16 %v588, %v586
        %v1051 = vpack.c.bf16 %v591, %v589
        %v1052 = vpack.c.bf16 %v592, %v590
        %v1053 = vpack.c.bf16 %v595, %v593
        %v1054 = vpack.c.bf16 %v596, %v594
        %v1055 = vpack.c.bf16 %v599, %v597
        %v1056 = vpack.c.bf16 %v600, %v598
        %v1057 = vpack.c.bf16 %v603, %v601
        %v1058 = vpack.c.bf16 %v604, %v602
        %v1059 = vpack.c.bf16 %v607, %v605
        %v1060 = vpack.c.bf16 %v608, %v606
        %v1061 = vpack.c.bf16 %v611, %v609
        %v1062 = vpack.c.bf16 %v612, %v610
        %v1063 = vpack.c.bf16 %v615, %v613
        %v1064 = vpack.c.bf16 %v616, %v614
        %v1065 = vpack.c.bf16 %v619, %v617
        %v1066 = vpack.c.bf16 %v620, %v618
        %v1067 = vpack.c.bf16 %v623, %v621
        %v1068 = vpack.c.bf16 %v624, %v622
        %v1069 = vpack.c.bf16 %v627, %v625
        %v1070 = vpack.c.bf16 %v628, %v626
        %v1071 = vpack.c.bf16 %v631, %v629
        %v1072 = vpack.c.bf16 %v632, %v630
        %v1073 = vpack.c.bf16 %v635, %v633
        %v1074 = vpack.c.bf16 %v636, %v634
        %v1075 = vpack.c.bf16 %v639, %v637
        %v1076 = vpack.c.bf16 %v640, %v638
        %v1077 = vpack.c.bf16 %v643, %v641
        %v1078 = vpack.c.bf16 %v644, %v642
        %v1079 = vpack.c.bf16 %v647, %v645
        %v1080 = vpack.c.bf16 %v648, %v646
        %v1081 = vpack.c.bf16 %v651, %v649
        %v1082 = vpack.c.bf16 %v652, %v650
        %v1083 = vpack.c.bf16 %v655, %v653
        %v1084 = vpack.c.bf16 %v656, %v654
        %v1085 = vpack.c.bf16 %v659, %v657
        %v1086 = vpack.c.bf16 %v660, %v658
        %v1087 = vpack.c.bf16 %v663, %v661
        %v1088 = vpack.c.bf16 %v664, %v662
        %v1089 = vpack.c.bf16 %v667, %v665
        %v1090 = vpack.c.bf16 %v668, %v666
        %v1091 = vpack.c.bf16 %v671, %v669
        %v1092 = vpack.c.bf16 %v672, %v670
        %v1093 = vpack.c.bf16 %v675, %v673
        %v1094 = vpack.c.bf16 %v676, %v674
        %v1095 = vpack.c.bf16 %v679, %v677
        %v1096 = vpack.c.bf16 %v680, %v678
        %v1097 = vpack.c.bf16 %v683, %v681
        %v1098 = vpack.c.bf16 %v684, %v682
        %v1099 = vpack.c.bf16 %v687, %v685
        %v1100 = vpack.c.bf16 %v688, %v686
        %v1101 = vpack.c.bf16 %v691, %v689
        %v1102 = vpack.c.bf16 %v692, %v690
        %v1103 = vpack.c.bf16 %v695, %v693
        %v1104 = vpack.c.bf16 %v696, %v694
        %v1105 = vpack.c.bf16 %v699, %v697
        %v1106 = vpack.c.bf16 %v700, %v698
        %v1107 = vpack.c.bf16 %v703, %v701
        %v1108 = vpack.c.bf16 %v704, %v702
        %v1109 = vpack.c.bf16 %v707, %v705
        %v1110 = vpack.c.bf16 %v708, %v706
        %v1111 = vpack.c.bf16 %v711, %v709
        %v1112 = vpack.c.bf16 %v712, %v710
        %v1113 = vpack.c.bf16 %v715, %v713
        %v1114 = vpack.c.bf16 %v716, %v714
        %v1115 = vpack.c.bf16 %v719, %v717
        %v1116 = vpack.c.bf16 %v720, %v718
        %v1117 = vpack.c.bf16 %v723, %v721
        %v1118 = vpack.c.bf16 %v724, %v722
        %v1119 = vpack.c.bf16 %v727, %v725
        %v1120 = vpack.c.bf16 %v728, %v726
        %v1121 = vpack.c.bf16 %v731, %v729
        %v1122 = vpack.c.bf16 %v732, %v730
        %v1123 = vpack.c.bf16 %v735, %v733
        %v1124 = vpack.c.bf16 %v736, %v734
        %v1125 = vpack.c.bf16 %v739, %v737
        %v1126 = vpack.c.bf16 %v740, %v738
        %v1127 = vpack.c.bf16 %v743, %v741
        %v1128 = vpack.c.bf16 %v744, %v742
        %v1129 = vpack.c.bf16 %v747, %v745
        %v1130 = vpack.c.bf16 %v748, %v746
        %v1131 = vpack.c.bf16 %v751, %v749
        %v1132 = vpack.c.bf16 %v752, %v750
        %v1133 = vpack.c.bf16 %v755, %v753
        %v1134 = vpack.c.bf16 %v756, %v754
        %v1135 = vpack.c.bf16 %v759, %v757
        %v1136 = vpack.c.bf16 %v760, %v758
        %v1137 = vpack.c.bf16 %v763, %v761
        %v1138 = vpack.c.bf16 %v764, %v762
        %v1139 = vpack.c.bf16 %v767, %v765
        %v1140 = vpack.c.bf16 %v768, %v766
        %v1141 = vpack.c.bf16 %v771, %v769
        %v1142 = vpack.c.bf16 %v772, %v770
        %v1143 = vpack.c.bf16 %v775, %v773
        %v1144 = vpack.c.bf16 %v776, %v774
        %v1145 = vpack.c.bf16 %v779, %v777
        %v1146 = vpack.c.bf16 %v780, %v778
        %v1147 = vpack.c.bf16 %v783, %v781
        %v1148 = vpack.c.bf16 %v784, %v782
        %v1149 = vpack.c.bf16 %v787, %v785
        %v1150 = vpack.c.bf16 %v788, %v786
        %v1151 = vpack.c.bf16 %v791, %v789
        %v1152 = vpack.c.bf16 %v792, %v790
        %v1153 = vpack.c.bf16 %v795, %v793
        %v1154 = vpack.c.bf16 %v796, %v794
        %v1155 = vpack.c.bf16 %v799, %v797
        %v1156 = vpack.c.bf16 %v800, %v798
        %v1157 = vpack.c.bf16 %v803, %v801
        %v1158 = vpack.c.bf16 %v804, %v802
        %v1159 = vpack.c.bf16 %v807, %v805
        %v1160 = vpack.c.bf16 %v808, %v806
        %v1161 = vpack.c.bf16 %v811, %v809
        %v1162 = vpack.c.bf16 %v812, %v810
        %v1163 = vpack.c.bf16 %v815, %v813
        %v1164 = vpack.c.bf16 %v816, %v814
        %v1165 = vpack.c.bf16 %v819, %v817
        %v1166 = vpack.c.bf16 %v820, %v818
        %v1167 = vpack.c.bf16 %v823, %v821
        %v1168 = vpack.c.bf16 %v824, %v822
        %v1169 = vpack.c.bf16 %v827, %v825
        %v1170 = vpack.c.bf16 %v828, %v826
        %v1171 = vpack.c.bf16 %v831, %v829
        %v1172 = vpack.c.bf16 %v832, %v830
        %v1173 = vpack.c.bf16 %v835, %v833
        %v1174 = vpack.c.bf16 %v836, %v834
        %v1175 = vpack.c.bf16 %v839, %v837
        %v1176 = vpack.c.bf16 %v840, %v838
        %v1177 = vpack.c.bf16 %v843, %v841
        %v1178 = vpack.c.bf16 %v844, %v842
        %v1179 = vpack.c.bf16 %v847, %v845
        %v1180 = vpack.c.bf16 %v848, %v846
        %v1181 = vpack.c.bf16 %v851, %v849
        %v1182 = vpack.c.bf16 %v852, %v850
        %v1183 = vpack.c.bf16 %v855, %v853
        %v1184 = vpack.c.bf16 %v856, %v854
        %v1185 = vpack.c.bf16 %v859, %v857
        %v1186 = vpack.c.bf16 %v860, %v858
        %v1187 = vpack.c.bf16 %v863, %v861
        %v1188 = vpack.c.bf16 %v864, %v862
        %v1189 = vpack.c.bf16 %v867, %v865
        %v1190 = vpack.c.bf16 %v868, %v866
        %v1191 = vpack.c.bf16 %v871, %v869
        %v1192 = vpack.c.bf16 %v872, %v870
        %v1193 = vpack.c.bf16 %v875, %v873
        %v1194 = vpack.c.bf16 %v876, %v874
        %v1195 = vpack.c.bf16 %v879, %v877
        %v1196 = vpack.c.bf16 %v880, %v878
        %v1197 = vpack.c.bf16 %v883, %v881
        %v1198 = vpack.c.bf16 %v884, %v882
        %v1199 = vpack.c.bf16 %v887, %v885
        %v1200 = vpack.c.bf16 %v888, %v886
        %v1201 = vpack.c.bf16 %v891, %v889
        %v1202 = vpack.c.bf16 %v892, %v890
        %v1203 = vpack.c.bf16 %v895, %v893
        %v1204 = vpack.c.bf16 %v896, %v894
        %v1205 = vpack.c.bf16 %v899, %v897
        %v1206 = vpack.c.bf16 %v900, %v898
        %v1207 = vpack.c.bf16 %v903, %v901
        %v1208 = vpack.c.bf16 %v904, %v902
        %v1209 = vpack.c.bf16 %v907, %v905
        %v1210 = vpack.c.bf16 %v908, %v906
        %v1211 = vpack.c.bf16 %v911, %v909
        %v1212 = vpack.c.bf16 %v912, %v910
        %v1213 = vpack.c.bf16 %v915, %v913
        %v1214 = vpack.c.bf16 %v916, %v914
        %v1215 = vpack.c.bf16 %v919, %v917
        %v1216 = vpack.c.bf16 %v920, %v918
        %v1217 = vpack.c.bf16 %v923, %v921
        %v1218 = vpack.c.bf16 %v924, %v922
        %v1219 = vpack.c.bf16 %v927, %v925
        %v1220 = vpack.c.bf16 %v928, %v926
        %v1221 = vpack.c.bf16 %v931, %v929
        %v1222 = vpack.c.bf16 %v932, %v930
        %v1223 = vpack.c.bf16 %v935, %v933
        %v1224 = vpack.c.bf16 %v936, %v934
        %v1225 = vpack.c.bf16 %v939, %v937
        %v1226 = vpack.c.bf16 %v940, %v938
        %v1227 = vpack.c.bf16 %v943, %v941
        %v1228 = vpack.c.bf16 %v944, %v942
        %v1229 = vpack.c.bf16 %v947, %v945
        %v1230 = vpack.c.bf16 %v948, %v946
        %v1231 = vpack.c.bf16 %v951, %v949
        %v1232 = vpack.c.bf16 %v952, %v950
        %v1233 = vpack.c.bf16 %v955, %v953
        %v1234 = vpack.c.bf16 %v956, %v954
        %v1235 = vpack.c.bf16 %v959, %v957
        %v1236 = vpack.c.bf16 %v960, %v958
        %v1237 = vpack.c.bf16 %v963, %v961
        %v1238 = vpack.c.bf16 %v964, %v962
        %v1239 = vpack.c.bf16 %v967, %v965
        %v1240 = vpack.c.bf16 %v968, %v966
        %v1241 = vpack.c.bf16 %v971, %v969
        %v1242 = vpack.c.bf16 %v972, %v970
        %v1243 = vpack.c.bf16 %v975, %v973
        %v1244 = vpack.c.bf16 %v976, %v974
        %v1245 = vpack.c.bf16 %v979, %v977
        %v1246 = vpack.c.bf16 %v980, %v978
        %v1247 = vpack.c.bf16 %v983, %v981
        %v1248 = vpack.c.bf16 %v984, %v982
        %v1249 = vpack.c.bf16 %v987, %v985
        %v1250 = vpack.c.bf16 %v988, %v986
        %v1251 = vpack.c.bf16 %v991, %v989
        %v1252 = vpack.c.bf16 %v992, %v990
        %v1253 = vpack.c.bf16 %v995, %v993
        %v1254 = vpack.c.bf16 %v996, %v994
        %v1255 = vpack.c.bf16 %v999, %v997
        %v1256 = vpack.c.bf16 %v1000, %v998
        %v1257 = vld [vmem:[%s1] sm:$0xf]
        %v1258 = vld [vmem:[%s1 + $0x4] sm:$0xf]
        %v1259 = vld [vmem:[%s1 + $0x8] sm:$0xf]
        %v1260 = vld [vmem:[%s1 + $0xc] sm:$0xf]
        %v1261 = vld [vmem:[%s1 + $0x10] sm:$0xf]
        %v1262 = vld [vmem:[%s1 + $0x14] sm:$0xf]
        %v1263 = vld [vmem:[%s1 + $0x18] sm:$0xf]
        %v1264 = vld [vmem:[%s1 + $0x1c] sm:$0xf]
        %v1265 = vld [vmem:[%s1 + $0x20] sm:$0xf]
        %v1266 = vld [vmem:[%s1 + $0x24] sm:$0xf]
        %v1267 = vld [vmem:[%s1 + $0x28] sm:$0xf]
        %v1268 = vld [vmem:[%s1 + $0x2c] sm:$0xf]
        %v1269 = vld [vmem:[%s1 + $0x30] sm:$0xf]
        %v1270 = vld [vmem:[%s1 + $0x34] sm:$0xf]
        %v1271 = vld [vmem:[%s1 + $0x38] sm:$0xf]
        %v1272 = vld [vmem:[%s1 + $0x3c] sm:$0xf]
        %v1273 = vld [vmem:[%s1 + $0x40] sm:$0xf]
        %v1274 = vld [vmem:[%s1 + $0x44] sm:$0xf]
        %v1275 = vld [vmem:[%s1 + $0x48] sm:$0xf]
        %v1276 = vld [vmem:[%s1 + $0x4c] sm:$0xf]
        %v1277 = vld [vmem:[%s1 + $0x50] sm:$0xf]
        %v1278 = vld [vmem:[%s1 + $0x54] sm:$0xf]
        %v1279 = vld [vmem:[%s1 + $0x58] sm:$0xf]
        %v1280 = vld [vmem:[%s1 + $0x5c] sm:$0xf]
        %v1281 = vld [vmem:[%s1 + $0x60] sm:$0xf]
        %v1282 = vld [vmem:[%s1 + $0x64] sm:$0xf]
        %v1283 = vld [vmem:[%s1 + $0x68] sm:$0xf]
        %v1284 = vld [vmem:[%s1 + $0x6c] sm:$0xf]
        %v1285 = vld [vmem:[%s1 + $0x70] sm:$0xf]
        %v1286 = vld [vmem:[%s1 + $0x74] sm:$0xf]
        %v1287 = vld [vmem:[%s1 + $0x78] sm:$0xf]
        %v1288 = vld [vmem:[%s1 + $0x7c] sm:$0xf]
        %v1321 = vunpack.c.l.b16 %v1257
        %v1322 = vunpack.c.l.b16 %v1258
        %v1323 = vunpack.c.l.b16 %v1259
        %v1324 = vunpack.c.l.b16 %v1260
        %v1325 = vunpack.c.l.b16 %v1261
        %v1326 = vunpack.c.l.b16 %v1262
        %v1327 = vunpack.c.l.b16 %v1263
        %v1328 = vunpack.c.l.b16 %v1264
        %v1329 = vunpack.c.l.b16 %v1265
        %v1330 = vunpack.c.l.b16 %v1266
        %v1331 = vunpack.c.l.b16 %v1267
        %v1332 = vunpack.c.l.b16 %v1268
        %v1333 = vunpack.c.l.b16 %v1269
        %v1334 = vunpack.c.l.b16 %v1270
        %v1335 = vunpack.c.l.b16 %v1271
        %v1336 = vunpack.c.l.b16 %v1272
        %v1337 = vunpack.c.l.b16 %v1273
        %v1338 = vunpack.c.l.b16 %v1274
        %v1339 = vunpack.c.l.b16 %v1275
        %v1340 = vunpack.c.l.b16 %v1276
        %v1341 = vunpack.c.l.b16 %v1277
        %v1342 = vunpack.c.l.b16 %v1278
        %v1343 = vunpack.c.l.b16 %v1279
        %v1344 = vunpack.c.l.b16 %v1280
        %v1345 = vunpack.c.l.b16 %v1281
        %v1346 = vunpack.c.l.b16 %v1282
        %v1347 = vunpack.c.l.b16 %v1283
        %v1348 = vunpack.c.l.b16 %v1284
        %v1349 = vunpack.c.l.b16 %v1285
        %v1350 = vunpack.c.l.b16 %v1286
        %v1351 = vunpack.c.l.b16 %v1287
        %v1352 = vunpack.c.l.b16 %v1288
        %v1353 = vpack.c.b16 %v1322, %v1321
        %v1354 = vpack.c.b16 %v1324, %v1323
        %v1355 = vpack.c.b16 %v1326, %v1325
        %v1356 = vpack.c.b16 %v1328, %v1327
        %v1357 = vpack.c.b16 %v1330, %v1329
        %v1358 = vpack.c.b16 %v1332, %v1331
        %v1359 = vpack.c.b16 %v1334, %v1333
        %v1360 = vpack.c.b16 %v1336, %v1335
        %v1361 = vpack.c.b16 %v1338, %v1337
        %v1362 = vpack.c.b16 %v1340, %v1339
        %v1363 = vpack.c.b16 %v1342, %v1341
        %v1364 = vpack.c.b16 %v1344, %v1343
        %v1365 = vpack.c.b16 %v1346, %v1345
        %v1366 = vpack.c.b16 %v1348, %v1347
        %v1367 = vpack.c.b16 %v1350, %v1349
        %v1368 = vpack.c.b16 %v1352, %v1351
        %1385 = vmatprep.subr.bf16.mxu0 0
        %1386 = vmatpush1.bf16.msra.mxu0 %v1353
        %1387 = vmatprep.subr.bf16.mxu0 0
        %1388 = vmatpush1.bf16.msra.mxu0 %v1354
        %1389 = vmatprep.subr.bf16.mxu0 0
        %1390 = vmatpush1.bf16.msra.mxu0 %v1355
        %1391 = vmatprep.subr.bf16.mxu0 0
        %1392 = vmatpush1.bf16.msra.mxu0 %v1356
        %1393 = vmatprep.subr.bf16.mxu0 0
        %1394 = vmatpush1.bf16.msra.mxu0 %v1357
        %1395 = vmatprep.subr.bf16.mxu0 0
        %1396 = vmatpush1.bf16.msra.mxu0 %v1358
        %1397 = vmatprep.subr.bf16.mxu0 0
        %1398 = vmatpush1.bf16.msra.mxu0 %v1359
        %1399 = vmatprep.subr.bf16.mxu0 0
        %1400 = vmatpush1.bf16.msra.mxu0 %v1360
        %1401 = vmatprep.subr.bf16.mxu0 0
        %1402 = vmatpush1.bf16.msra.mxu0 %v1361
        %1403 = vmatprep.subr.bf16.mxu0 0
        %1404 = vmatpush1.bf16.msra.mxu0 %v1362
        %1405 = vmatprep.subr.bf16.mxu0 0
        %1406 = vmatpush1.bf16.msra.mxu0 %v1363
        %1407 = vmatprep.subr.bf16.mxu0 0
        %1408 = vmatpush1.bf16.msra.mxu0 %v1364
        %1409 = vmatprep.subr.bf16.mxu0 0
        %1410 = vmatpush1.bf16.msra.mxu0 %v1365
        %1411 = vmatprep.subr.bf16.mxu0 0
        %1412 = vmatpush1.bf16.msra.mxu0 %v1366
        %1413 = vmatprep.subr.bf16.mxu0 0
        %1414 = vmatpush1.bf16.msra.mxu0 %v1367
        %1415 = vmatprep.subr.bf16.mxu0 0
        %1416 = vmatpush1.bf16.msra.mxu0 %v1368
        %1417 = vmatprep.mubr.bf16.mxu0 %v1002
        %1418 = vmatmul.mubr.bf16.gmra.mrb[0].mxu0 %v1001
        %v1419 = vpop.f32.mrb[0].mxu0
        %v1420 = vadd.f32 0.0, %v1419
        %v1421 = vpop.f32.mrb[0].mxu0
        %v1422 = vpop.f32.mrb[0].mxu0
        %v1423 = vadd.f32 0.0, %v1422
        %v1424 = vpop.f32.mrb[0].mxu0
        %1425 = vmatprep.mubr.bf16.mxu0 %v1004
        %1426 = vmatmul.mubr.bf16.gmra.mrb[0].mxu0 %v1003
        %v1427 = vpop.f32.mrb[0].mxu0
        %v1428 = vadd.f32 0.0, %v1427
        %v1429 = vpop.f32.mrb[0].mxu0
        %v1430 = vpop.f32.mrb[0].mxu0
        %v1431 = vadd.f32 0.0, %v1430
        %v1432 = vpop.f32.mrb[0].mxu0
        %1433 = vmatprep.mubr.bf16.mxu0 %v1006
        %1434 = vmatmul.mubr.bf16.gmra.mrb[0].mxu0 %v1005
        %v1435 = vpop.f32.mrb[0].mxu0
        %v1436 = vadd.f32 0.0, %v1435
        %v1437 = vpop.f32.mrb[0].mxu0
        %v1438 = vpop.f32.mrb[0].mxu0
        %v1439 = vadd.f32 0.0, %v1438
        %v1440 = vpop.f32.mrb[0].mxu0
        %1441 = vmatprep.mubr.bf16.mxu0 %v1008
        %1442 = vmatmul.mubr.bf16.gmra.mrb[0].mxu0 %v1007
        %v1443 = vpop.f32.mrb[0].mxu0
        %v1444 = vadd.f32 0.0, %v1443
        %v1445 = vpop.f32.mrb[0].mxu0
        %v1446 = vpop.f32.mrb[0].mxu0
        %v1447 = vadd.f32 0.0, %v1446
        %v1448 = vpop.f32.mrb[0].mxu0
        %1449 = vmatprep.mubr.bf16.mxu0 %v1010
        %1450 = vmatmul.mubr.bf16.gmra.mrb[0].mxu0 %v1009
        %v1451 = vpop.f32.mrb[0].mxu0
        %v1452 = vadd.f32 0.0, %v1451
        %v1453 = vpop.f32.mrb[0].mxu0
        %v1454 = vpop.f32.mrb[0].mxu0
        %v1455 = vadd.f32 0.0, %v1454
        %v1456 = vpop.f32.mrb[0].mxu0
        %1457 = vmatprep.mubr.bf16.mxu0 %v1012
        %1458 = vmatmul.mubr.bf16.gmra.mrb[0].mxu0 %v1011
        %v1459 = vpop.f32.mrb[0].mxu0
        %v1460 = vadd.f32 0.0, %v1459
        %v1461 = vpop.f32.mrb[0].mxu0
        %v1462 = vpop.f32.mrb[0].mxu0
        %v1463 = vadd.f32 0.0, %v1462
        %v1464 = vpop.f32.mrb[0].mxu0
        %1465 = vmatprep.mubr.bf16.mxu0 %v1014
        %1466 = vmatmul.mubr.bf16.gmra.mrb[0].mxu0 %v1013
        %v1467 = vpop.f32.mrb[0].mxu0
        %v1468 = vadd.f32 0.0, %v1467
        %v1469 = vpop.f32.mrb[0].mxu0
        %v1470 = vpop.f32.mrb[0].mxu0
        %v1471 = vadd.f32 0.0, %v1470
        %v1472 = vpop.f32.mrb[0].mxu0
        %1473 = vmatprep.mubr.bf16.mxu0 %v1016
        %1474 = vmatmul.mubr.bf16.gmra.mrb[0].mxu0 %v1015
        %v1475 = vpop.f32.mrb[0].mxu0
        %v1476 = vadd.f32 0.0, %v1475
        %v1477 = vpop.f32.mrb[0].mxu0
        %v1478 = vpop.f32.mrb[0].mxu0
        %v1479 = vadd.f32 0.0, %v1478
        %v1480 = vpop.f32.mrb[0].mxu0
        %1481 = vmatprep.mubr.bf16.mxu0 %v1018
        %1482 = vmatmul.mubr.bf16.gmra.mrb[0].mxu0 %v1017
        %v1483 = vpop.f32.mrb[0].mxu0
        %v1484 = vadd.f32 0.0, %v1483
        %v1485 = vpop.f32.mrb[0].mxu0
        %v1486 = vpop.f32.mrb[0].mxu0
        %v1487 = vadd.f32 0.0, %v1486
        %v1488 = vpop.f32.mrb[0].mxu0
        %1489 = vmatprep.mubr.bf16.mxu0 %v1020
        %1490 = vmatmul.mubr.bf16.gmra.mrb[0].mxu0 %v1019
        %v1491 = vpop.f32.mrb[0].mxu0
        %v1492 = vadd.f32 0.0, %v1491
        %v1493 = vpop.f32.mrb[0].mxu0
        %v1494 = vpop.f32.mrb[0].mxu0
        %v1495 = vadd.f32 0.0, %v1494
        %v1496 = vpop.f32.mrb[0].mxu0
        %1497 = vmatprep.mubr.bf16.mxu0 %v1022
        %1498 = vmatmul.mubr.bf16.gmra.mrb[0].mxu0 %v1021
        %v1499 = vpop.f32.mrb[0].mxu0
        %v1500 = vadd.f32 0.0, %v1499
        %v1501 = vpop.f32.mrb[0].mxu0
        %v1502 = vpop.f32.mrb[0].mxu0
        %v1503 = vadd.f32 0.0, %v1502
        %v1504 = vpop.f32.mrb[0].mxu0
        %1505 = vmatprep.mubr.bf16.mxu0 %v1024
        %1506 = vmatmul.mubr.bf16.gmra.mrb[0].mxu0 %v1023
        %v1507 = vpop.f32.mrb[0].mxu0
        %v1508 = vadd.f32 0.0, %v1507
        %v1509 = vpop.f32.mrb[0].mxu0
        %v1510 = vpop.f32.mrb[0].mxu0
        %v1511 = vadd.f32 0.0, %v1510
        %v1512 = vpop.f32.mrb[0].mxu0
        %1513 = vmatprep.mubr.bf16.mxu0 %v1026
        %1514 = vmatmul.mubr.bf16.gmra.mrb[0].mxu0 %v1025
        %v1515 = vpop.f32.mrb[0].mxu0
        %v1516 = vadd.f32 0.0, %v1515
        %v1517 = vpop.f32.mrb[0].mxu0
        %v1518 = vpop.f32.mrb[0].mxu0
        %v1519 = vadd.f32 0.0, %v1518
        %v1520 = vpop.f32.mrb[0].mxu0
        %1521 = vmatprep.mubr.bf16.mxu0 %v1028
        %1522 = vmatmul.mubr.bf16.gmra.mrb[0].mxu0 %v1027
        %v1523 = vpop.f32.mrb[0].mxu0
        %v1524 = vadd.f32 0.0, %v1523
        %v1525 = vpop.f32.mrb[0].mxu0
        %v1526 = vpop.f32.mrb[0].mxu0
        %v1527 = vadd.f32 0.0, %v1526
        %v1528 = vpop.f32.mrb[0].mxu0
        %1529 = vmatprep.mubr.bf16.mxu0 %v1030
        %1530 = vmatmul.mubr.bf16.gmra.mrb[0].mxu0 %v1029
        %v1531 = vpop.f32.mrb[0].mxu0
        %v1532 = vadd.f32 0.0, %v1531
        %v1533 = vpop.f32.mrb[0].mxu0
        %v1534 = vpop.f32.mrb[0].mxu0
        %v1535 = vadd.f32 0.0, %v1534
        %v1536 = vpop.f32.mrb[0].mxu0
        %1537 = vmatprep.mubr.bf16.mxu0 %v1032
        %1538 = vmatmul.mubr.bf16.gmra.mrb[0].mxu0 %v1031
        %v1539 = vpop.f32.mrb[0].mxu0
        %v1540 = vadd.f32 0.0, %v1539
        %v1541 = vpop.f32.mrb[0].mxu0
        %v1542 = vpop.f32.mrb[0].mxu0
        %v1543 = vadd.f32 0.0, %v1542
        %v1544 = vpop.f32.mrb[0].mxu0
        %1545 = vmatprep.mubr.bf16.mxu0 %v1034
        %1546 = vmatmul.mubr.bf16.gmra.mrb[0].mxu0 %v1033
        %v1547 = vpop.f32.mrb[0].mxu0
        %v1548 = vadd.f32 0.0, %v1547
        %v1549 = vpop.f32.mrb[0].mxu0
        %v1550 = vpop.f32.mrb[0].mxu0
        %v1551 = vadd.f32 0.0, %v1550
        %v1552 = vpop.f32.mrb[0].mxu0
        %1553 = vmatprep.mubr.bf16.mxu0 %v1036
        %1554 = vmatmul.mubr.bf16.gmra.mrb[0].mxu0 %v1035
        %v1555 = vpop.f32.mrb[0].mxu0
        %v1556 = vadd.f32 0.0, %v1555
        %v1557 = vpop.f32.mrb[0].mxu0
        %v1558 = vpop.f32.mrb[0].mxu0
        %v1559 = vadd.f32 0.0, %v1558
        %v1560 = vpop.f32.mrb[0].mxu0
        %1561 = vmatprep.mubr.bf16.mxu0 %v1038
        %1562 = vmatmul.mubr.bf16.gmra.mrb[0].mxu0 %v1037
        %v1563 = vpop.f32.mrb[0].mxu0
        %v1564 = vadd.f32 0.0, %v1563
        %v1565 = vpop.f32.mrb[0].mxu0
        %v1566 = vpop.f32.mrb[0].mxu0
        %v1567 = vadd.f32 0.0, %v1566
        %v1568 = vpop.f32.mrb[0].mxu0
        %1569 = vmatprep.mubr.bf16.mxu0 %v1040
        %1570 = vmatmul.mubr.bf16.gmra.mrb[0].mxu0 %v1039
        %v1571 = vpop.f32.mrb[0].mxu0
        %v1572 = vadd.f32 0.0, %v1571
        %v1573 = vpop.f32.mrb[0].mxu0
        %v1574 = vpop.f32.mrb[0].mxu0
        %v1575 = vadd.f32 0.0, %v1574
        %v1576 = vpop.f32.mrb[0].mxu0
        %1577 = vmatprep.mubr.bf16.mxu0 %v1042
        %1578 = vmatmul.mubr.bf16.gmra.mrb[0].mxu0 %v1041
        %v1579 = vpop.f32.mrb[0].mxu0
        %v1580 = vadd.f32 0.0, %v1579
        %v1581 = vpop.f32.mrb[0].mxu0
        %v1582 = vpop.f32.mrb[0].mxu0
        %v1583 = vadd.f32 0.0, %v1582
        %v1584 = vpop.f32.mrb[0].mxu0
        %1585 = vmatprep.mubr.bf16.mxu0 %v1044
        %1586 = vmatmul.mubr.bf16.gmra.mrb[0].mxu0 %v1043
        %v1587 = vpop.f32.mrb[0].mxu0
        %v1588 = vadd.f32 0.0, %v1587
        %v1589 = vpop.f32.mrb[0].mxu0
        %v1590 = vpop.f32.mrb[0].mxu0
        %v1591 = vadd.f32 0.0, %v1590
        %v1592 = vpop.f32.mrb[0].mxu0
        %1593 = vmatprep.mubr.bf16.mxu0 %v1046
        %1594 = vmatmul.mubr.bf16.gmra.mrb[0].mxu0 %v1045
        %v1595 = vpop.f32.mrb[0].mxu0
        %v1596 = vadd.f32 0.0, %v1595
        %v1597 = vpop.f32.mrb[0].mxu0
        %v1598 = vpop.f32.mrb[0].mxu0
        %v1599 = vadd.f32 0.0, %v1598
        %v1600 = vpop.f32.mrb[0].mxu0
        %1601 = vmatprep.mubr.bf16.mxu0 %v1048
        %1602 = vmatmul.mubr.bf16.gmra.mrb[0].mxu0 %v1047
        %v1603 = vpop.f32.mrb[0].mxu0
        %v1604 = vadd.f32 0.0, %v1603
        %v1605 = vpop.f32.mrb[0].mxu0
        %v1606 = vpop.f32.mrb[0].mxu0
        %v1607 = vadd.f32 0.0, %v1606
        %v1608 = vpop.f32.mrb[0].mxu0
        %1609 = vmatprep.mubr.bf16.mxu0 %v1050
        %1610 = vmatmul.mubr.bf16.gmra.mrb[0].mxu0 %v1049
        %v1611 = vpop.f32.mrb[0].mxu0
        %v1612 = vadd.f32 0.0, %v1611
        %v1613 = vpop.f32.mrb[0].mxu0
        %v1614 = vpop.f32.mrb[0].mxu0
        %v1615 = vadd.f32 0.0, %v1614
        %v1616 = vpop.f32.mrb[0].mxu0
        %1617 = vmatprep.mubr.bf16.mxu0 %v1052
        %1618 = vmatmul.mubr.bf16.gmra.mrb[0].mxu0 %v1051
        %v1619 = vpop.f32.mrb[0].mxu0
        %v1620 = vadd.f32 0.0, %v1619
        %v1621 = vpop.f32.mrb[0].mxu0
        %v1622 = vpop.f32.mrb[0].mxu0
        %v1623 = vadd.f32 0.0, %v1622
        %v1624 = vpop.f32.mrb[0].mxu0
        %1625 = vmatprep.mubr.bf16.mxu0 %v1054
        %1626 = vmatmul.mubr.bf16.gmra.mrb[0].mxu0 %v1053
        %v1627 = vpop.f32.mrb[0].mxu0
        %v1628 = vadd.f32 0.0, %v1627
        %v1629 = vpop.f32.mrb[0].mxu0
        %v1630 = vpop.f32.mrb[0].mxu0
        %v1631 = vadd.f32 0.0, %v1630
        %v1632 = vpop.f32.mrb[0].mxu0
        %1633 = vmatprep.mubr.bf16.mxu0 %v1056
        %1634 = vmatmul.mubr.bf16.gmra.mrb[0].mxu0 %v1055
        %v1635 = vpop.f32.mrb[0].mxu0
        %v1636 = vadd.f32 0.0, %v1635
        %v1637 = vpop.f32.mrb[0].mxu0
        %v1638 = vpop.f32.mrb[0].mxu0
        %v1639 = vadd.f32 0.0, %v1638
        %v1640 = vpop.f32.mrb[0].mxu0
        %1641 = vmatprep.mubr.bf16.mxu0 %v1058
        %1642 = vmatmul.mubr.bf16.gmra.mrb[0].mxu0 %v1057
        %v1643 = vpop.f32.mrb[0].mxu0
        %v1644 = vadd.f32 0.0, %v1643
        %v1645 = vpop.f32.mrb[0].mxu0
        %v1646 = vpop.f32.mrb[0].mxu0
        %v1647 = vadd.f32 0.0, %v1646
        %v1648 = vpop.f32.mrb[0].mxu0
        %1649 = vmatprep.mubr.bf16.mxu0 %v1060
        %1650 = vmatmul.mubr.bf16.gmra.mrb[0].mxu0 %v1059
        %v1651 = vpop.f32.mrb[0].mxu0
        %v1652 = vadd.f32 0.0, %v1651
        %v1653 = vpop.f32.mrb[0].mxu0
        %v1654 = vpop.f32.mrb[0].mxu0
        %v1655 = vadd.f32 0.0, %v1654
        %v1656 = vpop.f32.mrb[0].mxu0
        %1657 = vmatprep.mubr.bf16.mxu0 %v1062
        %1658 = vmatmul.mubr.bf16.gmra.mrb[0].mxu0 %v1061
        %v1659 = vpop.f32.mrb[0].mxu0
        %v1660 = vadd.f32 0.0, %v1659
        %v1661 = vpop.f32.mrb[0].mxu0
        %v1662 = vpop.f32.mrb[0].mxu0
        %v1663 = vadd.f32 0.0, %v1662
        %v1664 = vpop.f32.mrb[0].mxu0
        %1665 = vmatprep.mubr.bf16.mxu0 %v1064
        %1666 = vmatmul.mubr.bf16.gmra.mrb[0].mxu0 %v1063
        %v1667 = vpop.f32.mrb[0].mxu0
        %v1668 = vadd.f32 0.0, %v1667
        %v1669 = vpop.f32.mrb[0].mxu0
        %v1670 = vpop.f32.mrb[0].mxu0
        %v1671 = vadd.f32 0.0, %v1670
        %v1672 = vpop.f32.mrb[0].mxu0
        %1673 = vmatprep.mubr.bf16.mxu0 %v1066
        %1674 = vmatmul.mubr.bf16.gmra.mrb[0].mxu0 %v1065
        %v1675 = vpop.f32.mrb[0].mxu0
        %v1676 = vadd.f32 0.0, %v1675
        %v1677 = vpop.f32.mrb[0].mxu0
        %v1678 = vpop.f32.mrb[0].mxu0
        %v1679 = vadd.f32 0.0, %v1678
        %v1680 = vpop.f32.mrb[0].mxu0
        %1681 = vmatprep.mubr.bf16.mxu0 %v1068
        %1682 = vmatmul.mubr.bf16.gmra.mrb[0].mxu0 %v1067
        %v1683 = vpop.f32.mrb[0].mxu0
        %v1684 = vadd.f32 0.0, %v1683
        %v1685 = vpop.f32.mrb[0].mxu0
        %v1686 = vpop.f32.mrb[0].mxu0
        %v1687 = vadd.f32 0.0, %v1686
        %v1688 = vpop.f32.mrb[0].mxu0
        %1689 = vmatprep.mubr.bf16.mxu0 %v1070
        %1690 = vmatmul.mubr.bf16.gmra.mrb[0].mxu0 %v1069
        %v1691 = vpop.f32.mrb[0].mxu0
        %v1692 = vadd.f32 0.0, %v1691
        %v1693 = vpop.f32.mrb[0].mxu0
        %v1694 = vpop.f32.mrb[0].mxu0
        %v1695 = vadd.f32 0.0, %v1694
        %v1696 = vpop.f32.mrb[0].mxu0
        %1697 = vmatprep.mubr.bf16.mxu0 %v1072
        %1698 = vmatmul.mubr.bf16.gmra.mrb[0].mxu0 %v1071
        %v1699 = vpop.f32.mrb[0].mxu0
        %v1700 = vadd.f32 0.0, %v1699
        %v1701 = vpop.f32.mrb[0].mxu0
        %v1702 = vpop.f32.mrb[0].mxu0
        %v1703 = vadd.f32 0.0, %v1702
        %v1704 = vpop.f32.mrb[0].mxu0
        %1705 = vmatprep.mubr.bf16.mxu0 %v1074
        %1706 = vmatmul.mubr.bf16.gmra.mrb[0].mxu0 %v1073
        %v1707 = vpop.f32.mrb[0].mxu0
        %v1708 = vadd.f32 0.0, %v1707
        %v1709 = vpop.f32.mrb[0].mxu0
        %v1710 = vpop.f32.mrb[0].mxu0
        %v1711 = vadd.f32 0.0, %v1710
        %v1712 = vpop.f32.mrb[0].mxu0
        %1713 = vmatprep.mubr.bf16.mxu0 %v1076
        %1714 = vmatmul.mubr.bf16.gmra.mrb[0].mxu0 %v1075
        %v1715 = vpop.f32.mrb[0].mxu0
        %v1716 = vadd.f32 0.0, %v1715
        %v1717 = vpop.f32.mrb[0].mxu0
        %v1718 = vpop.f32.mrb[0].mxu0
        %v1719 = vadd.f32 0.0, %v1718
        %v1720 = vpop.f32.mrb[0].mxu0
        %1721 = vmatprep.mubr.bf16.mxu0 %v1078
        %1722 = vmatmul.mubr.bf16.gmra.mrb[0].mxu0 %v1077
        %v1723 = vpop.f32.mrb[0].mxu0
        %v1724 = vadd.f32 0.0, %v1723
        %v1725 = vpop.f32.mrb[0].mxu0
        %v1726 = vpop.f32.mrb[0].mxu0
        %v1727 = vadd.f32 0.0, %v1726
        %v1728 = vpop.f32.mrb[0].mxu0
        %1729 = vmatprep.mubr.bf16.mxu0 %v1080
        %1730 = vmatmul.mubr.bf16.gmra.mrb[0].mxu0 %v1079
        %v1731 = vpop.f32.mrb[0].mxu0
        %v1732 = vadd.f32 0.0, %v1731
        %v1733 = vpop.f32.mrb[0].mxu0
        %v1734 = vpop.f32.mrb[0].mxu0
        %v1735 = vadd.f32 0.0, %v1734
        %v1736 = vpop.f32.mrb[0].mxu0
        %1737 = vmatprep.mubr.bf16.mxu0 %v1082
        %1738 = vmatmul.mubr.bf16.gmra.mrb[0].mxu0 %v1081
        %v1739 = vpop.f32.mrb[0].mxu0
        %v1740 = vadd.f32 0.0, %v1739
        %v1741 = vpop.f32.mrb[0].mxu0
        %v1742 = vpop.f32.mrb[0].mxu0
        %v1743 = vadd.f32 0.0, %v1742
        %v1744 = vpop.f32.mrb[0].mxu0
        %1745 = vmatprep.mubr.bf16.mxu0 %v1084
        %1746 = vmatmul.mubr.bf16.gmra.mrb[0].mxu0 %v1083
        %v1747 = vpop.f32.mrb[0].mxu0
        %v1748 = vadd.f32 0.0, %v1747
        %v1749 = vpop.f32.mrb[0].mxu0
        %v1750 = vpop.f32.mrb[0].mxu0
        %v1751 = vadd.f32 0.0, %v1750
        %v1752 = vpop.f32.mrb[0].mxu0
        %1753 = vmatprep.mubr.bf16.mxu0 %v1086
        %1754 = vmatmul.mubr.bf16.gmra.mrb[0].mxu0 %v1085
        %v1755 = vpop.f32.mrb[0].mxu0
        %v1756 = vadd.f32 0.0, %v1755
        %v1757 = vpop.f32.mrb[0].mxu0
        %v1758 = vpop.f32.mrb[0].mxu0
        %v1759 = vadd.f32 0.0, %v1758
        %v1760 = vpop.f32.mrb[0].mxu0
        %1761 = vmatprep.mubr.bf16.mxu0 %v1088
        %1762 = vmatmul.mubr.bf16.gmra.mrb[0].mxu0 %v1087
        %v1763 = vpop.f32.mrb[0].mxu0
        %v1764 = vadd.f32 0.0, %v1763
        %v1765 = vpop.f32.mrb[0].mxu0
        %v1766 = vpop.f32.mrb[0].mxu0
        %v1767 = vadd.f32 0.0, %v1766
        %v1768 = vpop.f32.mrb[0].mxu0
        %1769 = vmatprep.mubr.bf16.mxu0 %v1090
        %1770 = vmatmul.mubr.bf16.gmra.mrb[0].mxu0 %v1089
        %v1771 = vpop.f32.mrb[0].mxu0
        %v1772 = vadd.f32 0.0, %v1771
        %v1773 = vpop.f32.mrb[0].mxu0
        %v1774 = vpop.f32.mrb[0].mxu0
        %v1775 = vadd.f32 0.0, %v1774
        %v1776 = vpop.f32.mrb[0].mxu0
        %1777 = vmatprep.mubr.bf16.mxu0 %v1092
        %1778 = vmatmul.mubr.bf16.gmra.mrb[0].mxu0 %v1091
        %v1779 = vpop.f32.mrb[0].mxu0
        %v1780 = vadd.f32 0.0, %v1779
        %v1781 = vpop.f32.mrb[0].mxu0
        %v1782 = vpop.f32.mrb[0].mxu0
        %v1783 = vadd.f32 0.0, %v1782
        %v1784 = vpop.f32.mrb[0].mxu0
        %1785 = vmatprep.mubr.bf16.mxu0 %v1094
        %1786 = vmatmul.mubr.bf16.gmra.mrb[0].mxu0 %v1093
        %v1787 = vpop.f32.mrb[0].mxu0
        %v1788 = vadd.f32 0.0, %v1787
        %v1789 = vpop.f32.mrb[0].mxu0
        %v1790 = vpop.f32.mrb[0].mxu0
        %v1791 = vadd.f32 0.0, %v1790
        %v1792 = vpop.f32.mrb[0].mxu0
        %1793 = vmatprep.mubr.bf16.mxu0 %v1096
        %1794 = vmatmul.mubr.bf16.gmra.mrb[0].mxu0 %v1095
        %v1795 = vpop.f32.mrb[0].mxu0
        %v1796 = vadd.f32 0.0, %v1795
        %v1797 = vpop.f32.mrb[0].mxu0
        %v1798 = vpop.f32.mrb[0].mxu0
        %v1799 = vadd.f32 0.0, %v1798
        %v1800 = vpop.f32.mrb[0].mxu0
        %1801 = vmatprep.mubr.bf16.mxu0 %v1098
        %1802 = vmatmul.mubr.bf16.gmra.mrb[0].mxu0 %v1097
        %v1803 = vpop.f32.mrb[0].mxu0
        %v1804 = vadd.f32 0.0, %v1803
        %v1805 = vpop.f32.mrb[0].mxu0
        %v1806 = vpop.f32.mrb[0].mxu0
        %v1807 = vadd.f32 0.0, %v1806
        %v1808 = vpop.f32.mrb[0].mxu0
        %1809 = vmatprep.mubr.bf16.mxu0 %v1100
        %1810 = vmatmul.mubr.bf16.gmra.mrb[0].mxu0 %v1099
        %v1811 = vpop.f32.mrb[0].mxu0
        %v1812 = vadd.f32 0.0, %v1811
        %v1813 = vpop.f32.mrb[0].mxu0
        %v1814 = vpop.f32.mrb[0].mxu0
        %v1815 = vadd.f32 0.0, %v1814
        %v1816 = vpop.f32.mrb[0].mxu0
        %1817 = vmatprep.mubr.bf16.mxu0 %v1102
        %1818 = vmatmul.mubr.bf16.gmra.mrb[0].mxu0 %v1101
        %v1819 = vpop.f32.mrb[0].mxu0
        %v1820 = vadd.f32 0.0, %v1819
        %v1821 = vpop.f32.mrb[0].mxu0
        %v1822 = vpop.f32.mrb[0].mxu0
        %v1823 = vadd.f32 0.0, %v1822
        %v1824 = vpop.f32.mrb[0].mxu0
        %1825 = vmatprep.mubr.bf16.mxu0 %v1104
        %1826 = vmatmul.mubr.bf16.gmra.mrb[0].mxu0 %v1103
        %v1827 = vpop.f32.mrb[0].mxu0
        %v1828 = vadd.f32 0.0, %v1827
        %v1829 = vpop.f32.mrb[0].mxu0
        %v1830 = vpop.f32.mrb[0].mxu0
        %v1831 = vadd.f32 0.0, %v1830
        %v1832 = vpop.f32.mrb[0].mxu0
        %1833 = vmatprep.mubr.bf16.mxu0 %v1106
        %1834 = vmatmul.mubr.bf16.gmra.mrb[0].mxu0 %v1105
        %v1835 = vpop.f32.mrb[0].mxu0
        %v1836 = vadd.f32 0.0, %v1835
        %v1837 = vpop.f32.mrb[0].mxu0
        %v1838 = vpop.f32.mrb[0].mxu0
        %v1839 = vadd.f32 0.0, %v1838
        %v1840 = vpop.f32.mrb[0].mxu0
        %1841 = vmatprep.mubr.bf16.mxu0 %v1108
        %1842 = vmatmul.mubr.bf16.gmra.mrb[0].mxu0 %v1107
        %v1843 = vpop.f32.mrb[0].mxu0
        %v1844 = vadd.f32 0.0, %v1843
        %v1845 = vpop.f32.mrb[0].mxu0
        %v1846 = vpop.f32.mrb[0].mxu0
        %v1847 = vadd.f32 0.0, %v1846
        %v1848 = vpop.f32.mrb[0].mxu0
        %1849 = vmatprep.mubr.bf16.mxu0 %v1110
        %1850 = vmatmul.mubr.bf16.gmra.mrb[0].mxu0 %v1109
        %v1851 = vpop.f32.mrb[0].mxu0
        %v1852 = vadd.f32 0.0, %v1851
        %v1853 = vpop.f32.mrb[0].mxu0
        %v1854 = vpop.f32.mrb[0].mxu0
        %v1855 = vadd.f32 0.0, %v1854
        %v1856 = vpop.f32.mrb[0].mxu0
        %1857 = vmatprep.mubr.bf16.mxu0 %v1112
        %1858 = vmatmul.mubr.bf16.gmra.mrb[0].mxu0 %v1111
        %v1859 = vpop.f32.mrb[0].mxu0
        %v1860 = vadd.f32 0.0, %v1859
        %v1861 = vpop.f32.mrb[0].mxu0
        %v1862 = vpop.f32.mrb[0].mxu0
        %v1863 = vadd.f32 0.0, %v1862
        %v1864 = vpop.f32.mrb[0].mxu0
        %1865 = vmatprep.mubr.bf16.mxu0 %v1114
        %1866 = vmatmul.mubr.bf16.gmra.mrb[0].mxu0 %v1113
        %v1867 = vpop.f32.mrb[0].mxu0
        %v1868 = vadd.f32 0.0, %v1867
        %v1869 = vpop.f32.mrb[0].mxu0
        %v1870 = vpop.f32.mrb[0].mxu0
        %v1871 = vadd.f32 0.0, %v1870
        %v1872 = vpop.f32.mrb[0].mxu0
        %1873 = vmatprep.mubr.bf16.mxu0 %v1116
        %1874 = vmatmul.mubr.bf16.gmra.mrb[0].mxu0 %v1115
        %v1875 = vpop.f32.mrb[0].mxu0
        %v1876 = vadd.f32 0.0, %v1875
        %v1877 = vpop.f32.mrb[0].mxu0
        %v1878 = vpop.f32.mrb[0].mxu0
        %v1879 = vadd.f32 0.0, %v1878
        %v1880 = vpop.f32.mrb[0].mxu0
        %1881 = vmatprep.mubr.bf16.mxu0 %v1118
        %1882 = vmatmul.mubr.bf16.gmra.mrb[0].mxu0 %v1117
        %v1883 = vpop.f32.mrb[0].mxu0
        %v1884 = vadd.f32 0.0, %v1883
        %v1885 = vpop.f32.mrb[0].mxu0
        %v1886 = vpop.f32.mrb[0].mxu0
        %v1887 = vadd.f32 0.0, %v1886
        %v1888 = vpop.f32.mrb[0].mxu0
        %1889 = vmatprep.mubr.bf16.mxu0 %v1120
        %1890 = vmatmul.mubr.bf16.gmra.mrb[0].mxu0 %v1119
        %v1891 = vpop.f32.mrb[0].mxu0
        %v1892 = vadd.f32 0.0, %v1891
        %v1893 = vpop.f32.mrb[0].mxu0
        %v1894 = vpop.f32.mrb[0].mxu0
        %v1895 = vadd.f32 0.0, %v1894
        %v1896 = vpop.f32.mrb[0].mxu0
        %1897 = vmatprep.mubr.bf16.mxu0 %v1122
        %1898 = vmatmul.mubr.bf16.gmra.mrb[0].mxu0 %v1121
        %v1899 = vpop.f32.mrb[0].mxu0
        %v1900 = vadd.f32 0.0, %v1899
        %v1901 = vpop.f32.mrb[0].mxu0
        %v1902 = vpop.f32.mrb[0].mxu0
        %v1903 = vadd.f32 0.0, %v1902
        %v1904 = vpop.f32.mrb[0].mxu0
        %1905 = vmatprep.mubr.bf16.mxu0 %v1124
        %1906 = vmatmul.mubr.bf16.gmra.mrb[0].mxu0 %v1123
        %v1907 = vpop.f32.mrb[0].mxu0
        %v1908 = vadd.f32 0.0, %v1907
        %v1909 = vpop.f32.mrb[0].mxu0
        %v1910 = vpop.f32.mrb[0].mxu0
        %v1911 = vadd.f32 0.0, %v1910
        %v1912 = vpop.f32.mrb[0].mxu0
        %1913 = vmatprep.mubr.bf16.mxu0 %v1126
        %1914 = vmatmul.mubr.bf16.gmra.mrb[0].mxu0 %v1125
        %v1915 = vpop.f32.mrb[0].mxu0
        %v1916 = vadd.f32 0.0, %v1915
        %v1917 = vpop.f32.mrb[0].mxu0
        %v1918 = vpop.f32.mrb[0].mxu0
        %v1919 = vadd.f32 0.0, %v1918
        %v1920 = vpop.f32.mrb[0].mxu0
        %1921 = vmatprep.mubr.bf16.mxu0 %v1128
        %1922 = vmatmul.mubr.bf16.gmra.mrb[0].mxu0 %v1127
        %v1923 = vpop.f32.mrb[0].mxu0
        %v1924 = vadd.f32 0.0, %v1923
        %v1925 = vpop.f32.mrb[0].mxu0
        %v1926 = vpop.f32.mrb[0].mxu0
        %v1927 = vadd.f32 0.0, %v1926
        %v1928 = vpop.f32.mrb[0].mxu0
        %1929 = vmatprep.mubr.bf16.mxu0 %v1130
        %1930 = vmatmul.mubr.bf16.gmra.mrb[0].mxu0 %v1129
        %v1931 = vpop.f32.mrb[0].mxu0
        %v1932 = vadd.f32 0.0, %v1931
        %v1933 = vpop.f32.mrb[0].mxu0
        %v1934 = vpop.f32.mrb[0].mxu0
        %v1935 = vadd.f32 0.0, %v1934
        %v1936 = vpop.f32.mrb[0].mxu0
        %1937 = vmatprep.mubr.bf16.mxu0 %v1132
        %1938 = vmatmul.mubr.bf16.gmra.mrb[0].mxu0 %v1131
        %v1939 = vpop.f32.mrb[0].mxu0
        %v1940 = vadd.f32 0.0, %v1939
        %v1941 = vpop.f32.mrb[0].mxu0
        %v1942 = vpop.f32.mrb[0].mxu0
        %v1943 = vadd.f32 0.0, %v1942
        %v1944 = vpop.f32.mrb[0].mxu0
        %1945 = vmatprep.mubr.bf16.mxu0 %v1134
        %1946 = vmatmul.mubr.bf16.gmra.mrb[0].mxu0 %v1133
        %v1947 = vpop.f32.mrb[0].mxu0
        %v1948 = vadd.f32 0.0, %v1947
        %v1949 = vpop.f32.mrb[0].mxu0
        %v1950 = vpop.f32.mrb[0].mxu0
        %v1951 = vadd.f32 0.0, %v1950
        %v1952 = vpop.f32.mrb[0].mxu0
        %1953 = vmatprep.mubr.bf16.mxu0 %v1136
        %1954 = vmatmul.mubr.bf16.gmra.mrb[0].mxu0 %v1135
        %v1955 = vpop.f32.mrb[0].mxu0
        %v1956 = vadd.f32 0.0, %v1955
        %v1957 = vpop.f32.mrb[0].mxu0
        %v1958 = vpop.f32.mrb[0].mxu0
        %v1959 = vadd.f32 0.0, %v1958
        %v1960 = vpop.f32.mrb[0].mxu0
        %1961 = vmatprep.mubr.bf16.mxu0 %v1138
        %1962 = vmatmul.mubr.bf16.gmra.mrb[0].mxu0 %v1137
        %v1963 = vpop.f32.mrb[0].mxu0
        %v1964 = vadd.f32 0.0, %v1963
        %v1965 = vpop.f32.mrb[0].mxu0
        %v1966 = vpop.f32.mrb[0].mxu0
        %v1967 = vadd.f32 0.0, %v1966
        %v1968 = vpop.f32.mrb[0].mxu0
        %1969 = vmatprep.mubr.bf16.mxu0 %v1140
        %1970 = vmatmul.mubr.bf16.gmra.mrb[0].mxu0 %v1139
        %v1971 = vpop.f32.mrb[0].mxu0
        %v1972 = vadd.f32 0.0, %v1971
        %v1973 = vpop.f32.mrb[0].mxu0
        %v1974 = vpop.f32.mrb[0].mxu0
        %v1975 = vadd.f32 0.0, %v1974
        %v1976 = vpop.f32.mrb[0].mxu0
        %1977 = vmatprep.mubr.bf16.mxu0 %v1142
        %1978 = vmatmul.mubr.bf16.gmra.mrb[0].mxu0 %v1141
        %v1979 = vpop.f32.mrb[0].mxu0
        %v1980 = vadd.f32 0.0, %v1979
        %v1981 = vpop.f32.mrb[0].mxu0
        %v1982 = vpop.f32.mrb[0].mxu0
        %v1983 = vadd.f32 0.0, %v1982
        %v1984 = vpop.f32.mrb[0].mxu0
        %1985 = vmatprep.mubr.bf16.mxu0 %v1144
        %1986 = vmatmul.mubr.bf16.gmra.mrb[0].mxu0 %v1143
        %v1987 = vpop.f32.mrb[0].mxu0
        %v1988 = vadd.f32 0.0, %v1987
        %v1989 = vpop.f32.mrb[0].mxu0
        %v1990 = vpop.f32.mrb[0].mxu0
        %v1991 = vadd.f32 0.0, %v1990
        %v1992 = vpop.f32.mrb[0].mxu0
        %1993 = vmatprep.mubr.bf16.mxu0 %v1146
        %1994 = vmatmul.mubr.bf16.gmra.mrb[0].mxu0 %v1145
        %v1995 = vpop.f32.mrb[0].mxu0
        %v1996 = vadd.f32 0.0, %v1995
        %v1997 = vpop.f32.mrb[0].mxu0
        %v1998 = vpop.f32.mrb[0].mxu0
        %v1999 = vadd.f32 0.0, %v1998
        %v2000 = vpop.f32.mrb[0].mxu0
        %2001 = vmatprep.mubr.bf16.mxu0 %v1148
        %2002 = vmatmul.mubr.bf16.gmra.mrb[0].mxu0 %v1147
        %v2003 = vpop.f32.mrb[0].mxu0
        %v2004 = vadd.f32 0.0, %v2003
        %v2005 = vpop.f32.mrb[0].mxu0
        %v2006 = vpop.f32.mrb[0].mxu0
        %v2007 = vadd.f32 0.0, %v2006
        %v2008 = vpop.f32.mrb[0].mxu0
        %2009 = vmatprep.mubr.bf16.mxu0 %v1150
        %2010 = vmatmul.mubr.bf16.gmra.mrb[0].mxu0 %v1149
        %v2011 = vpop.f32.mrb[0].mxu0
        %v2012 = vadd.f32 0.0, %v2011
        %v2013 = vpop.f32.mrb[0].mxu0
        %v2014 = vpop.f32.mrb[0].mxu0
        %v2015 = vadd.f32 0.0, %v2014
        %v2016 = vpop.f32.mrb[0].mxu0
        %2017 = vmatprep.mubr.bf16.mxu0 %v1152
        %2018 = vmatmul.mubr.bf16.gmra.mrb[0].mxu0 %v1151
        %v2019 = vpop.f32.mrb[0].mxu0
        %v2020 = vadd.f32 0.0, %v2019
        %v2021 = vpop.f32.mrb[0].mxu0
        %v2022 = vpop.f32.mrb[0].mxu0
        %v2023 = vadd.f32 0.0, %v2022
        %v2024 = vpop.f32.mrb[0].mxu0
        %2025 = vmatprep.mubr.bf16.mxu0 %v1154
        %2026 = vmatmul.mubr.bf16.gmra.mrb[0].mxu0 %v1153
        %v2027 = vpop.f32.mrb[0].mxu0
        %v2028 = vadd.f32 0.0, %v2027
        %v2029 = vpop.f32.mrb[0].mxu0
        %v2030 = vpop.f32.mrb[0].mxu0
        %v2031 = vadd.f32 0.0, %v2030
        %v2032 = vpop.f32.mrb[0].mxu0
        %2033 = vmatprep.mubr.bf16.mxu0 %v1156
        %2034 = vmatmul.mubr.bf16.gmra.mrb[0].mxu0 %v1155
        %v2035 = vpop.f32.mrb[0].mxu0
        %v2036 = vadd.f32 0.0, %v2035
        %v2037 = vpop.f32.mrb[0].mxu0
        %v2038 = vpop.f32.mrb[0].mxu0
        %v2039 = vadd.f32 0.0, %v2038
        %v2040 = vpop.f32.mrb[0].mxu0
        %2041 = vmatprep.mubr.bf16.mxu0 %v1158
        %2042 = vmatmul.mubr.bf16.gmra.mrb[0].mxu0 %v1157
        %v2043 = vpop.f32.mrb[0].mxu0
        %v2044 = vadd.f32 0.0, %v2043
        %v2045 = vpop.f32.mrb[0].mxu0
        %v2046 = vpop.f32.mrb[0].mxu0
        %v2047 = vadd.f32 0.0, %v2046
        %v2048 = vpop.f32.mrb[0].mxu0
        %2049 = vmatprep.mubr.bf16.mxu0 %v1160
        %2050 = vmatmul.mubr.bf16.gmra.mrb[0].mxu0 %v1159
        %v2051 = vpop.f32.mrb[0].mxu0
        %v2052 = vadd.f32 0.0, %v2051
        %v2053 = vpop.f32.mrb[0].mxu0
        %v2054 = vpop.f32.mrb[0].mxu0
        %v2055 = vadd.f32 0.0, %v2054
        %v2056 = vpop.f32.mrb[0].mxu0
        %2057 = vmatprep.mubr.bf16.mxu0 %v1162
        %2058 = vmatmul.mubr.bf16.gmra.mrb[0].mxu0 %v1161
        %v2059 = vpop.f32.mrb[0].mxu0
        %v2060 = vadd.f32 0.0, %v2059
        %v2061 = vpop.f32.mrb[0].mxu0
        %v2062 = vpop.f32.mrb[0].mxu0
        %v2063 = vadd.f32 0.0, %v2062
        %v2064 = vpop.f32.mrb[0].mxu0
        %2065 = vmatprep.mubr.bf16.mxu0 %v1164
        %2066 = vmatmul.mubr.bf16.gmra.mrb[0].mxu0 %v1163
        %v2067 = vpop.f32.mrb[0].mxu0
        %v2068 = vadd.f32 0.0, %v2067
        %v2069 = vpop.f32.mrb[0].mxu0
        %v2070 = vpop.f32.mrb[0].mxu0
        %v2071 = vadd.f32 0.0, %v2070
        %v2072 = vpop.f32.mrb[0].mxu0
        %2073 = vmatprep.mubr.bf16.mxu0 %v1166
        %2074 = vmatmul.mubr.bf16.gmra.mrb[0].mxu0 %v1165
        %v2075 = vpop.f32.mrb[0].mxu0
        %v2076 = vadd.f32 0.0, %v2075
        %v2077 = vpop.f32.mrb[0].mxu0
        %v2078 = vpop.f32.mrb[0].mxu0
        %v2079 = vadd.f32 0.0, %v2078
        %v2080 = vpop.f32.mrb[0].mxu0
        %2081 = vmatprep.mubr.bf16.mxu0 %v1168
        %2082 = vmatmul.mubr.bf16.gmra.mrb[0].mxu0 %v1167
        %v2083 = vpop.f32.mrb[0].mxu0
        %v2084 = vadd.f32 0.0, %v2083
        %v2085 = vpop.f32.mrb[0].mxu0
        %v2086 = vpop.f32.mrb[0].mxu0
        %v2087 = vadd.f32 0.0, %v2086
        %v2088 = vpop.f32.mrb[0].mxu0
        %2089 = vmatprep.mubr.bf16.mxu0 %v1170
        %2090 = vmatmul.mubr.bf16.gmra.mrb[0].mxu0 %v1169
        %v2091 = vpop.f32.mrb[0].mxu0
        %v2092 = vadd.f32 0.0, %v2091
        %v2093 = vpop.f32.mrb[0].mxu0
        %v2094 = vpop.f32.mrb[0].mxu0
        %v2095 = vadd.f32 0.0, %v2094
        %v2096 = vpop.f32.mrb[0].mxu0
        %2097 = vmatprep.mubr.bf16.mxu0 %v1172
        %2098 = vmatmul.mubr.bf16.gmra.mrb[0].mxu0 %v1171
        %v2099 = vpop.f32.mrb[0].mxu0
        %v2100 = vadd.f32 0.0, %v2099
        %v2101 = vpop.f32.mrb[0].mxu0
        %v2102 = vpop.f32.mrb[0].mxu0
        %v2103 = vadd.f32 0.0, %v2102
        %v2104 = vpop.f32.mrb[0].mxu0
        %2105 = vmatprep.mubr.bf16.mxu0 %v1174
        %2106 = vmatmul.mubr.bf16.gmra.mrb[0].mxu0 %v1173
        %v2107 = vpop.f32.mrb[0].mxu0
        %v2108 = vadd.f32 0.0, %v2107
        %v2109 = vpop.f32.mrb[0].mxu0
        %v2110 = vpop.f32.mrb[0].mxu0
        %v2111 = vadd.f32 0.0, %v2110
        %v2112 = vpop.f32.mrb[0].mxu0
        %2113 = vmatprep.mubr.bf16.mxu0 %v1176
        %2114 = vmatmul.mubr.bf16.gmra.mrb[0].mxu0 %v1175
        %v2115 = vpop.f32.mrb[0].mxu0
        %v2116 = vadd.f32 0.0, %v2115
        %v2117 = vpop.f32.mrb[0].mxu0
        %v2118 = vpop.f32.mrb[0].mxu0
        %v2119 = vadd.f32 0.0, %v2118
        %v2120 = vpop.f32.mrb[0].mxu0
        %2121 = vmatprep.mubr.bf16.mxu0 %v1178
        %2122 = vmatmul.mubr.bf16.gmra.mrb[0].mxu0 %v1177
        %v2123 = vpop.f32.mrb[0].mxu0
        %v2124 = vadd.f32 0.0, %v2123
        %v2125 = vpop.f32.mrb[0].mxu0
        %v2126 = vpop.f32.mrb[0].mxu0
        %v2127 = vadd.f32 0.0, %v2126
        %v2128 = vpop.f32.mrb[0].mxu0
        %2129 = vmatprep.mubr.bf16.mxu0 %v1180
        %2130 = vmatmul.mubr.bf16.gmra.mrb[0].mxu0 %v1179
        %v2131 = vpop.f32.mrb[0].mxu0
        %v2132 = vadd.f32 0.0, %v2131
        %v2133 = vpop.f32.mrb[0].mxu0
        %v2134 = vpop.f32.mrb[0].mxu0
        %v2135 = vadd.f32 0.0, %v2134
        %v2136 = vpop.f32.mrb[0].mxu0
        %2137 = vmatprep.mubr.bf16.mxu0 %v1182
        %2138 = vmatmul.mubr.bf16.gmra.mrb[0].mxu0 %v1181
        %v2139 = vpop.f32.mrb[0].mxu0
        %v2140 = vadd.f32 0.0, %v2139
        %v2141 = vpop.f32.mrb[0].mxu0
        %v2142 = vpop.f32.mrb[0].mxu0
        %v2143 = vadd.f32 0.0, %v2142
        %v2144 = vpop.f32.mrb[0].mxu0
        %2145 = vmatprep.mubr.bf16.mxu0 %v1184
        %2146 = vmatmul.mubr.bf16.gmra.mrb[0].mxu0 %v1183
        %v2147 = vpop.f32.mrb[0].mxu0
        %v2148 = vadd.f32 0.0, %v2147
        %v2149 = vpop.f32.mrb[0].mxu0
        %v2150 = vpop.f32.mrb[0].mxu0
        %v2151 = vadd.f32 0.0, %v2150
        %v2152 = vpop.f32.mrb[0].mxu0
        %2153 = vmatprep.mubr.bf16.mxu0 %v1186
        %2154 = vmatmul.mubr.bf16.gmra.mrb[0].mxu0 %v1185
        %v2155 = vpop.f32.mrb[0].mxu0
        %v2156 = vadd.f32 0.0, %v2155
        %v2157 = vpop.f32.mrb[0].mxu0
        %v2158 = vpop.f32.mrb[0].mxu0
        %v2159 = vadd.f32 0.0, %v2158
        %v2160 = vpop.f32.mrb[0].mxu0
        %2161 = vmatprep.mubr.bf16.mxu0 %v1188
        %2162 = vmatmul.mubr.bf16.gmra.mrb[0].mxu0 %v1187
        %v2163 = vpop.f32.mrb[0].mxu0
        %v2164 = vadd.f32 0.0, %v2163
        %v2165 = vpop.f32.mrb[0].mxu0
        %v2166 = vpop.f32.mrb[0].mxu0
        %v2167 = vadd.f32 0.0, %v2166
        %v2168 = vpop.f32.mrb[0].mxu0
        %2169 = vmatprep.mubr.bf16.mxu0 %v1190
        %2170 = vmatmul.mubr.bf16.gmra.mrb[0].mxu0 %v1189
        %v2171 = vpop.f32.mrb[0].mxu0
        %v2172 = vadd.f32 0.0, %v2171
        %v2173 = vpop.f32.mrb[0].mxu0
        %v2174 = vpop.f32.mrb[0].mxu0
        %v2175 = vadd.f32 0.0, %v2174
        %v2176 = vpop.f32.mrb[0].mxu0
        %2177 = vmatprep.mubr.bf16.mxu0 %v1192
        %2178 = vmatmul.mubr.bf16.gmra.mrb[0].mxu0 %v1191
        %v2179 = vpop.f32.mrb[0].mxu0
        %v2180 = vadd.f32 0.0, %v2179
        %v2181 = vpop.f32.mrb[0].mxu0
        %v2182 = vpop.f32.mrb[0].mxu0
        %v2183 = vadd.f32 0.0, %v2182
        %v2184 = vpop.f32.mrb[0].mxu0
        %2185 = vmatprep.mubr.bf16.mxu0 %v1194
        %2186 = vmatmul.mubr.bf16.gmra.mrb[0].mxu0 %v1193
        %v2187 = vpop.f32.mrb[0].mxu0
        %v2188 = vadd.f32 0.0, %v2187
        %v2189 = vpop.f32.mrb[0].mxu0
        %v2190 = vpop.f32.mrb[0].mxu0
        %v2191 = vadd.f32 0.0, %v2190
        %v2192 = vpop.f32.mrb[0].mxu0
        %2193 = vmatprep.mubr.bf16.mxu0 %v1196
        %2194 = vmatmul.mubr.bf16.gmra.mrb[0].mxu0 %v1195
        %v2195 = vpop.f32.mrb[0].mxu0
        %v2196 = vadd.f32 0.0, %v2195
        %v2197 = vpop.f32.mrb[0].mxu0
        %v2198 = vpop.f32.mrb[0].mxu0
        %v2199 = vadd.f32 0.0, %v2198
        %v2200 = vpop.f32.mrb[0].mxu0
        %2201 = vmatprep.mubr.bf16.mxu0 %v1198
        %2202 = vmatmul.mubr.bf16.gmra.mrb[0].mxu0 %v1197
        %v2203 = vpop.f32.mrb[0].mxu0
        %v2204 = vadd.f32 0.0, %v2203
        %v2205 = vpop.f32.mrb[0].mxu0
        %v2206 = vpop.f32.mrb[0].mxu0
        %v2207 = vadd.f32 0.0, %v2206
        %v2208 = vpop.f32.mrb[0].mxu0
        %2209 = vmatprep.mubr.bf16.mxu0 %v1200
        %2210 = vmatmul.mubr.bf16.gmra.mrb[0].mxu0 %v1199
        %v2211 = vpop.f32.mrb[0].mxu0
        %v2212 = vadd.f32 0.0, %v2211
        %v2213 = vpop.f32.mrb[0].mxu0
        %v2214 = vpop.f32.mrb[0].mxu0
        %v2215 = vadd.f32 0.0, %v2214
        %v2216 = vpop.f32.mrb[0].mxu0
        %2217 = vmatprep.mubr.bf16.mxu0 %v1202
        %2218 = vmatmul.mubr.bf16.gmra.mrb[0].mxu0 %v1201
        %v2219 = vpop.f32.mrb[0].mxu0
        %v2220 = vadd.f32 0.0, %v2219
        %v2221 = vpop.f32.mrb[0].mxu0
        %v2222 = vpop.f32.mrb[0].mxu0
        %v2223 = vadd.f32 0.0, %v2222
        %v2224 = vpop.f32.mrb[0].mxu0
        %2225 = vmatprep.mubr.bf16.mxu0 %v1204
        %2226 = vmatmul.mubr.bf16.gmra.mrb[0].mxu0 %v1203
        %v2227 = vpop.f32.mrb[0].mxu0
        %v2228 = vadd.f32 0.0, %v2227
        %v2229 = vpop.f32.mrb[0].mxu0
        %v2230 = vpop.f32.mrb[0].mxu0
        %v2231 = vadd.f32 0.0, %v2230
        %v2232 = vpop.f32.mrb[0].mxu0
        %2233 = vmatprep.mubr.bf16.mxu0 %v1206
        %2234 = vmatmul.mubr.bf16.gmra.mrb[0].mxu0 %v1205
        %v2235 = vpop.f32.mrb[0].mxu0
        %v2236 = vadd.f32 0.0, %v2235
        %v2237 = vpop.f32.mrb[0].mxu0
        %v2238 = vpop.f32.mrb[0].mxu0
        %v2239 = vadd.f32 0.0, %v2238
        %v2240 = vpop.f32.mrb[0].mxu0
        %2241 = vmatprep.mubr.bf16.mxu0 %v1208
        %2242 = vmatmul.mubr.bf16.gmra.mrb[0].mxu0 %v1207
        %v2243 = vpop.f32.mrb[0].mxu0
        %v2244 = vadd.f32 0.0, %v2243
        %v2245 = vpop.f32.mrb[0].mxu0
        %v2246 = vpop.f32.mrb[0].mxu0
        %v2247 = vadd.f32 0.0, %v2246
        %v2248 = vpop.f32.mrb[0].mxu0
        %2249 = vmatprep.mubr.bf16.mxu0 %v1210
        %2250 = vmatmul.mubr.bf16.gmra.mrb[0].mxu0 %v1209
        %v2251 = vpop.f32.mrb[0].mxu0
        %v2252 = vadd.f32 0.0, %v2251
        %v2253 = vpop.f32.mrb[0].mxu0
        %v2254 = vpop.f32.mrb[0].mxu0
        %v2255 = vadd.f32 0.0, %v2254
        %v2256 = vpop.f32.mrb[0].mxu0
        %2257 = vmatprep.mubr.bf16.mxu0 %v1212
        %2258 = vmatmul.mubr.bf16.gmra.mrb[0].mxu0 %v1211
        %v2259 = vpop.f32.mrb[0].mxu0
        %v2260 = vadd.f32 0.0, %v2259
        %v2261 = vpop.f32.mrb[0].mxu0
        %v2262 = vpop.f32.mrb[0].mxu0
        %v2263 = vadd.f32 0.0, %v2262
        %v2264 = vpop.f32.mrb[0].mxu0
        %2265 = vmatprep.mubr.bf16.mxu0 %v1214
        %2266 = vmatmul.mubr.bf16.gmra.mrb[0].mxu0 %v1213
        %v2267 = vpop.f32.mrb[0].mxu0
        %v2268 = vadd.f32 0.0, %v2267
        %v2269 = vpop.f32.mrb[0].mxu0
        %v2270 = vpop.f32.mrb[0].mxu0
        %v2271 = vadd.f32 0.0, %v2270
        %v2272 = vpop.f32.mrb[0].mxu0
        %2273 = vmatprep.mubr.bf16.mxu0 %v1216
        %2274 = vmatmul.mubr.bf16.gmra.mrb[0].mxu0 %v1215
        %v2275 = vpop.f32.mrb[0].mxu0
        %v2276 = vadd.f32 0.0, %v2275
        %v2277 = vpop.f32.mrb[0].mxu0
        %v2278 = vpop.f32.mrb[0].mxu0
        %v2279 = vadd.f32 0.0, %v2278
        %v2280 = vpop.f32.mrb[0].mxu0
        %2281 = vmatprep.mubr.bf16.mxu0 %v1218
        %2282 = vmatmul.mubr.bf16.gmra.mrb[0].mxu0 %v1217
        %v2283 = vpop.f32.mrb[0].mxu0
        %v2284 = vadd.f32 0.0, %v2283
        %v2285 = vpop.f32.mrb[0].mxu0
        %v2286 = vpop.f32.mrb[0].mxu0
        %v2287 = vadd.f32 0.0, %v2286
        %v2288 = vpop.f32.mrb[0].mxu0
        %2289 = vmatprep.mubr.bf16.mxu0 %v1220
        %2290 = vmatmul.mubr.bf16.gmra.mrb[0].mxu0 %v1219
        %v2291 = vpop.f32.mrb[0].mxu0
        %v2292 = vadd.f32 0.0, %v2291
        %v2293 = vpop.f32.mrb[0].mxu0
        %v2294 = vpop.f32.mrb[0].mxu0
        %v2295 = vadd.f32 0.0, %v2294
        %v2296 = vpop.f32.mrb[0].mxu0
        %2297 = vmatprep.mubr.bf16.mxu0 %v1222
        %2298 = vmatmul.mubr.bf16.gmra.mrb[0].mxu0 %v1221
        %v2299 = vpop.f32.mrb[0].mxu0
        %v2300 = vadd.f32 0.0, %v2299
        %v2301 = vpop.f32.mrb[0].mxu0
        %v2302 = vpop.f32.mrb[0].mxu0
        %v2303 = vadd.f32 0.0, %v2302
        %v2304 = vpop.f32.mrb[0].mxu0
        %2305 = vmatprep.mubr.bf16.mxu0 %v1224
        %2306 = vmatmul.mubr.bf16.gmra.mrb[0].mxu0 %v1223
        %v2307 = vpop.f32.mrb[0].mxu0
        %v2308 = vadd.f32 0.0, %v2307
        %v2309 = vpop.f32.mrb[0].mxu0
        %v2310 = vpop.f32.mrb[0].mxu0
        %v2311 = vadd.f32 0.0, %v2310
        %v2312 = vpop.f32.mrb[0].mxu0
        %2313 = vmatprep.mubr.bf16.mxu0 %v1226
        %2314 = vmatmul.mubr.bf16.gmra.mrb[0].mxu0 %v1225
        %v2315 = vpop.f32.mrb[0].mxu0
        %v2316 = vadd.f32 0.0, %v2315
        %v2317 = vpop.f32.mrb[0].mxu0
        %v2318 = vpop.f32.mrb[0].mxu0
        %v2319 = vadd.f32 0.0, %v2318
        %v2320 = vpop.f32.mrb[0].mxu0
        %2321 = vmatprep.mubr.bf16.mxu0 %v1228
        %2322 = vmatmul.mubr.bf16.gmra.mrb[0].mxu0 %v1227
        %v2323 = vpop.f32.mrb[0].mxu0
        %v2324 = vadd.f32 0.0, %v2323
        %v2325 = vpop.f32.mrb[0].mxu0
        %v2326 = vpop.f32.mrb[0].mxu0
        %v2327 = vadd.f32 0.0, %v2326
        %v2328 = vpop.f32.mrb[0].mxu0
        %2329 = vmatprep.mubr.bf16.mxu0 %v1230
        %2330 = vmatmul.mubr.bf16.gmra.mrb[0].mxu0 %v1229
        %v2331 = vpop.f32.mrb[0].mxu0
        %v2332 = vadd.f32 0.0, %v2331
        %v2333 = vpop.f32.mrb[0].mxu0
        %v2334 = vpop.f32.mrb[0].mxu0
        %v2335 = vadd.f32 0.0, %v2334
        %v2336 = vpop.f32.mrb[0].mxu0
        %2337 = vmatprep.mubr.bf16.mxu0 %v1232
        %2338 = vmatmul.mubr.bf16.gmra.mrb[0].mxu0 %v1231
        %v2339 = vpop.f32.mrb[0].mxu0
        %v2340 = vadd.f32 0.0, %v2339
        %v2341 = vpop.f32.mrb[0].mxu0
        %v2342 = vpop.f32.mrb[0].mxu0
        %v2343 = vadd.f32 0.0, %v2342
        %v2344 = vpop.f32.mrb[0].mxu0
        %2345 = vmatprep.mubr.bf16.mxu0 %v1234
        %2346 = vmatmul.mubr.bf16.gmra.mrb[0].mxu0 %v1233
        %v2347 = vpop.f32.mrb[0].mxu0
        %v2348 = vadd.f32 0.0, %v2347
        %v2349 = vpop.f32.mrb[0].mxu0
        %v2350 = vpop.f32.mrb[0].mxu0
        %v2351 = vadd.f32 0.0, %v2350
        %v2352 = vpop.f32.mrb[0].mxu0
        %2353 = vmatprep.mubr.bf16.mxu0 %v1236
        %2354 = vmatmul.mubr.bf16.gmra.mrb[0].mxu0 %v1235
        %v2355 = vpop.f32.mrb[0].mxu0
        %v2356 = vadd.f32 0.0, %v2355
        %v2357 = vpop.f32.mrb[0].mxu0
        %v2358 = vpop.f32.mrb[0].mxu0
        %v2359 = vadd.f32 0.0, %v2358
        %v2360 = vpop.f32.mrb[0].mxu0
        %2361 = vmatprep.mubr.bf16.mxu0 %v1238
        %2362 = vmatmul.mubr.bf16.gmra.mrb[0].mxu0 %v1237
        %v2363 = vpop.f32.mrb[0].mxu0
        %v2364 = vadd.f32 0.0, %v2363
        %v2365 = vpop.f32.mrb[0].mxu0
        %v2366 = vpop.f32.mrb[0].mxu0
        %v2367 = vadd.f32 0.0, %v2366
        %v2368 = vpop.f32.mrb[0].mxu0
        %2369 = vmatprep.mubr.bf16.mxu0 %v1240
        %2370 = vmatmul.mubr.bf16.gmra.mrb[0].mxu0 %v1239
        %v2371 = vpop.f32.mrb[0].mxu0
        %v2372 = vadd.f32 0.0, %v2371
        %v2373 = vpop.f32.mrb[0].mxu0
        %v2374 = vpop.f32.mrb[0].mxu0
        %v2375 = vadd.f32 0.0, %v2374
        %v2376 = vpop.f32.mrb[0].mxu0
        %2377 = vmatprep.mubr.bf16.mxu0 %v1242
        %2378 = vmatmul.mubr.bf16.gmra.mrb[0].mxu0 %v1241
        %v2379 = vpop.f32.mrb[0].mxu0
        %v2380 = vadd.f32 0.0, %v2379
        %v2381 = vpop.f32.mrb[0].mxu0
        %v2382 = vpop.f32.mrb[0].mxu0
        %v2383 = vadd.f32 0.0, %v2382
        %v2384 = vpop.f32.mrb[0].mxu0
        %2385 = vmatprep.mubr.bf16.mxu0 %v1244
        %2386 = vmatmul.mubr.bf16.gmra.mrb[0].mxu0 %v1243
        %v2387 = vpop.f32.mrb[0].mxu0
        %v2388 = vadd.f32 0.0, %v2387
        %v2389 = vpop.f32.mrb[0].mxu0
        %v2390 = vpop.f32.mrb[0].mxu0
        %v2391 = vadd.f32 0.0, %v2390
        %v2392 = vpop.f32.mrb[0].mxu0
        %2393 = vmatprep.mubr.bf16.mxu0 %v1246
        %2394 = vmatmul.mubr.bf16.gmra.mrb[0].mxu0 %v1245
        %v2395 = vpop.f32.mrb[0].mxu0
        %v2396 = vadd.f32 0.0, %v2395
        %v2397 = vpop.f32.mrb[0].mxu0
        %v2398 = vpop.f32.mrb[0].mxu0
        %v2399 = vadd.f32 0.0, %v2398
        %v2400 = vpop.f32.mrb[0].mxu0
        %2401 = vmatprep.mubr.bf16.mxu0 %v1248
        %2402 = vmatmul.mubr.bf16.gmra.mrb[0].mxu0 %v1247
        %v2403 = vpop.f32.mrb[0].mxu0
        %v2404 = vadd.f32 0.0, %v2403
        %v2405 = vpop.f32.mrb[0].mxu0
        %v2406 = vpop.f32.mrb[0].mxu0
        %v2407 = vadd.f32 0.0, %v2406
        %v2408 = vpop.f32.mrb[0].mxu0
        %2409 = vmatprep.mubr.bf16.mxu0 %v1250
        %2410 = vmatmul.mubr.bf16.gmra.mrb[0].mxu0 %v1249
        %v2411 = vpop.f32.mrb[0].mxu0
        %v2412 = vadd.f32 0.0, %v2411
        %v2413 = vpop.f32.mrb[0].mxu0
        %v2414 = vpop.f32.mrb[0].mxu0
        %v2415 = vadd.f32 0.0, %v2414
        %v2416 = vpop.f32.mrb[0].mxu0
        %2417 = vmatprep.mubr.bf16.mxu0 %v1252
        %2418 = vmatmul.mubr.bf16.gmra.mrb[0].mxu0 %v1251
        %v2419 = vpop.f32.mrb[0].mxu0
        %v2420 = vadd.f32 0.0, %v2419
        %v2421 = vpop.f32.mrb[0].mxu0
        %v2422 = vpop.f32.mrb[0].mxu0
        %v2423 = vadd.f32 0.0, %v2422
        %v2424 = vpop.f32.mrb[0].mxu0
        %2425 = vmatprep.mubr.bf16.mxu0 %v1254
        %2426 = vmatmul.mubr.bf16.gmra.mrb[0].mxu0 %v1253
        %v2427 = vpop.f32.mrb[0].mxu0
        %v2428 = vadd.f32 0.0, %v2427
        %v2429 = vpop.f32.mrb[0].mxu0
        %v2430 = vpop.f32.mrb[0].mxu0
        %v2431 = vadd.f32 0.0, %v2430
        %v2432 = vpop.f32.mrb[0].mxu0
        %2433 = vmatprep.mubr.bf16.mxu0 %v1256
        %2434 = vmatmul.mubr.bf16.gmra.mrb[0].mxu0 %v1255
        %v2435 = vpop.f32.mrb[0].mxu0
        %v2436 = vadd.f32 0.0, %v2435
        %v2437 = vpop.f32.mrb[0].mxu0
        %v2438 = vpop.f32.mrb[0].mxu0
        %v2439 = vadd.f32 0.0, %v2438
        %v2440 = vpop.f32.mrb[0].mxu0
        %2441 = vdwg.mxu0
        %v2442 = vpack.c.bf16 %v1423, %v1420
        %v2443 = vpack.c.bf16 %v1431, %v1428
        %v2444 = vpack.c.bf16 %v1439, %v1436
        %v2445 = vpack.c.bf16 %v1447, %v1444
        %v2446 = vpack.c.bf16 %v1455, %v1452
        %v2447 = vpack.c.bf16 %v1463, %v1460
        %v2448 = vpack.c.bf16 %v1471, %v1468
        %v2449 = vpack.c.bf16 %v1479, %v1476
        %v2450 = vpack.c.bf16 %v1487, %v1484
        %v2451 = vpack.c.bf16 %v1495, %v1492
        %v2452 = vpack.c.bf16 %v1503, %v1500
        %v2453 = vpack.c.bf16 %v1511, %v1508
        %v2454 = vpack.c.bf16 %v1519, %v1516
        %v2455 = vpack.c.bf16 %v1527, %v1524
        %v2456 = vpack.c.bf16 %v1535, %v1532
        %v2457 = vpack.c.bf16 %v1543, %v1540
        %v2458 = vpack.c.bf16 %v1551, %v1548
        %v2459 = vpack.c.bf16 %v1559, %v1556
        %v2460 = vpack.c.bf16 %v1567, %v1564
        %v2461 = vpack.c.bf16 %v1575, %v1572
        %v2462 = vpack.c.bf16 %v1583, %v1580
        %v2463 = vpack.c.bf16 %v1591, %v1588
        %v2464 = vpack.c.bf16 %v1599, %v1596
        %v2465 = vpack.c.bf16 %v1607, %v1604
        %v2466 = vpack.c.bf16 %v1615, %v1612
        %v2467 = vpack.c.bf16 %v1623, %v1620
        %v2468 = vpack.c.bf16 %v1631, %v1628
        %v2469 = vpack.c.bf16 %v1639, %v1636
        %v2470 = vpack.c.bf16 %v1647, %v1644
        %v2471 = vpack.c.bf16 %v1655, %v1652
        %v2472 = vpack.c.bf16 %v1663, %v1660
        %v2473 = vpack.c.bf16 %v1671, %v1668
        %v2474 = vpack.c.bf16 %v1679, %v1676
        %v2475 = vpack.c.bf16 %v1687, %v1684
        %v2476 = vpack.c.bf16 %v1695, %v1692
        %v2477 = vpack.c.bf16 %v1703, %v1700
        %v2478 = vpack.c.bf16 %v1711, %v1708
        %v2479 = vpack.c.bf16 %v1719, %v1716
        %v2480 = vpack.c.bf16 %v1727, %v1724
        %v2481 = vpack.c.bf16 %v1735, %v1732
        %v2482 = vpack.c.bf16 %v1743, %v1740
        %v2483 = vpack.c.bf16 %v1751, %v1748
        %v2484 = vpack.c.bf16 %v1759, %v1756
        %v2485 = vpack.c.bf16 %v1767, %v1764
        %v2486 = vpack.c.bf16 %v1775, %v1772
        %v2487 = vpack.c.bf16 %v1783, %v1780
        %v2488 = vpack.c.bf16 %v1791, %v1788
        %v2489 = vpack.c.bf16 %v1799, %v1796
        %v2490 = vpack.c.bf16 %v1807, %v1804
        %v2491 = vpack.c.bf16 %v1815, %v1812
        %v2492 = vpack.c.bf16 %v1823, %v1820
        %v2493 = vpack.c.bf16 %v1831, %v1828
        %v2494 = vpack.c.bf16 %v1839, %v1836
        %v2495 = vpack.c.bf16 %v1847, %v1844
        %v2496 = vpack.c.bf16 %v1855, %v1852
        %v2497 = vpack.c.bf16 %v1863, %v1860
        %v2498 = vpack.c.bf16 %v1871, %v1868
        %v2499 = vpack.c.bf16 %v1879, %v1876
        %v2500 = vpack.c.bf16 %v1887, %v1884
        %v2501 = vpack.c.bf16 %v1895, %v1892
        %v2502 = vpack.c.bf16 %v1903, %v1900
        %v2503 = vpack.c.bf16 %v1911, %v1908
        %v2504 = vpack.c.bf16 %v1919, %v1916
        %v2505 = vpack.c.bf16 %v1927, %v1924
        %v2506 = vpack.c.bf16 %v1935, %v1932
        %v2507 = vpack.c.bf16 %v1943, %v1940
        %v2508 = vpack.c.bf16 %v1951, %v1948
        %v2509 = vpack.c.bf16 %v1959, %v1956
        %v2510 = vpack.c.bf16 %v1967, %v1964
        %v2511 = vpack.c.bf16 %v1975, %v1972
        %v2512 = vpack.c.bf16 %v1983, %v1980
        %v2513 = vpack.c.bf16 %v1991, %v1988
        %v2514 = vpack.c.bf16 %v1999, %v1996
        %v2515 = vpack.c.bf16 %v2007, %v2004
        %v2516 = vpack.c.bf16 %v2015, %v2012
        %v2517 = vpack.c.bf16 %v2023, %v2020
        %v2518 = vpack.c.bf16 %v2031, %v2028
        %v2519 = vpack.c.bf16 %v2039, %v2036
        %v2520 = vpack.c.bf16 %v2047, %v2044
        %v2521 = vpack.c.bf16 %v2055, %v2052
        %v2522 = vpack.c.bf16 %v2063, %v2060
        %v2523 = vpack.c.bf16 %v2071, %v2068
        %v2524 = vpack.c.bf16 %v2079, %v2076
        %v2525 = vpack.c.bf16 %v2087, %v2084
        %v2526 = vpack.c.bf16 %v2095, %v2092
        %v2527 = vpack.c.bf16 %v2103, %v2100
        %v2528 = vpack.c.bf16 %v2111, %v2108
        %v2529 = vpack.c.bf16 %v2119, %v2116
        %v2530 = vpack.c.bf16 %v2127, %v2124
        %v2531 = vpack.c.bf16 %v2135, %v2132
        %v2532 = vpack.c.bf16 %v2143, %v2140
        %v2533 = vpack.c.bf16 %v2151, %v2148
        %v2534 = vpack.c.bf16 %v2159, %v2156
        %v2535 = vpack.c.bf16 %v2167, %v2164
        %v2536 = vpack.c.bf16 %v2175, %v2172
        %v2537 = vpack.c.bf16 %v2183, %v2180
        %v2538 = vpack.c.bf16 %v2191, %v2188
        %v2539 = vpack.c.bf16 %v2199, %v2196
        %v2540 = vpack.c.bf16 %v2207, %v2204
        %v2541 = vpack.c.bf16 %v2215, %v2212
        %v2542 = vpack.c.bf16 %v2223, %v2220
        %v2543 = vpack.c.bf16 %v2231, %v2228
        %v2544 = vpack.c.bf16 %v2239, %v2236
        %v2545 = vpack.c.bf16 %v2247, %v2244
        %v2546 = vpack.c.bf16 %v2255, %v2252
        %v2547 = vpack.c.bf16 %v2263, %v2260
        %v2548 = vpack.c.bf16 %v2271, %v2268
        %v2549 = vpack.c.bf16 %v2279, %v2276
        %v2550 = vpack.c.bf16 %v2287, %v2284
        %v2551 = vpack.c.bf16 %v2295, %v2292
        %v2552 = vpack.c.bf16 %v2303, %v2300
        %v2553 = vpack.c.bf16 %v2311, %v2308
        %v2554 = vpack.c.bf16 %v2319, %v2316
        %v2555 = vpack.c.bf16 %v2327, %v2324
        %v2556 = vpack.c.bf16 %v2335, %v2332
        %v2557 = vpack.c.bf16 %v2343, %v2340
        %v2558 = vpack.c.bf16 %v2351, %v2348
        %v2559 = vpack.c.bf16 %v2359, %v2356
        %v2560 = vpack.c.bf16 %v2367, %v2364
        %v2561 = vpack.c.bf16 %v2375, %v2372
        %v2562 = vpack.c.bf16 %v2383, %v2380
        %v2563 = vpack.c.bf16 %v2391, %v2388
        %v2564 = vpack.c.bf16 %v2399, %v2396
        %v2565 = vpack.c.bf16 %v2407, %v2404
        %v2566 = vpack.c.bf16 %v2415, %v2412
        %v2567 = vpack.c.bf16 %v2423, %v2420
        %v2568 = vpack.c.bf16 %v2431, %v2428
        %v2569 = vpack.c.bf16 %v2439, %v2436
        %v2570 = vld [vmem:[#allocation5] sm:$0xff]
        %v2571 = vld [vmem:[#allocation5 + $0x8] sm:$0xff]
        %v2572 = vld [vmem:[#allocation5 + $0x10] sm:$0xff]
        %v2573 = vld [vmem:[#allocation5 + $0x18] sm:$0xff]
        %v2574 = vld [vmem:[#allocation5 + $0x20] sm:$0xff]
        %v2575 = vld [vmem:[#allocation5 + $0x28] sm:$0xff]
        %v2576 = vld [vmem:[#allocation5 + $0x30] sm:$0xff]
        %v2577 = vld [vmem:[#allocation5 + $0x38] sm:$0xff]
        %v2586 = vunpack.c.l.b16 %v2570
        %v2587 = vunpack.c.h.b16 %v2570
        %v2588 = vunpack.c.l.b16 %v2571
        %v2589 = vunpack.c.h.b16 %v2571
        %v2590 = vunpack.c.l.b16 %v2572
        %v2591 = vunpack.c.h.b16 %v2572
        %v2592 = vunpack.c.l.b16 %v2573
        %v2593 = vunpack.c.h.b16 %v2573
        %v2594 = vunpack.c.l.b16 %v2574
        %v2595 = vunpack.c.h.b16 %v2574
        %v2596 = vunpack.c.l.b16 %v2575
        %v2597 = vunpack.c.h.b16 %v2575
        %v2598 = vunpack.c.l.b16 %v2576
        %v2599 = vunpack.c.h.b16 %v2576
        %v2600 = vunpack.c.l.b16 %v2577
        %v2601 = vunpack.c.h.b16 %v2577
        %v2602 = vpack.c.b16 %v2588, %v2586
        %v2603 = vpack.c.b16 %v2589, %v2587
        %v2604 = vpack.c.b16 %v2592, %v2590
        %v2605 = vpack.c.b16 %v2593, %v2591
        %v2606 = vpack.c.b16 %v2596, %v2594
        %v2607 = vpack.c.b16 %v2597, %v2595
        %v2608 = vpack.c.b16 %v2600, %v2598
        %v2609 = vpack.c.b16 %v2601, %v2599
        %2618 = vmatprep.subr.bf16.mxu0 0
        %2619 = vmatpush1.bf16.msra.mxu0 %v2442
        %2620 = vmatprep.subr.bf16.mxu0 0
        %2621 = vmatpush1.bf16.msra.mxu0 %v2443
        %2622 = vmatprep.subr.bf16.mxu0 0
        %2623 = vmatpush1.bf16.msra.mxu0 %v2444
        %2624 = vmatprep.subr.bf16.mxu0 0
        %2625 = vmatpush1.bf16.msra.mxu0 %v2445
        %2626 = vmatprep.subr.bf16.mxu0 0
        %2627 = vmatpush1.bf16.msra.mxu0 %v2446
        %2628 = vmatprep.subr.bf16.mxu0 0
        %2629 = vmatpush1.bf16.msra.mxu0 %v2447
        %2630 = vmatprep.subr.bf16.mxu0 0
        %2631 = vmatpush1.bf16.msra.mxu0 %v2448
        %2632 = vmatprep.subr.bf16.mxu0 0
        %2633 = vmatpush1.bf16.msra.mxu0 %v2449
        %2634 = vmatprep.subr.bf16.mxu0 0
        %2635 = vmatpush1.bf16.msra.mxu0 %v2450
        %2636 = vmatprep.subr.bf16.mxu0 0
        %2637 = vmatpush1.bf16.msra.mxu0 %v2451
        %2638 = vmatprep.subr.bf16.mxu0 0
        %2639 = vmatpush1.bf16.msra.mxu0 %v2452
        %2640 = vmatprep.subr.bf16.mxu0 0
        %2641 = vmatpush1.bf16.msra.mxu0 %v2453
        %2642 = vmatprep.subr.bf16.mxu0 0
        %2643 = vmatpush1.bf16.msra.mxu0 %v2454
        %2644 = vmatprep.subr.bf16.mxu0 0
        %2645 = vmatpush1.bf16.msra.mxu0 %v2455
        %2646 = vmatprep.subr.bf16.mxu0 0
        %2647 = vmatpush1.bf16.msra.mxu0 %v2456
        %2648 = vmatprep.subr.bf16.mxu0 0
        %2649 = vmatpush1.bf16.msra.mxu0 %v2457
        %2650 = vmatprep.mubr.bf16.mxu0 %v2603
        %2651 = vmatmul.mubr.bf16.gmra.mrb[0].mxu0 %v2602
        %v2652 = vpop.f32.mrb[0].mxu0
        %v2653 = vadd.f32 0.0, %v2652
        %v2654 = vpop.f32.mrb[0].mxu0
        %v2655 = vpop.f32.mrb[0].mxu0
        %v2656 = vadd.f32 0.0, %v2655
        %v2657 = vpop.f32.mrb[0].mxu0
        %2658 = vmatprep.mubr.bf16.mxu0 %v2605
        %2659 = vmatmul.mubr.bf16.gmra.mrb[0].mxu0 %v2604
        %v2660 = vpop.f32.mrb[0].mxu0
        %v2661 = vadd.f32 0.0, %v2660
        %v2662 = vpop.f32.mrb[0].mxu0
        %v2663 = vpop.f32.mrb[0].mxu0
        %v2664 = vadd.f32 0.0, %v2663
        %v2665 = vpop.f32.mrb[0].mxu0
        %2666 = vmatprep.mubr.bf16.mxu0 %v2607
        %2667 = vmatmul.mubr.bf16.gmra.mrb[0].mxu0 %v2606
        %v2668 = vpop.f32.mrb[0].mxu0
        %v2669 = vadd.f32 0.0, %v2668
        %v2670 = vpop.f32.mrb[0].mxu0
        %v2671 = vpop.f32.mrb[0].mxu0
        %v2672 = vadd.f32 0.0, %v2671
        %v2673 = vpop.f32.mrb[0].mxu0
        %2674 = vmatprep.mubr.bf16.mxu0 %v2609
        %2675 = vmatmul.mubr.bf16.gmra.mrb[0].mxu0 %v2608
        %v2676 = vpop.f32.mrb[0].mxu0
        %v2677 = vadd.f32 0.0, %v2676
        %v2678 = vpop.f32.mrb[0].mxu0
        %v2679 = vpop.f32.mrb[0].mxu0
        %v2680 = vadd.f32 0.0, %v2679
        %v2681 = vpop.f32.mrb[0].mxu0
        %2682 = vdwg.mxu0
        %2683 = vmatprep.subr.bf16.mxu0 0
        %2684 = vmatpush1.bf16.msra.mxu0 %v2458
        %2685 = vmatprep.subr.bf16.mxu0 0
        %2686 = vmatpush1.bf16.msra.mxu0 %v2459
        %2687 = vmatprep.subr.bf16.mxu0 0
        %2688 = vmatpush1.bf16.msra.mxu0 %v2460
        %2689 = vmatprep.subr.bf16.mxu0 0
        %2690 = vmatpush1.bf16.msra.mxu0 %v2461
        %2691 = vmatprep.subr.bf16.mxu0 0
        %2692 = vmatpush1.bf16.msra.mxu0 %v2462
        %2693 = vmatprep.subr.bf16.mxu0 0
        %2694 = vmatpush1.bf16.msra.mxu0 %v2463
        %2695 = vmatprep.subr.bf16.mxu0 0
        %2696 = vmatpush1.bf16.msra.mxu0 %v2464
        %2697 = vmatprep.subr.bf16.mxu0 0
        %2698 = vmatpush1.bf16.msra.mxu0 %v2465
        %2699 = vmatprep.subr.bf16.mxu0 0
        %2700 = vmatpush1.bf16.msra.mxu0 %v2466
        %2701 = vmatprep.subr.bf16.mxu0 0
        %2702 = vmatpush1.bf16.msra.mxu0 %v2467
        %2703 = vmatprep.subr.bf16.mxu0 0
        %2704 = vmatpush1.bf16.msra.mxu0 %v2468
        %2705 = vmatprep.subr.bf16.mxu0 0
        %2706 = vmatpush1.bf16.msra.mxu0 %v2469
        %2707 = vmatprep.subr.bf16.mxu0 0
        %2708 = vmatpush1.bf16.msra.mxu0 %v2470
        %2709 = vmatprep.subr.bf16.mxu0 0
        %2710 = vmatpush1.bf16.msra.mxu0 %v2471
        %2711 = vmatprep.subr.bf16.mxu0 0
        %2712 = vmatpush1.bf16.msra.mxu0 %v2472
        %2713 = vmatprep.subr.bf16.mxu0 0
        %2714 = vmatpush1.bf16.msra.mxu0 %v2473
        %2715 = vmatprep.mubr.bf16.mxu0 %v2603
        %2716 = vmatmul.mubr.bf16.gmra.mrb[0].mxu0 %v2602
        %v2717 = vpop.f32.mrb[0].mxu0
        %v2718 = vadd.f32 0.0, %v2717
        %v2719 = vpop.f32.mrb[0].mxu0
        %v2720 = vpop.f32.mrb[0].mxu0
        %v2721 = vadd.f32 0.0, %v2720
        %v2722 = vpop.f32.mrb[0].mxu0
        %2723 = vmatprep.mubr.bf16.mxu0 %v2605
        %2724 = vmatmul.mubr.bf16.gmra.mrb[0].mxu0 %v2604
        %v2725 = vpop.f32.mrb[0].mxu0
        %v2726 = vadd.f32 0.0, %v2725
        %v2727 = vpop.f32.mrb[0].mxu0
        %v2728 = vpop.f32.mrb[0].mxu0
        %v2729 = vadd.f32 0.0, %v2728
        %v2730 = vpop.f32.mrb[0].mxu0
        %2731 = vmatprep.mubr.bf16.mxu0 %v2607
        %2732 = vmatmul.mubr.bf16.gmra.mrb[0].mxu0 %v2606
        %v2733 = vpop.f32.mrb[0].mxu0
        %v2734 = vadd.f32 0.0, %v2733
        %v2735 = vpop.f32.mrb[0].mxu0
        %v2736 = vpop.f32.mrb[0].mxu0
        %v2737 = vadd.f32 0.0, %v2736
        %v2738 = vpop.f32.mrb[0].mxu0
        %2739 = vmatprep.mubr.bf16.mxu0 %v2609
        %2740 = vmatmul.mubr.bf16.gmra.mrb[0].mxu0 %v2608
        %v2741 = vpop.f32.mrb[0].mxu0
        %v2742 = vadd.f32 0.0, %v2741
        %v2743 = vpop.f32.mrb[0].mxu0
        %v2744 = vpop.f32.mrb[0].mxu0
        %v2745 = vadd.f32 0.0, %v2744
        %v2746 = vpop.f32.mrb[0].mxu0
        %2747 = vdwg.mxu0
        %2748 = vmatprep.subr.bf16.mxu0 0
        %2749 = vmatpush1.bf16.msra.mxu0 %v2474
        %2750 = vmatprep.subr.bf16.mxu0 0
        %2751 = vmatpush1.bf16.msra.mxu0 %v2475
        %2752 = vmatprep.subr.bf16.mxu0 0
        %2753 = vmatpush1.bf16.msra.mxu0 %v2476
        %2754 = vmatprep.subr.bf16.mxu0 0
        %2755 = vmatpush1.bf16.msra.mxu0 %v2477
        %2756 = vmatprep.subr.bf16.mxu0 0
        %2757 = vmatpush1.bf16.msra.mxu0 %v2478
        %2758 = vmatprep.subr.bf16.mxu0 0
        %2759 = vmatpush1.bf16.msra.mxu0 %v2479
        %2760 = vmatprep.subr.bf16.mxu0 0
        %2761 = vmatpush1.bf16.msra.mxu0 %v2480
        %2762 = vmatprep.subr.bf16.mxu0 0
        %2763 = vmatpush1.bf16.msra.mxu0 %v2481
        %2764 = vmatprep.subr.bf16.mxu0 0
        %2765 = vmatpush1.bf16.msra.mxu0 %v2482
        %2766 = vmatprep.subr.bf16.mxu0 0
        %2767 = vmatpush1.bf16.msra.mxu0 %v2483
        %2768 = vmatprep.subr.bf16.mxu0 0
        %2769 = vmatpush1.bf16.msra.mxu0 %v2484
        %2770 = vmatprep.subr.bf16.mxu0 0
        %2771 = vmatpush1.bf16.msra.mxu0 %v2485
        %2772 = vmatprep.subr.bf16.mxu0 0
        %2773 = vmatpush1.bf16.msra.mxu0 %v2486
        %2774 = vmatprep.subr.bf16.mxu0 0
        %2775 = vmatpush1.bf16.msra.mxu0 %v2487
        %2776 = vmatprep.subr.bf16.mxu0 0
        %2777 = vmatpush1.bf16.msra.mxu0 %v2488
        %2778 = vmatprep.subr.bf16.mxu0 0
        %2779 = vmatpush1.bf16.msra.mxu0 %v2489
        %2780 = vmatprep.mubr.bf16.mxu0 %v2603
        %2781 = vmatmul.mubr.bf16.gmra.mrb[0].mxu0 %v2602
        %v2782 = vpop.f32.mrb[0].mxu0
        %v2783 = vadd.f32 0.0, %v2782
        %v2784 = vpop.f32.mrb[0].mxu0
        %v2785 = vpop.f32.mrb[0].mxu0
        %v2786 = vadd.f32 0.0, %v2785
        %v2787 = vpop.f32.mrb[0].mxu0
        %2788 = vmatprep.mubr.bf16.mxu0 %v2605
        %2789 = vmatmul.mubr.bf16.gmra.mrb[0].mxu0 %v2604
        %v2790 = vpop.f32.mrb[0].mxu0
        %v2791 = vadd.f32 0.0, %v2790
        %v2792 = vpop.f32.mrb[0].mxu0
        %v2793 = vpop.f32.mrb[0].mxu0
        %v2794 = vadd.f32 0.0, %v2793
        %v2795 = vpop.f32.mrb[0].mxu0
        %2796 = vmatprep.mubr.bf16.mxu0 %v2607
        %2797 = vmatmul.mubr.bf16.gmra.mrb[0].mxu0 %v2606
        %v2798 = vpop.f32.mrb[0].mxu0
        %v2799 = vadd.f32 0.0, %v2798
        %v2800 = vpop.f32.mrb[0].mxu0
        %v2801 = vpop.f32.mrb[0].mxu0
        %v2802 = vadd.f32 0.0, %v2801
        %v2803 = vpop.f32.mrb[0].mxu0
        %2804 = vmatprep.mubr.bf16.mxu0 %v2609
        %2805 = vmatmul.mubr.bf16.gmra.mrb[0].mxu0 %v2608
        %v2806 = vpop.f32.mrb[0].mxu0
        %v2807 = vadd.f32 0.0, %v2806
        %v2808 = vpop.f32.mrb[0].mxu0
        %v2809 = vpop.f32.mrb[0].mxu0
        %v2810 = vadd.f32 0.0, %v2809
        %v2811 = vpop.f32.mrb[0].mxu0
        %2812 = vdwg.mxu0
        %2813 = vmatprep.subr.bf16.mxu0 0
        %2814 = vmatpush1.bf16.msra.mxu0 %v2490
        %2815 = vmatprep.subr.bf16.mxu0 0
        %2816 = vmatpush1.bf16.msra.mxu0 %v2491
        %2817 = vmatprep.subr.bf16.mxu0 0
        %2818 = vmatpush1.bf16.msra.mxu0 %v2492
        %2819 = vmatprep.subr.bf16.mxu0 0
        %2820 = vmatpush1.bf16.msra.mxu0 %v2493
        %2821 = vmatprep.subr.bf16.mxu0 0
        %2822 = vmatpush1.bf16.msra.mxu0 %v2494
        %2823 = vmatprep.subr.bf16.mxu0 0
        %2824 = vmatpush1.bf16.msra.mxu0 %v2495
        %2825 = vmatprep.subr.bf16.mxu0 0
        %2826 = vmatpush1.bf16.msra.mxu0 %v2496
        %2827 = vmatprep.subr.bf16.mxu0 0
        %2828 = vmatpush1.bf16.msra.mxu0 %v2497
        %2829 = vmatprep.subr.bf16.mxu0 0
        %2830 = vmatpush1.bf16.msra.mxu0 %v2498
        %2831 = vmatprep.subr.bf16.mxu0 0
        %2832 = vmatpush1.bf16.msra.mxu0 %v2499
        %2833 = vmatprep.subr.bf16.mxu0 0
        %2834 = vmatpush1.bf16.msra.mxu0 %v2500
        %2835 = vmatprep.subr.bf16.mxu0 0
        %2836 = vmatpush1.bf16.msra.mxu0 %v2501
        %2837 = vmatprep.subr.bf16.mxu0 0
        %2838 = vmatpush1.bf16.msra.mxu0 %v2502
        %2839 = vmatprep.subr.bf16.mxu0 0
        %2840 = vmatpush1.bf16.msra.mxu0 %v2503
        %2841 = vmatprep.subr.bf16.mxu0 0
        %2842 = vmatpush1.bf16.msra.mxu0 %v2504
        %2843 = vmatprep.subr.bf16.mxu0 0
        %2844 = vmatpush1.bf16.msra.mxu0 %v2505
        %2845 = vmatprep.mubr.bf16.mxu0 %v2603
        %2846 = vmatmul.mubr.bf16.gmra.mrb[0].mxu0 %v2602
        %v2847 = vpop.f32.mrb[0].mxu0
        %v2848 = vadd.f32 0.0, %v2847
        %v2849 = vpop.f32.mrb[0].mxu0
        %v2850 = vpop.f32.mrb[0].mxu0
        %v2851 = vadd.f32 0.0, %v2850
        %v2852 = vpop.f32.mrb[0].mxu0
        %2853 = vmatprep.mubr.bf16.mxu0 %v2605
        %2854 = vmatmul.mubr.bf16.gmra.mrb[0].mxu0 %v2604
        %v2855 = vpop.f32.mrb[0].mxu0
        %v2856 = vadd.f32 0.0, %v2855
        %v2857 = vpop.f32.mrb[0].mxu0
        %v2858 = vpop.f32.mrb[0].mxu0
        %v2859 = vadd.f32 0.0, %v2858
        %v2860 = vpop.f32.mrb[0].mxu0
        %2861 = vmatprep.mubr.bf16.mxu0 %v2607
        %2862 = vmatmul.mubr.bf16.gmra.mrb[0].mxu0 %v2606
        %v2863 = vpop.f32.mrb[0].mxu0
        %v2864 = vadd.f32 0.0, %v2863
        %v2865 = vpop.f32.mrb[0].mxu0
        %v2866 = vpop.f32.mrb[0].mxu0
        %v2867 = vadd.f32 0.0, %v2866
        %v2868 = vpop.f32.mrb[0].mxu0
        %2869 = vmatprep.mubr.bf16.mxu0 %v2609
        %2870 = vmatmul.mubr.bf16.gmra.mrb[0].mxu0 %v2608
        %v2871 = vpop.f32.mrb[0].mxu0
        %v2872 = vadd.f32 0.0, %v2871
        %v2873 = vpop.f32.mrb[0].mxu0
        %v2874 = vpop.f32.mrb[0].mxu0
        %v2875 = vadd.f32 0.0, %v2874
        %v2876 = vpop.f32.mrb[0].mxu0
        %2877 = vdwg.mxu0
        %2878 = vmatprep.subr.bf16.mxu0 0
        %2879 = vmatpush1.bf16.msra.mxu0 %v2506
        %2880 = vmatprep.subr.bf16.mxu0 0
        %2881 = vmatpush1.bf16.msra.mxu0 %v2507
        %2882 = vmatprep.subr.bf16.mxu0 0
        %2883 = vmatpush1.bf16.msra.mxu0 %v2508
        %2884 = vmatprep.subr.bf16.mxu0 0
        %2885 = vmatpush1.bf16.msra.mxu0 %v2509
        %2886 = vmatprep.subr.bf16.mxu0 0
        %2887 = vmatpush1.bf16.msra.mxu0 %v2510
        %2888 = vmatprep.subr.bf16.mxu0 0
        %2889 = vmatpush1.bf16.msra.mxu0 %v2511
        %2890 = vmatprep.subr.bf16.mxu0 0
        %2891 = vmatpush1.bf16.msra.mxu0 %v2512
        %2892 = vmatprep.subr.bf16.mxu0 0
        %2893 = vmatpush1.bf16.msra.mxu0 %v2513
        %2894 = vmatprep.subr.bf16.mxu0 0
        %2895 = vmatpush1.bf16.msra.mxu0 %v2514
        %2896 = vmatprep.subr.bf16.mxu0 0
        %2897 = vmatpush1.bf16.msra.mxu0 %v2515
        %2898 = vmatprep.subr.bf16.mxu0 0
        %2899 = vmatpush1.bf16.msra.mxu0 %v2516
        %2900 = vmatprep.subr.bf16.mxu0 0
        %2901 = vmatpush1.bf16.msra.mxu0 %v2517
        %2902 = vmatprep.subr.bf16.mxu0 0
        %2903 = vmatpush1.bf16.msra.mxu0 %v2518
        %2904 = vmatprep.subr.bf16.mxu0 0
        %2905 = vmatpush1.bf16.msra.mxu0 %v2519
        %2906 = vmatprep.subr.bf16.mxu0 0
        %2907 = vmatpush1.bf16.msra.mxu0 %v2520
        %2908 = vmatprep.subr.bf16.mxu0 0
        %2909 = vmatpush1.bf16.msra.mxu0 %v2521
        %2910 = vmatprep.mubr.bf16.mxu0 %v2603
        %2911 = vmatmul.mubr.bf16.gmra.mrb[0].mxu0 %v2602
        %v2912 = vpop.f32.mrb[0].mxu0
        %v2913 = vadd.f32 0.0, %v2912
        %v2914 = vpop.f32.mrb[0].mxu0
        %v2915 = vpop.f32.mrb[0].mxu0
        %v2916 = vadd.f32 0.0, %v2915
        %v2917 = vpop.f32.mrb[0].mxu0
        %2918 = vmatprep.mubr.bf16.mxu0 %v2605
        %2919 = vmatmul.mubr.bf16.gmra.mrb[0].mxu0 %v2604
        %v2920 = vpop.f32.mrb[0].mxu0
        %v2921 = vadd.f32 0.0, %v2920
        %v2922 = vpop.f32.mrb[0].mxu0
        %v2923 = vpop.f32.mrb[0].mxu0
        %v2924 = vadd.f32 0.0, %v2923
        %v2925 = vpop.f32.mrb[0].mxu0
        %2926 = vmatprep.mubr.bf16.mxu0 %v2607
        %2927 = vmatmul.mubr.bf16.gmra.mrb[0].mxu0 %v2606
        %v2928 = vpop.f32.mrb[0].mxu0
        %v2929 = vadd.f32 0.0, %v2928
        %v2930 = vpop.f32.mrb[0].mxu0
        %v2931 = vpop.f32.mrb[0].mxu0
        %v2932 = vadd.f32 0.0, %v2931
        %v2933 = vpop.f32.mrb[0].mxu0
        %2934 = vmatprep.mubr.bf16.mxu0 %v2609
        %2935 = vmatmul.mubr.bf16.gmra.mrb[0].mxu0 %v2608
        %v2936 = vpop.f32.mrb[0].mxu0
        %v2937 = vadd.f32 0.0, %v2936
        %v2938 = vpop.f32.mrb[0].mxu0
        %v2939 = vpop.f32.mrb[0].mxu0
        %v2940 = vadd.f32 0.0, %v2939
        %v2941 = vpop.f32.mrb[0].mxu0
        %2942 = vdwg.mxu0
        %2943 = vmatprep.subr.bf16.mxu0 0
        %2944 = vmatpush1.bf16.msra.mxu0 %v2522
        %2945 = vmatprep.subr.bf16.mxu0 0
        %2946 = vmatpush1.bf16.msra.mxu0 %v2523
        %2947 = vmatprep.subr.bf16.mxu0 0
        %2948 = vmatpush1.bf16.msra.mxu0 %v2524
        %2949 = vmatprep.subr.bf16.mxu0 0
        %2950 = vmatpush1.bf16.msra.mxu0 %v2525
        %2951 = vmatprep.subr.bf16.mxu0 0
        %2952 = vmatpush1.bf16.msra.mxu0 %v2526
        %2953 = vmatprep.subr.bf16.mxu0 0
        %2954 = vmatpush1.bf16.msra.mxu0 %v2527
        %2955 = vmatprep.subr.bf16.mxu0 0
        %2956 = vmatpush1.bf16.msra.mxu0 %v2528
        %2957 = vmatprep.subr.bf16.mxu0 0
        %2958 = vmatpush1.bf16.msra.mxu0 %v2529
        %2959 = vmatprep.subr.bf16.mxu0 0
        %2960 = vmatpush1.bf16.msra.mxu0 %v2530
        %2961 = vmatprep.subr.bf16.mxu0 0
        %2962 = vmatpush1.bf16.msra.mxu0 %v2531
        %2963 = vmatprep.subr.bf16.mxu0 0
        %2964 = vmatpush1.bf16.msra.mxu0 %v2532
        %2965 = vmatprep.subr.bf16.mxu0 0
        %2966 = vmatpush1.bf16.msra.mxu0 %v2533
        %2967 = vmatprep.subr.bf16.mxu0 0
        %2968 = vmatpush1.bf16.msra.mxu0 %v2534
        %2969 = vmatprep.subr.bf16.mxu0 0
        %2970 = vmatpush1.bf16.msra.mxu0 %v2535
        %2971 = vmatprep.subr.bf16.mxu0 0
        %2972 = vmatpush1.bf16.msra.mxu0 %v2536
        %2973 = vmatprep.subr.bf16.mxu0 0
        %2974 = vmatpush1.bf16.msra.mxu0 %v2537
        %2975 = vmatprep.mubr.bf16.mxu0 %v2603
        %2976 = vmatmul.mubr.bf16.gmra.mrb[0].mxu0 %v2602
        %v2977 = vpop.f32.mrb[0].mxu0
        %v2978 = vadd.f32 0.0, %v2977
        %v2979 = vpop.f32.mrb[0].mxu0
        %v2980 = vpop.f32.mrb[0].mxu0
        %v2981 = vadd.f32 0.0, %v2980
        %v2982 = vpop.f32.mrb[0].mxu0
        %2983 = vmatprep.mubr.bf16.mxu0 %v2605
        %2984 = vmatmul.mubr.bf16.gmra.mrb[0].mxu0 %v2604
        %v2985 = vpop.f32.mrb[0].mxu0
        %v2986 = vadd.f32 0.0, %v2985
        %v2987 = vpop.f32.mrb[0].mxu0
        %v2988 = vpop.f32.mrb[0].mxu0
        %v2989 = vadd.f32 0.0, %v2988
        %v2990 = vpop.f32.mrb[0].mxu0
        %2991 = vmatprep.mubr.bf16.mxu0 %v2607
        %2992 = vmatmul.mubr.bf16.gmra.mrb[0].mxu0 %v2606
        %v2993 = vpop.f32.mrb[0].mxu0
        %v2994 = vadd.f32 0.0, %v2993
        %v2995 = vpop.f32.mrb[0].mxu0
        %v2996 = vpop.f32.mrb[0].mxu0
        %v2997 = vadd.f32 0.0, %v2996
        %v2998 = vpop.f32.mrb[0].mxu0
        %2999 = vmatprep.mubr.bf16.mxu0 %v2609
        %3000 = vmatmul.mubr.bf16.gmra.mrb[0].mxu0 %v2608
        %v3001 = vpop.f32.mrb[0].mxu0
        %v3002 = vadd.f32 0.0, %v3001
        %v3003 = vpop.f32.mrb[0].mxu0
        %v3004 = vpop.f32.mrb[0].mxu0
        %v3005 = vadd.f32 0.0, %v3004
        %v3006 = vpop.f32.mrb[0].mxu0
        %3007 = vdwg.mxu0
        %3008 = vmatprep.subr.bf16.mxu0 0
        %3009 = vmatpush1.bf16.msra.mxu0 %v2538
        %3010 = vmatprep.subr.bf16.mxu0 0
        %3011 = vmatpush1.bf16.msra.mxu0 %v2539
        %3012 = vmatprep.subr.bf16.mxu0 0
        %3013 = vmatpush1.bf16.msra.mxu0 %v2540
        %3014 = vmatprep.subr.bf16.mxu0 0
        %3015 = vmatpush1.bf16.msra.mxu0 %v2541
        %3016 = vmatprep.subr.bf16.mxu0 0
        %3017 = vmatpush1.bf16.msra.mxu0 %v2542
        %3018 = vmatprep.subr.bf16.mxu0 0
        %3019 = vmatpush1.bf16.msra.mxu0 %v2543
        %3020 = vmatprep.subr.bf16.mxu0 0
        %3021 = vmatpush1.bf16.msra.mxu0 %v2544
        %3022 = vmatprep.subr.bf16.mxu0 0
        %3023 = vmatpush1.bf16.msra.mxu0 %v2545
        %3024 = vmatprep.subr.bf16.mxu0 0
        %3025 = vmatpush1.bf16.msra.mxu0 %v2546
        %3026 = vmatprep.subr.bf16.mxu0 0
        %3027 = vmatpush1.bf16.msra.mxu0 %v2547
        %3028 = vmatprep.subr.bf16.mxu0 0
        %3029 = vmatpush1.bf16.msra.mxu0 %v2548
        %3030 = vmatprep.subr.bf16.mxu0 0
        %3031 = vmatpush1.bf16.msra.mxu0 %v2549
        %3032 = vmatprep.subr.bf16.mxu0 0
        %3033 = vmatpush1.bf16.msra.mxu0 %v2550
        %3034 = vmatprep.subr.bf16.mxu0 0
        %3035 = vmatpush1.bf16.msra.mxu0 %v2551
        %3036 = vmatprep.subr.bf16.mxu0 0
        %3037 = vmatpush1.bf16.msra.mxu0 %v2552
        %3038 = vmatprep.subr.bf16.mxu0 0
        %3039 = vmatpush1.bf16.msra.mxu0 %v2553
        %3040 = vmatprep.mubr.bf16.mxu0 %v2603
        %3041 = vmatmul.mubr.bf16.gmra.mrb[0].mxu0 %v2602
        %v3042 = vpop.f32.mrb[0].mxu0
        %v3043 = vadd.f32 0.0, %v3042
        %v3044 = vpop.f32.mrb[0].mxu0
        %v3045 = vpop.f32.mrb[0].mxu0
        %v3046 = vadd.f32 0.0, %v3045
        %v3047 = vpop.f32.mrb[0].mxu0
        %3048 = vmatprep.mubr.bf16.mxu0 %v2605
        %3049 = vmatmul.mubr.bf16.gmra.mrb[0].mxu0 %v2604
        %v3050 = vpop.f32.mrb[0].mxu0
        %v3051 = vadd.f32 0.0, %v3050
        %v3052 = vpop.f32.mrb[0].mxu0
        %v3053 = vpop.f32.mrb[0].mxu0
        %v3054 = vadd.f32 0.0, %v3053
        %v3055 = vpop.f32.mrb[0].mxu0
        %3056 = vmatprep.mubr.bf16.mxu0 %v2607
        %3057 = vmatmul.mubr.bf16.gmra.mrb[0].mxu0 %v2606
        %v3058 = vpop.f32.mrb[0].mxu0
        %v3059 = vadd.f32 0.0, %v3058
        %v3060 = vpop.f32.mrb[0].mxu0
        %v3061 = vpop.f32.mrb[0].mxu0
        %v3062 = vadd.f32 0.0, %v3061
        %v3063 = vpop.f32.mrb[0].mxu0
        %3064 = vmatprep.mubr.bf16.mxu0 %v2609
        %3065 = vmatmul.mubr.bf16.gmra.mrb[0].mxu0 %v2608
        %v3066 = vpop.f32.mrb[0].mxu0
        %v3067 = vadd.f32 0.0, %v3066
        %v3068 = vpop.f32.mrb[0].mxu0
        %v3069 = vpop.f32.mrb[0].mxu0
        %v3070 = vadd.f32 0.0, %v3069
        %v3071 = vpop.f32.mrb[0].mxu0
        %3072 = vdwg.mxu0
        %3073 = vmatprep.subr.bf16.mxu0 0
        %3074 = vmatpush1.bf16.msra.mxu0 %v2554
        %3075 = vmatprep.subr.bf16.mxu0 0
        %3076 = vmatpush1.bf16.msra.mxu0 %v2555
        %3077 = vmatprep.subr.bf16.mxu0 0
        %3078 = vmatpush1.bf16.msra.mxu0 %v2556
        %3079 = vmatprep.subr.bf16.mxu0 0
        %3080 = vmatpush1.bf16.msra.mxu0 %v2557
        %3081 = vmatprep.subr.bf16.mxu0 0
        %3082 = vmatpush1.bf16.msra.mxu0 %v2558
        %3083 = vmatprep.subr.bf16.mxu0 0
        %3084 = vmatpush1.bf16.msra.mxu0 %v2559
        %3085 = vmatprep.subr.bf16.mxu0 0
        %3086 = vmatpush1.bf16.msra.mxu0 %v2560
        %3087 = vmatprep.subr.bf16.mxu0 0
        %3088 = vmatpush1.bf16.msra.mxu0 %v2561
        %3089 = vmatprep.subr.bf16.mxu0 0
        %3090 = vmatpush1.bf16.msra.mxu0 %v2562
        %3091 = vmatprep.subr.bf16.mxu0 0
        %3092 = vmatpush1.bf16.msra.mxu0 %v2563
        %3093 = vmatprep.subr.bf16.mxu0 0
        %3094 = vmatpush1.bf16.msra.mxu0 %v2564
        %3095 = vmatprep.subr.bf16.mxu0 0
        %3096 = vmatpush1.bf16.msra.mxu0 %v2565
        %3097 = vmatprep.subr.bf16.mxu0 0
        %3098 = vmatpush1.bf16.msra.mxu0 %v2566
        %3099 = vmatprep.subr.bf16.mxu0 0
        %3100 = vmatpush1.bf16.msra.mxu0 %v2567
        %3101 = vmatprep.subr.bf16.mxu0 0
        %3102 = vmatpush1.bf16.msra.mxu0 %v2568
        %3103 = vmatprep.subr.bf16.mxu0 0
        %3104 = vmatpush1.bf16.msra.mxu0 %v2569
        %3105 = vmatprep.mubr.bf16.mxu0 %v2603
        %3106 = vmatmul.mubr.bf16.gmra.mrb[0].mxu0 %v2602
        %v3107 = vpop.f32.mrb[0].mxu0
        %v3108 = vadd.f32 0.0, %v3107
        %v3109 = vpop.f32.mrb[0].mxu0
        %v3110 = vpop.f32.mrb[0].mxu0
        %v3111 = vadd.f32 0.0, %v3110
        %v3112 = vpop.f32.mrb[0].mxu0
        %3113 = vmatprep.mubr.bf16.mxu0 %v2605
        %3114 = vmatmul.mubr.bf16.gmra.mrb[0].mxu0 %v2604
        %v3115 = vpop.f32.mrb[0].mxu0
        %v3116 = vadd.f32 0.0, %v3115
        %v3117 = vpop.f32.mrb[0].mxu0
        %v3118 = vpop.f32.mrb[0].mxu0
        %v3119 = vadd.f32 0.0, %v3118
        %v3120 = vpop.f32.mrb[0].mxu0
        %3121 = vmatprep.mubr.bf16.mxu0 %v2607
        %3122 = vmatmul.mubr.bf16.gmra.mrb[0].mxu0 %v2606
        %v3123 = vpop.f32.mrb[0].mxu0
        %v3124 = vadd.f32 0.0, %v3123
        %v3125 = vpop.f32.mrb[0].mxu0
        %v3126 = vpop.f32.mrb[0].mxu0
        %v3127 = vadd.f32 0.0, %v3126
        %v3128 = vpop.f32.mrb[0].mxu0
        %3129 = vmatprep.mubr.bf16.mxu0 %v2609
        %3130 = vmatmul.mubr.bf16.gmra.mrb[0].mxu0 %v2608
        %v3131 = vpop.f32.mrb[0].mxu0
        %v3132 = vadd.f32 0.0, %v3131
        %v3133 = vpop.f32.mrb[0].mxu0
        %v3134 = vpop.f32.mrb[0].mxu0
        %v3135 = vadd.f32 0.0, %v3134
        %v3136 = vpop.f32.mrb[0].mxu0
        %3137 = vdwg.mxu0
        %v3138 = vld [vmem:[%s3] sm:$0xff]
        %v3139 = vld [vmem:[%s3 + $0x8] sm:$0xff]
        %v3140 = vld [vmem:[%s3 + $0x10] sm:$0xff]
        %v3141 = vld [vmem:[%s3 + $0x18] sm:$0xff]
        %v3142 = vld [vmem:[%s3 + $0x20] sm:$0xff]
        %v3143 = vld [vmem:[%s3 + $0x28] sm:$0xff]
        %v3144 = vld [vmem:[%s3 + $0x30] sm:$0xff]
        %v3145 = vld [vmem:[%s3 + $0x38] sm:$0xff]
        %v3146 = vld [vmem:[%s3 + $0x40] sm:$0xff]
        %v3147 = vld [vmem:[%s3 + $0x48] sm:$0xff]
        %v3148 = vld [vmem:[%s3 + $0x50] sm:$0xff]
        %v3149 = vld [vmem:[%s3 + $0x58] sm:$0xff]
        %v3150 = vld [vmem:[%s3 + $0x60] sm:$0xff]
        %v3151 = vld [vmem:[%s3 + $0x68] sm:$0xff]
        %v3152 = vld [vmem:[%s3 + $0x70] sm:$0xff]
        %v3153 = vld [vmem:[%s3 + $0x78] sm:$0xff]
        %vm3154 = vcmask 523264
        %v3156 = vsel %vm3154, %v2661, 0
        %v3159 = vsel %vm3154, %v2664, 0
        %v3162 = vsel %vm3154, %v2726, 0
        %v3165 = vsel %vm3154, %v2729, 0
        %v3168 = vsel %vm3154, %v2791, 0
        %v3171 = vsel %vm3154, %v2794, 0
        %v3174 = vsel %vm3154, %v2856, 0
        %v3177 = vsel %vm3154, %v2859, 0
        %v3180 = vsel %vm3154, %v2921, 0
        %v3183 = vsel %vm3154, %v2924, 0
        %v3186 = vsel %vm3154, %v2986, 0
        %v3189 = vsel %vm3154, %v2989, 0
        %v3192 = vsel %vm3154, %v3051, 0
        %v3195 = vsel %vm3154, %v3054, 0
        %v3198 = vsel %vm3154, %v3116, 0
        %v3201 = vsel %vm3154, %v3119, 0
        %3203 = vmatprep.subr.mxu0 0.0
        %3204 = vmatpush1.msra.mxu0 %v3146
        %3205 = vmatprep.subr.mxu0 0.0
        %3206 = vmatpush1.msra.mxu0 %v3147
        %3207 = vmatprep.subr.mxu0 0.0
        %3208 = vmatpush1.msra.mxu0 %v3148
        %3209 = vmatprep.subr.mxu0 0.0
        %3210 = vmatpush1.msra.mxu0 %v3149
        %3211 = vmatprep.subr.mxu0 0.0
        %3212 = vmatpush1.msra.mxu0 %v3150
        %3213 = vmatprep.subr.mxu0 0.0
        %3214 = vmatpush1.msra.mxu0 %v3151
        %3215 = vmatprep.subr.mxu0 0.0
        %3216 = vmatpush1.msra.mxu0 %v3152
        %3217 = vmatprep.subr.mxu0 0.0
        %3218 = vmatpush1.msra.mxu0 %v3153
        %3219 = vmatprep.subr.mxu0 0.0
        %3220 = vmatpush1.msra.mxu0 0.0
        %3221 = vmatprep.subr.mxu0 0.0
        %3222 = vmatpush1.msra.mxu0 0.0
        %3223 = vmatprep.subr.mxu0 0.0
        %3224 = vmatpush1.msra.mxu0 0.0
        %3225 = vmatprep.subr.mxu0 0.0
        %3226 = vmatpush1.msra.mxu0 0.0
        %3227 = vmatprep.subr.mxu0 0.0
        %3228 = vmatpush1.msra.mxu0 0.0
        %3229 = vmatprep.subr.mxu0 0.0
        %3230 = vmatpush1.msra.mxu0 0.0
        %3231 = vmatprep.subr.mxu0 0.0
        %3232 = vmatpush1.msra.mxu0 0.0
        %3233 = vmatprep.subr.mxu0 0.0
        %3234 = vmatpush1.msra.mxu0 0.0
        %3235 = vmatprep.subr.mxu0 0.0
        %3236 = vmatpush1.msra.mxu0 0.0
        %3237 = vmatprep.subr.mxu0 0.0
        %3238 = vmatpush1.msra.mxu0 0.0
        %3239 = vmatprep.subr.mxu0 0.0
        %3240 = vmatpush1.msra.mxu0 0.0
        %3241 = vmatprep.subr.mxu0 0.0
        %3242 = vmatpush1.msra.mxu0 0.0
        %3243 = vmatprep.subr.mxu0 0.0
        %3244 = vmatpush1.msra.mxu0 0.0
        %3245 = vmatprep.subr.mxu0 0.0
        %3246 = vmatpush1.msra.mxu0 0.0
        %3247 = vmatprep.subr.mxu0 0.0
        %3248 = vmatpush1.msra.mxu0 0.0
        %3249 = vmatprep.subr.mxu0 0.0
        %3250 = vmatpush1.msra.mxu0 0.0
        %3251 = vmatprep.subr.mxu0 0.0
        %3252 = vmatpush1.msra.mxu0 0.0
        %3253 = vmatprep.subr.mxu0 0.0
        %3254 = vmatpush1.msra.mxu0 0.0
        %3255 = vmatprep.subr.mxu0 0.0
        %3256 = vmatpush1.msra.mxu0 0.0
        %3257 = vmatprep.subr.mxu0 0.0
        %3258 = vmatpush1.msra.mxu0 0.0
        %3259 = vmatprep.subr.mxu0 0.0
        %3260 = vmatpush1.msra.mxu0 0.0
        %3261 = vmatprep.subr.mxu0 0.0
        %3262 = vmatpush1.msra.mxu0 0.0
        %3263 = vmatprep.subr.mxu0 0.0
        %3264 = vmatpush1.msra.mxu0 0.0
        %3265 = vmatprep.subr.mxu0 0.0
        %3266 = vmatpush1.msra.mxu0 0.0
        %3267 = vmatprep.mubr.f32.mxu0 0.0
        %3268 = vmatmul.mubr.f32.gmra.mrb[0].mxu0 %v3156
        %v3269 = vpop.f32.mrb[0].mxu0
        %v3270 = vadd.f32 0.0, %v3269
        %v3271 = vpop.f32.mrb[0].mxu0
        %3272 = vmatprep.mubr.f32.mxu0 0.0
        %3273 = vmatmul.mubr.f32.gmra.mrb[0].mxu0 %v3159
        %v3274 = vpop.f32.mrb[0].mxu0
        %v3275 = vadd.f32 0.0, %v3274
        %v3276 = vpop.f32.mrb[0].mxu0
        %3277 = vmatprep.mubr.f32.mxu0 0.0
        %3278 = vmatmul.mubr.f32.gmra.mrb[0].mxu0 %v3162
        %v3279 = vpop.f32.mrb[0].mxu0
        %v3280 = vadd.f32 0.0, %v3279
        %v3281 = vpop.f32.mrb[0].mxu0
        %3282 = vmatprep.mubr.f32.mxu0 0.0
        %3283 = vmatmul.mubr.f32.gmra.mrb[0].mxu0 %v3165
        %v3284 = vpop.f32.mrb[0].mxu0
        %v3285 = vadd.f32 0.0, %v3284
        %v3286 = vpop.f32.mrb[0].mxu0
        %3287 = vmatprep.mubr.f32.mxu0 0.0
        %3288 = vmatmul.mubr.f32.gmra.mrb[0].mxu0 %v3168
        %v3289 = vpop.f32.mrb[0].mxu0
        %v3290 = vadd.f32 0.0, %v3289
        %v3291 = vpop.f32.mrb[0].mxu0
        %3292 = vmatprep.mubr.f32.mxu0 0.0
        %3293 = vmatmul.mubr.f32.gmra.mrb[0].mxu0 %v3171
        %v3294 = vpop.f32.mrb[0].mxu0
        %v3295 = vadd.f32 0.0, %v3294
        %v3296 = vpop.f32.mrb[0].mxu0
        %3297 = vmatprep.mubr.f32.mxu0 0.0
        %3298 = vmatmul.mubr.f32.gmra.mrb[0].mxu0 %v3174
        %v3299 = vpop.f32.mrb[0].mxu0
        %v3300 = vadd.f32 0.0, %v3299
        %v3301 = vpop.f32.mrb[0].mxu0
        %3302 = vmatprep.mubr.f32.mxu0 0.0
        %3303 = vmatmul.mubr.f32.gmra.mrb[0].mxu0 %v3177
        %v3304 = vpop.f32.mrb[0].mxu0
        %v3305 = vadd.f32 0.0, %v3304
        %v3306 = vpop.f32.mrb[0].mxu0
        %3307 = vmatprep.mubr.f32.mxu0 0.0
        %3308 = vmatmul.mubr.f32.gmra.mrb[0].mxu0 %v3180
        %v3309 = vpop.f32.mrb[0].mxu0
        %v3310 = vadd.f32 0.0, %v3309
        %v3311 = vpop.f32.mrb[0].mxu0
        %3312 = vmatprep.mubr.f32.mxu0 0.0
        %3313 = vmatmul.mubr.f32.gmra.mrb[0].mxu0 %v3183
        %v3314 = vpop.f32.mrb[0].mxu0
        %v3315 = vadd.f32 0.0, %v3314
        %v3316 = vpop.f32.mrb[0].mxu0
        %3317 = vmatprep.mubr.f32.mxu0 0.0
        %3318 = vmatmul.mubr.f32.gmra.mrb[0].mxu0 %v3186
        %v3319 = vpop.f32.mrb[0].mxu0
        %v3320 = vadd.f32 0.0, %v3319
        %v3321 = vpop.f32.mrb[0].mxu0
        %3322 = vmatprep.mubr.f32.mxu0 0.0
        %3323 = vmatmul.mubr.f32.gmra.mrb[0].mxu0 %v3189
        %v3324 = vpop.f32.mrb[0].mxu0
        %v3325 = vadd.f32 0.0, %v3324
        %v3326 = vpop.f32.mrb[0].mxu0
        %3327 = vmatprep.mubr.f32.mxu0 0.0
        %3328 = vmatmul.mubr.f32.gmra.mrb[0].mxu0 %v3192
        %v3329 = vpop.f32.mrb[0].mxu0
        %v3330 = vadd.f32 0.0, %v3329
        %v3331 = vpop.f32.mrb[0].mxu0
        %3332 = vmatprep.mubr.f32.mxu0 0.0
        %3333 = vmatmul.mubr.f32.gmra.mrb[0].mxu0 %v3195
        %v3334 = vpop.f32.mrb[0].mxu0
        %v3335 = vadd.f32 0.0, %v3334
        %v3336 = vpop.f32.mrb[0].mxu0
        %3337 = vmatprep.mubr.f32.mxu0 0.0
        %3338 = vmatmul.mubr.f32.gmra.mrb[0].mxu0 %v3198
        %v3339 = vpop.f32.mrb[0].mxu0
        %v3340 = vadd.f32 0.0, %v3339
        %v3341 = vpop.f32.mrb[0].mxu0
        %3342 = vmatprep.mubr.f32.mxu0 0.0
        %3343 = vmatmul.mubr.f32.gmra.mrb[0].mxu0 %v3201
        %v3344 = vpop.f32.mrb[0].mxu0
        %v3345 = vadd.f32 0.0, %v3344
        %v3346 = vpop.f32.mrb[0].mxu0
        %3347 = vdwg.mxu0
        %v3349 = vsel %vm3154, %v2653, 0
        %v3352 = vsel %vm3154, %v2656, 0
        %v3355 = vsel %vm3154, %v2718, 0
        %v3358 = vsel %vm3154, %v2721, 0
        %v3361 = vsel %vm3154, %v2783, 0
        %v3364 = vsel %vm3154, %v2786, 0
        %v3367 = vsel %vm3154, %v2848, 0
        %v3370 = vsel %vm3154, %v2851, 0
        %v3373 = vsel %vm3154, %v2913, 0
        %v3376 = vsel %vm3154, %v2916, 0
        %v3379 = vsel %vm3154, %v2978, 0
        %v3382 = vsel %vm3154, %v2981, 0
        %v3385 = vsel %vm3154, %v3043, 0
        %v3388 = vsel %vm3154, %v3046, 0
        %v3391 = vsel %vm3154, %v3108, 0
        %v3394 = vsel %vm3154, %v3111, 0
        %3396 = vmatprep.subr.mxu0 0.0
        %3397 = vmatpush1.msra.mxu0 %v3138
        %3398 = vmatprep.subr.mxu0 0.0
        %3399 = vmatpush1.msra.mxu0 %v3139
        %3400 = vmatprep.subr.mxu0 0.0
        %3401 = vmatpush1.msra.mxu0 %v3140
        %3402 = vmatprep.subr.mxu0 0.0
        %3403 = vmatpush1.msra.mxu0 %v3141
        %3404 = vmatprep.subr.mxu0 0.0
        %3405 = vmatpush1.msra.mxu0 %v3142
        %3406 = vmatprep.subr.mxu0 0.0
        %3407 = vmatpush1.msra.mxu0 %v3143
        %3408 = vmatprep.subr.mxu0 0.0
        %3409 = vmatpush1.msra.mxu0 %v3144
        %3410 = vmatprep.subr.mxu0 0.0
        %3411 = vmatpush1.msra.mxu0 %v3145
        %3412 = vmatprep.subr.mxu0 0.0
        %3413 = vmatpush1.msra.mxu0 0.0
        %3414 = vmatprep.subr.mxu0 0.0
        %3415 = vmatpush1.msra.mxu0 0.0
        %3416 = vmatprep.subr.mxu0 0.0
        %3417 = vmatpush1.msra.mxu0 0.0
        %3418 = vmatprep.subr.mxu0 0.0
        %3419 = vmatpush1.msra.mxu0 0.0
        %3420 = vmatprep.subr.mxu0 0.0
        %3421 = vmatpush1.msra.mxu0 0.0
        %3422 = vmatprep.subr.mxu0 0.0
        %3423 = vmatpush1.msra.mxu0 0.0
        %3424 = vmatprep.subr.mxu0 0.0
        %3425 = vmatpush1.msra.mxu0 0.0
        %3426 = vmatprep.subr.mxu0 0.0
        %3427 = vmatpush1.msra.mxu0 0.0
        %3428 = vmatprep.subr.mxu0 0.0
        %3429 = vmatpush1.msra.mxu0 0.0
        %3430 = vmatprep.subr.mxu0 0.0
        %3431 = vmatpush1.msra.mxu0 0.0
        %3432 = vmatprep.subr.mxu0 0.0
        %3433 = vmatpush1.msra.mxu0 0.0
        %3434 = vmatprep.subr.mxu0 0.0
        %3435 = vmatpush1.msra.mxu0 0.0
        %3436 = vmatprep.subr.mxu0 0.0
        %3437 = vmatpush1.msra.mxu0 0.0
        %3438 = vmatprep.subr.mxu0 0.0
        %3439 = vmatpush1.msra.mxu0 0.0
        %3440 = vmatprep.subr.mxu0 0.0
        %3441 = vmatpush1.msra.mxu0 0.0
        %3442 = vmatprep.subr.mxu0 0.0
        %3443 = vmatpush1.msra.mxu0 0.0
        %3444 = vmatprep.subr.mxu0 0.0
        %3445 = vmatpush1.msra.mxu0 0.0
        %3446 = vmatprep.subr.mxu0 0.0
        %3447 = vmatpush1.msra.mxu0 0.0
        %3448 = vmatprep.subr.mxu0 0.0
        %3449 = vmatpush1.msra.mxu0 0.0
        %3450 = vmatprep.subr.mxu0 0.0
        %3451 = vmatpush1.msra.mxu0 0.0
        %3452 = vmatprep.subr.mxu0 0.0
        %3453 = vmatpush1.msra.mxu0 0.0
        %3454 = vmatprep.subr.mxu0 0.0
        %3455 = vmatpush1.msra.mxu0 0.0
        %3456 = vmatprep.subr.mxu0 0.0
        %3457 = vmatpush1.msra.mxu0 0.0
        %3458 = vmatprep.subr.mxu0 0.0
        %3459 = vmatpush1.msra.mxu0 0.0
        %3460 = vmatprep.mubr.f32.mxu0 0.0
        %3461 = vmatmul.mubr.f32.gmra.mrb[0].mxu0 %v3349
        %v3462 = vpop.f32.mrb[0].mxu0
        %v3463 = vadd.f32 %v3270, %v3462
        %v3464 = vpop.f32.mrb[0].mxu0
        %3465 = vmatprep.mubr.f32.mxu0 0.0
        %3466 = vmatmul.mubr.f32.gmra.mrb[0].mxu0 %v3352
        %v3467 = vpop.f32.mrb[0].mxu0
        %v3468 = vadd.f32 %v3275, %v3467
        %v3469 = vpop.f32.mrb[0].mxu0
        %3470 = vmatprep.mubr.f32.mxu0 0.0
        %3471 = vmatmul.mubr.f32.gmra.mrb[0].mxu0 %v3355
        %v3472 = vpop.f32.mrb[0].mxu0
        %v3473 = vadd.f32 %v3280, %v3472
        %v3474 = vpop.f32.mrb[0].mxu0
        %3475 = vmatprep.mubr.f32.mxu0 0.0
        %3476 = vmatmul.mubr.f32.gmra.mrb[0].mxu0 %v3358
        %v3477 = vpop.f32.mrb[0].mxu0
        %v3478 = vadd.f32 %v3285, %v3477
        %v3479 = vpop.f32.mrb[0].mxu0
        %3480 = vmatprep.mubr.f32.mxu0 0.0
        %3481 = vmatmul.mubr.f32.gmra.mrb[0].mxu0 %v3361
        %v3482 = vpop.f32.mrb[0].mxu0
        %v3483 = vadd.f32 %v3290, %v3482
        %v3484 = vpop.f32.mrb[0].mxu0
        %3485 = vmatprep.mubr.f32.mxu0 0.0
        %3486 = vmatmul.mubr.f32.gmra.mrb[0].mxu0 %v3364
        %v3487 = vpop.f32.mrb[0].mxu0
        %v3488 = vadd.f32 %v3295, %v3487
        %v3489 = vpop.f32.mrb[0].mxu0
        %3490 = vmatprep.mubr.f32.mxu0 0.0
        %3491 = vmatmul.mubr.f32.gmra.mrb[0].mxu0 %v3367
        %v3492 = vpop.f32.mrb[0].mxu0
        %v3493 = vadd.f32 %v3300, %v3492
        %v3494 = vpop.f32.mrb[0].mxu0
        %3495 = vmatprep.mubr.f32.mxu0 0.0
        %3496 = vmatmul.mubr.f32.gmra.mrb[0].mxu0 %v3370
        %v3497 = vpop.f32.mrb[0].mxu0
        %v3498 = vadd.f32 %v3305, %v3497
        %v3499 = vpop.f32.mrb[0].mxu0
        %3500 = vmatprep.mubr.f32.mxu0 0.0
        %3501 = vmatmul.mubr.f32.gmra.mrb[0].mxu0 %v3373
        %v3502 = vpop.f32.mrb[0].mxu0
        %v3503 = vadd.f32 %v3310, %v3502
        %v3504 = vpop.f32.mrb[0].mxu0
        %3505 = vmatprep.mubr.f32.mxu0 0.0
        %3506 = vmatmul.mubr.f32.gmra.mrb[0].mxu0 %v3376
        %v3507 = vpop.f32.mrb[0].mxu0
        %v3508 = vadd.f32 %v3315, %v3507
        %v3509 = vpop.f32.mrb[0].mxu0
        %3510 = vmatprep.mubr.f32.mxu0 0.0
        %3511 = vmatmul.mubr.f32.gmra.mrb[0].mxu0 %v3379
        %v3512 = vpop.f32.mrb[0].mxu0
        %v3513 = vadd.f32 %v3320, %v3512
        %v3514 = vpop.f32.mrb[0].mxu0
        %3515 = vmatprep.mubr.f32.mxu0 0.0
        %3516 = vmatmul.mubr.f32.gmra.mrb[0].mxu0 %v3382
        %v3517 = vpop.f32.mrb[0].mxu0
        %v3518 = vadd.f32 %v3325, %v3517
        %v3519 = vpop.f32.mrb[0].mxu0
        %3520 = vmatprep.mubr.f32.mxu0 0.0
        %3521 = vmatmul.mubr.f32.gmra.mrb[0].mxu0 %v3385
        %v3522 = vpop.f32.mrb[0].mxu0
        %v3523 = vadd.f32 %v3330, %v3522
        %v3524 = vpop.f32.mrb[0].mxu0
        %3525 = vmatprep.mubr.f32.mxu0 0.0
        %3526 = vmatmul.mubr.f32.gmra.mrb[0].mxu0 %v3388
        %v3527 = vpop.f32.mrb[0].mxu0
        %v3528 = vadd.f32 %v3335, %v3527
        %v3529 = vpop.f32.mrb[0].mxu0
        %3530 = vmatprep.mubr.f32.mxu0 0.0
        %3531 = vmatmul.mubr.f32.gmra.mrb[0].mxu0 %v3391
        %v3532 = vpop.f32.mrb[0].mxu0
        %v3533 = vadd.f32 %v3340, %v3532
        %v3534 = vpop.f32.mrb[0].mxu0
        %3535 = vmatprep.mubr.f32.mxu0 0.0
        %3536 = vmatmul.mubr.f32.gmra.mrb[0].mxu0 %v3394
        %v3537 = vpop.f32.mrb[0].mxu0
        %v3538 = vadd.f32 %v3345, %v3537
        %v3539 = vpop.f32.mrb[0].mxu0
        %3540 = vdwg.mxu0
        %v3541 = vld [vmem:[%s3 + $0x80] sm:$0xff]
        %v3542 = vld [vmem:[%s3 + $0x88] sm:$0xff]
        %v3543 = vld [vmem:[%s3 + $0x90] sm:$0xff]
        %v3544 = vld [vmem:[%s3 + $0x98] sm:$0xff]
        %v3545 = vld [vmem:[%s3 + $0xa0] sm:$0xff]
        %v3546 = vld [vmem:[%s3 + $0xa8] sm:$0xff]
        %v3547 = vld [vmem:[%s3 + $0xb0] sm:$0xff]
        %v3548 = vld [vmem:[%s3 + $0xb8] sm:$0xff]
        %v3550 = vsel %vm3154, %v2669, 0
        %v3553 = vsel %vm3154, %v2672, 0
        %v3556 = vsel %vm3154, %v2734, 0
        %v3559 = vsel %vm3154, %v2737, 0
        %v3562 = vsel %vm3154, %v2799, 0
        %v3565 = vsel %vm3154, %v2802, 0
        %v3568 = vsel %vm3154, %v2864, 0
        %v3571 = vsel %vm3154, %v2867, 0
        %v3574 = vsel %vm3154, %v2929, 0
        %v3577 = vsel %vm3154, %v2932, 0
        %v3580 = vsel %vm3154, %v2994, 0
        %v3583 = vsel %vm3154, %v2997, 0
        %v3586 = vsel %vm3154, %v3059, 0
        %v3589 = vsel %vm3154, %v3062, 0
        %v3592 = vsel %vm3154, %v3124, 0
        %v3595 = vsel %vm3154, %v3127, 0
        %3597 = vmatprep.subr.mxu0 0.0
        %3598 = vmatpush1.msra.mxu0 %v3541
        %3599 = vmatprep.subr.mxu0 0.0
        %3600 = vmatpush1.msra.mxu0 %v3542
        %3601 = vmatprep.subr.mxu0 0.0
        %3602 = vmatpush1.msra.mxu0 %v3543
        %3603 = vmatprep.subr.mxu0 0.0
        %3604 = vmatpush1.msra.mxu0 %v3544
        %3605 = vmatprep.subr.mxu0 0.0
        %3606 = vmatpush1.msra.mxu0 %v3545
        %3607 = vmatprep.subr.mxu0 0.0
        %3608 = vmatpush1.msra.mxu0 %v3546
        %3609 = vmatprep.subr.mxu0 0.0
        %3610 = vmatpush1.msra.mxu0 %v3547
        %3611 = vmatprep.subr.mxu0 0.0
        %3612 = vmatpush1.msra.mxu0 %v3548
        %3613 = vmatprep.subr.mxu0 0.0
        %3614 = vmatpush1.msra.mxu0 0.0
        %3615 = vmatprep.subr.mxu0 0.0
        %3616 = vmatpush1.msra.mxu0 0.0
        %3617 = vmatprep.subr.mxu0 0.0
        %3618 = vmatpush1.msra.mxu0 0.0
        %3619 = vmatprep.subr.mxu0 0.0
        %3620 = vmatpush1.msra.mxu0 0.0
        %3621 = vmatprep.subr.mxu0 0.0
        %3622 = vmatpush1.msra.mxu0 0.0
        %3623 = vmatprep.subr.mxu0 0.0
        %3624 = vmatpush1.msra.mxu0 0.0
        %3625 = vmatprep.subr.mxu0 0.0
        %3626 = vmatpush1.msra.mxu0 0.0
        %3627 = vmatprep.subr.mxu0 0.0
        %3628 = vmatpush1.msra.mxu0 0.0
        %3629 = vmatprep.subr.mxu0 0.0
        %3630 = vmatpush1.msra.mxu0 0.0
        %3631 = vmatprep.subr.mxu0 0.0
        %3632 = vmatpush1.msra.mxu0 0.0
        %3633 = vmatprep.subr.mxu0 0.0
        %3634 = vmatpush1.msra.mxu0 0.0
        %3635 = vmatprep.subr.mxu0 0.0
        %3636 = vmatpush1.msra.mxu0 0.0
        %3637 = vmatprep.subr.mxu0 0.0
        %3638 = vmatpush1.msra.mxu0 0.0
        %3639 = vmatprep.subr.mxu0 0.0
        %3640 = vmatpush1.msra.mxu0 0.0
        %3641 = vmatprep.subr.mxu0 0.0
        %3642 = vmatpush1.msra.mxu0 0.0
        %3643 = vmatprep.subr.mxu0 0.0
        %3644 = vmatpush1.msra.mxu0 0.0
        %3645 = vmatprep.subr.mxu0 0.0
        %3646 = vmatpush1.msra.mxu0 0.0
        %3647 = vmatprep.subr.mxu0 0.0
        %3648 = vmatpush1.msra.mxu0 0.0
        %3649 = vmatprep.subr.mxu0 0.0
        %3650 = vmatpush1.msra.mxu0 0.0
        %3651 = vmatprep.subr.mxu0 0.0
        %3652 = vmatpush1.msra.mxu0 0.0
        %3653 = vmatprep.subr.mxu0 0.0
        %3654 = vmatpush1.msra.mxu0 0.0
        %3655 = vmatprep.subr.mxu0 0.0
        %3656 = vmatpush1.msra.mxu0 0.0
        %3657 = vmatprep.subr.mxu0 0.0
        %3658 = vmatpush1.msra.mxu0 0.0
        %3659 = vmatprep.subr.mxu0 0.0
        %3660 = vmatpush1.msra.mxu0 0.0
        %3661 = vmatprep.mubr.f32.mxu0 0.0
        %3662 = vmatmul.mubr.f32.gmra.mrb[0].mxu0 %v3550
        %v3663 = vpop.f32.mrb[0].mxu0
        %v3664 = vadd.f32 0.0, %v3663
        %v3665 = vpop.f32.mrb[0].mxu0
        %3666 = vmatprep.mubr.f32.mxu0 0.0
        %3667 = vmatmul.mubr.f32.gmra.mrb[0].mxu0 %v3553
        %v3668 = vpop.f32.mrb[0].mxu0
        %v3669 = vadd.f32 0.0, %v3668
        %v3670 = vpop.f32.mrb[0].mxu0
        %3671 = vmatprep.mubr.f32.mxu0 0.0
        %3672 = vmatmul.mubr.f32.gmra.mrb[0].mxu0 %v3556
        %v3673 = vpop.f32.mrb[0].mxu0
        %v3674 = vadd.f32 0.0, %v3673
        %v3675 = vpop.f32.mrb[0].mxu0
        %3676 = vmatprep.mubr.f32.mxu0 0.0
        %3677 = vmatmul.mubr.f32.gmra.mrb[0].mxu0 %v3559
        %v3678 = vpop.f32.mrb[0].mxu0
        %v3679 = vadd.f32 0.0, %v3678
        %v3680 = vpop.f32.mrb[0].mxu0
        %3681 = vmatprep.mubr.f32.mxu0 0.0
        %3682 = vmatmul.mubr.f32.gmra.mrb[0].mxu0 %v3562
        %v3683 = vpop.f32.mrb[0].mxu0
        %v3684 = vadd.f32 0.0, %v3683
        %v3685 = vpop.f32.mrb[0].mxu0
        %3686 = vmatprep.mubr.f32.mxu0 0.0
        %3687 = vmatmul.mubr.f32.gmra.mrb[0].mxu0 %v3565
        %v3688 = vpop.f32.mrb[0].mxu0
        %v3689 = vadd.f32 0.0, %v3688
        %v3690 = vpop.f32.mrb[0].mxu0
        %3691 = vmatprep.mubr.f32.mxu0 0.0
        %3692 = vmatmul.mubr.f32.gmra.mrb[0].mxu0 %v3568
        %v3693 = vpop.f32.mrb[0].mxu0
        %v3694 = vadd.f32 0.0, %v3693
        %v3695 = vpop.f32.mrb[0].mxu0
        %3696 = vmatprep.mubr.f32.mxu0 0.0
        %3697 = vmatmul.mubr.f32.gmra.mrb[0].mxu0 %v3571
        %v3698 = vpop.f32.mrb[0].mxu0
        %v3699 = vadd.f32 0.0, %v3698
        %v3700 = vpop.f32.mrb[0].mxu0
        %3701 = vmatprep.mubr.f32.mxu0 0.0
        %3702 = vmatmul.mubr.f32.gmra.mrb[0].mxu0 %v3574
        %v3703 = vpop.f32.mrb[0].mxu0
        %v3704 = vadd.f32 0.0, %v3703
        %v3705 = vpop.f32.mrb[0].mxu0
        %3706 = vmatprep.mubr.f32.mxu0 0.0
        %3707 = vmatmul.mubr.f32.gmra.mrb[0].mxu0 %v3577
        %v3708 = vpop.f32.mrb[0].mxu0
        %v3709 = vadd.f32 0.0, %v3708
        %v3710 = vpop.f32.mrb[0].mxu0
        %3711 = vmatprep.mubr.f32.mxu0 0.0
        %3712 = vmatmul.mubr.f32.gmra.mrb[0].mxu0 %v3580
        %v3713 = vpop.f32.mrb[0].mxu0
        %v3714 = vadd.f32 0.0, %v3713
        %v3715 = vpop.f32.mrb[0].mxu0
        %3716 = vmatprep.mubr.f32.mxu0 0.0
        %3717 = vmatmul.mubr.f32.gmra.mrb[0].mxu0 %v3583
        %v3718 = vpop.f32.mrb[0].mxu0
        %v3719 = vadd.f32 0.0, %v3718
        %v3720 = vpop.f32.mrb[0].mxu0
        %3721 = vmatprep.mubr.f32.mxu0 0.0
        %3722 = vmatmul.mubr.f32.gmra.mrb[0].mxu0 %v3586
        %v3723 = vpop.f32.mrb[0].mxu0
        %v3724 = vadd.f32 0.0, %v3723
        %v3725 = vpop.f32.mrb[0].mxu0
        %3726 = vmatprep.mubr.f32.mxu0 0.0
        %3727 = vmatmul.mubr.f32.gmra.mrb[0].mxu0 %v3589
        %v3728 = vpop.f32.mrb[0].mxu0
        %v3729 = vadd.f32 0.0, %v3728
        %v3730 = vpop.f32.mrb[0].mxu0
        %3731 = vmatprep.mubr.f32.mxu0 0.0
        %3732 = vmatmul.mubr.f32.gmra.mrb[0].mxu0 %v3592
        %v3733 = vpop.f32.mrb[0].mxu0
        %v3734 = vadd.f32 0.0, %v3733
        %v3735 = vpop.f32.mrb[0].mxu0
        %3736 = vmatprep.mubr.f32.mxu0 0.0
        %3737 = vmatmul.mubr.f32.gmra.mrb[0].mxu0 %v3595
        %v3738 = vpop.f32.mrb[0].mxu0
        %v3739 = vadd.f32 0.0, %v3738
        %v3740 = vpop.f32.mrb[0].mxu0
        %3741 = vdwg.mxu0
        %v3742 = vadd.f32 %v3463, %v3664
        %v3743 = vadd.f32 %v3468, %v3669
        %v3744 = vadd.f32 %v3473, %v3674
        %v3745 = vadd.f32 %v3478, %v3679
        %v3746 = vadd.f32 %v3483, %v3684
        %v3747 = vadd.f32 %v3488, %v3689
        %v3748 = vadd.f32 %v3493, %v3694
        %v3749 = vadd.f32 %v3498, %v3699
        %v3750 = vadd.f32 %v3503, %v3704
        %v3751 = vadd.f32 %v3508, %v3709
        %v3752 = vadd.f32 %v3513, %v3714
        %v3753 = vadd.f32 %v3518, %v3719
        %v3754 = vadd.f32 %v3523, %v3724
        %v3755 = vadd.f32 %v3528, %v3729
        %v3756 = vadd.f32 %v3533, %v3734
        %v3757 = vadd.f32 %v3538, %v3739
        %v3758 = vld [vmem:[%s3 + $0xc0] sm:$0xff]
        %v3759 = vld [vmem:[%s3 + $0xc8] sm:$0xff]
        %v3760 = vld [vmem:[%s3 + $0xd0] sm:$0xff]
        %v3761 = vld [vmem:[%s3 + $0xd8] sm:$0xff]
        %v3762 = vld [vmem:[%s3 + $0xe0] sm:$0xff]
        %v3763 = vld [vmem:[%s3 + $0xe8] sm:$0xff]
        %v3764 = vld [vmem:[%s3 + $0xf0] sm:$0xff]
        %v3765 = vld [vmem:[%s3 + $0xf8] sm:$0xff]
        %v3767 = vsel %vm3154, %v2677, 0
        %v3770 = vsel %vm3154, %v2680, 0
        %v3773 = vsel %vm3154, %v2742, 0
        %v3776 = vsel %vm3154, %v2745, 0
        %v3779 = vsel %vm3154, %v2807, 0
        %v3782 = vsel %vm3154, %v2810, 0
        %v3785 = vsel %vm3154, %v2872, 0
        %v3788 = vsel %vm3154, %v2875, 0
        %v3791 = vsel %vm3154, %v2937, 0
        %v3794 = vsel %vm3154, %v2940, 0
        %v3797 = vsel %vm3154, %v3002, 0
        %v3800 = vsel %vm3154, %v3005, 0
        %v3803 = vsel %vm3154, %v3067, 0
        %v3806 = vsel %vm3154, %v3070, 0
        %v3809 = vsel %vm3154, %v3132, 0
        %v3812 = vsel %vm3154, %v3135, 0
        %3814 = vmatprep.subr.mxu0 0.0
        %3815 = vmatpush1.msra.mxu0 %v3758
        %3816 = vmatprep.subr.mxu0 0.0
        %3817 = vmatpush1.msra.mxu0 %v3759
        %3818 = vmatprep.subr.mxu0 0.0
        %3819 = vmatpush1.msra.mxu0 %v3760
        %3820 = vmatprep.subr.mxu0 0.0
        %3821 = vmatpush1.msra.mxu0 %v3761
        %3822 = vmatprep.subr.mxu0 0.0
        %3823 = vmatpush1.msra.mxu0 %v3762
        %3824 = vmatprep.subr.mxu0 0.0
        %3825 = vmatpush1.msra.mxu0 %v3763
        %3826 = vmatprep.subr.mxu0 0.0
        %3827 = vmatpush1.msra.mxu0 %v3764
        %3828 = vmatprep.subr.mxu0 0.0
        %3829 = vmatpush1.msra.mxu0 %v3765
        %3830 = vmatprep.subr.mxu0 0.0
        %3831 = vmatpush1.msra.mxu0 0.0
        %3832 = vmatprep.subr.mxu0 0.0
        %3833 = vmatpush1.msra.mxu0 0.0
        %3834 = vmatprep.subr.mxu0 0.0
        %3835 = vmatpush1.msra.mxu0 0.0
        %3836 = vmatprep.subr.mxu0 0.0
        %3837 = vmatpush1.msra.mxu0 0.0
        %3838 = vmatprep.subr.mxu0 0.0
        %3839 = vmatpush1.msra.mxu0 0.0
        %3840 = vmatprep.subr.mxu0 0.0
        %3841 = vmatpush1.msra.mxu0 0.0
        %3842 = vmatprep.subr.mxu0 0.0
        %3843 = vmatpush1.msra.mxu0 0.0
        %3844 = vmatprep.subr.mxu0 0.0
        %3845 = vmatpush1.msra.mxu0 0.0
        %3846 = vmatprep.subr.mxu0 0.0
        %3847 = vmatpush1.msra.mxu0 0.0
        %3848 = vmatprep.subr.mxu0 0.0
        %3849 = vmatpush1.msra.mxu0 0.0
        %3850 = vmatprep.subr.mxu0 0.0
        %3851 = vmatpush1.msra.mxu0 0.0
        %3852 = vmatprep.subr.mxu0 0.0
        %3853 = vmatpush1.msra.mxu0 0.0
        %3854 = vmatprep.subr.mxu0 0.0
        %3855 = vmatpush1.msra.mxu0 0.0
        %3856 = vmatprep.subr.mxu0 0.0
        %3857 = vmatpush1.msra.mxu0 0.0
        %3858 = vmatprep.subr.mxu0 0.0
        %3859 = vmatpush1.msra.mxu0 0.0
        %3860 = vmatprep.subr.mxu0 0.0
        %3861 = vmatpush1.msra.mxu0 0.0
        %3862 = vmatprep.subr.mxu0 0.0
        %3863 = vmatpush1.msra.mxu0 0.0
        %3864 = vmatprep.subr.mxu0 0.0
        %3865 = vmatpush1.msra.mxu0 0.0
        %3866 = vmatprep.subr.mxu0 0.0
        %3867 = vmatpush1.msra.mxu0 0.0
        %3868 = vmatprep.subr.mxu0 0.0
        %3869 = vmatpush1.msra.mxu0 0.0
        %3870 = vmatprep.subr.mxu0 0.0
        %3871 = vmatpush1.msra.mxu0 0.0
        %3872 = vmatprep.subr.mxu0 0.0
        %3873 = vmatpush1.msra.mxu0 0.0
        %3874 = vmatprep.subr.mxu0 0.0
        %3875 = vmatpush1.msra.mxu0 0.0
        %3876 = vmatprep.subr.mxu0 0.0
        %3877 = vmatpush1.msra.mxu0 0.0
        %3878 = vmatprep.mubr.f32.mxu0 0.0
        %3879 = vmatmul.mubr.f32.gmra.mrb[0].mxu0 %v3767
        %v3880 = vpop.f32.mrb[0].mxu0
        %v3881 = vadd.f32 0.0, %v3880
        %v3882 = vpop.f32.mrb[0].mxu0
        %3883 = vmatprep.mubr.f32.mxu0 0.0
        %3884 = vmatmul.mubr.f32.gmra.mrb[0].mxu0 %v3770
        %v3885 = vpop.f32.mrb[0].mxu0
        %v3886 = vadd.f32 0.0, %v3885
        %v3887 = vpop.f32.mrb[0].mxu0
        %3888 = vmatprep.mubr.f32.mxu0 0.0
        %3889 = vmatmul.mubr.f32.gmra.mrb[0].mxu0 %v3773
        %v3890 = vpop.f32.mrb[0].mxu0
        %v3891 = vadd.f32 0.0, %v3890
        %v3892 = vpop.f32.mrb[0].mxu0
        %3893 = vmatprep.mubr.f32.mxu0 0.0
        %3894 = vmatmul.mubr.f32.gmra.mrb[0].mxu0 %v3776
        %v3895 = vpop.f32.mrb[0].mxu0
        %v3896 = vadd.f32 0.0, %v3895
        %v3897 = vpop.f32.mrb[0].mxu0
        %3898 = vmatprep.mubr.f32.mxu0 0.0
        %3899 = vmatmul.mubr.f32.gmra.mrb[0].mxu0 %v3779
        %v3900 = vpop.f32.mrb[0].mxu0
        %v3901 = vadd.f32 0.0, %v3900
        %v3902 = vpop.f32.mrb[0].mxu0
        %3903 = vmatprep.mubr.f32.mxu0 0.0
        %3904 = vmatmul.mubr.f32.gmra.mrb[0].mxu0 %v3782
        %v3905 = vpop.f32.mrb[0].mxu0
        %v3906 = vadd.f32 0.0, %v3905
        %v3907 = vpop.f32.mrb[0].mxu0
        %3908 = vmatprep.mubr.f32.mxu0 0.0
        %3909 = vmatmul.mubr.f32.gmra.mrb[0].mxu0 %v3785
        %v3910 = vpop.f32.mrb[0].mxu0
        %v3911 = vadd.f32 0.0, %v3910
        %v3912 = vpop.f32.mrb[0].mxu0
        %3913 = vmatprep.mubr.f32.mxu0 0.0
        %3914 = vmatmul.mubr.f32.gmra.mrb[0].mxu0 %v3788
        %v3915 = vpop.f32.mrb[0].mxu0
        %v3916 = vadd.f32 0.0, %v3915
        %v3917 = vpop.f32.mrb[0].mxu0
        %3918 = vmatprep.mubr.f32.mxu0 0.0
        %3919 = vmatmul.mubr.f32.gmra.mrb[0].mxu0 %v3791
        %v3920 = vpop.f32.mrb[0].mxu0
        %v3921 = vadd.f32 0.0, %v3920
        %v3922 = vpop.f32.mrb[0].mxu0
        %3923 = vmatprep.mubr.f32.mxu0 0.0
        %3924 = vmatmul.mubr.f32.gmra.mrb[0].mxu0 %v3794
        %v3925 = vpop.f32.mrb[0].mxu0
        %v3926 = vadd.f32 0.0, %v3925
        %v3927 = vpop.f32.mrb[0].mxu0
        %3928 = vmatprep.mubr.f32.mxu0 0.0
        %3929 = vmatmul.mubr.f32.gmra.mrb[0].mxu0 %v3797
        %v3930 = vpop.f32.mrb[0].mxu0
        %v3931 = vadd.f32 0.0, %v3930
        %v3932 = vpop.f32.mrb[0].mxu0
        %3933 = vmatprep.mubr.f32.mxu0 0.0
        %3934 = vmatmul.mubr.f32.gmra.mrb[0].mxu0 %v3800
        %v3935 = vpop.f32.mrb[0].mxu0
        %v3936 = vadd.f32 0.0, %v3935
        %v3937 = vpop.f32.mrb[0].mxu0
        %3938 = vmatprep.mubr.f32.mxu0 0.0
        %3939 = vmatmul.mubr.f32.gmra.mrb[0].mxu0 %v3803
        %v3940 = vpop.f32.mrb[0].mxu0
        %v3941 = vadd.f32 0.0, %v3940
        %v3942 = vpop.f32.mrb[0].mxu0
        %3943 = vmatprep.mubr.f32.mxu0 0.0
        %3944 = vmatmul.mubr.f32.gmra.mrb[0].mxu0 %v3806
        %v3945 = vpop.f32.mrb[0].mxu0
        %v3946 = vadd.f32 0.0, %v3945
        %v3947 = vpop.f32.mrb[0].mxu0
        %3948 = vmatprep.mubr.f32.mxu0 0.0
        %3949 = vmatmul.mubr.f32.gmra.mrb[0].mxu0 %v3809
        %v3950 = vpop.f32.mrb[0].mxu0
        %v3951 = vadd.f32 0.0, %v3950
        %v3952 = vpop.f32.mrb[0].mxu0
        %3953 = vmatprep.mubr.f32.mxu0 0.0
        %3954 = vmatmul.mubr.f32.gmra.mrb[0].mxu0 %v3812
        %v3955 = vpop.f32.mrb[0].mxu0
        %v3956 = vadd.f32 0.0, %v3955
        %v3957 = vpop.f32.mrb[0].mxu0
        %3958 = vdwg.mxu0
        %v3959 = vadd.f32 %v3742, %v3881
        %v3960 = vadd.f32 %v3743, %v3886
        %v3961 = vadd.f32 %v3744, %v3891
        %v3962 = vadd.f32 %v3745, %v3896
        %v3963 = vadd.f32 %v3746, %v3901
        %v3964 = vadd.f32 %v3747, %v3906
        %v3965 = vadd.f32 %v3748, %v3911
        %v3966 = vadd.f32 %v3749, %v3916
        %v3967 = vadd.f32 %v3750, %v3921
        %v3968 = vadd.f32 %v3751, %v3926
        %v3969 = vadd.f32 %v3752, %v3931
        %v3970 = vadd.f32 %v3753, %v3936
        %v3971 = vadd.f32 %v3754, %v3941
        %v3972 = vadd.f32 %v3755, %v3946
        %v3973 = vadd.f32 %v3756, %v3951
        %v3974 = vadd.f32 %v3757, %v3956
        %v3975 = vld [vmem:[#allocation7] sm:$0x1]
        %v3977 = vlaneseq
        %v3978 = vshrl.u32 %v3977, 7
        %v3979 = vsub.s32 0, %v3978
        %v3980 = vrot.slane %v3975, %v3979
        %v3982 = vadd.f32 %v3959, %v3980
        %v3983 = vadd.f32 %v3960, %v3980
        %v3984 = vadd.f32 %v3961, %v3980
        %v3985 = vadd.f32 %v3962, %v3980
        %v3986 = vadd.f32 %v3963, %v3980
        %v3987 = vadd.f32 %v3964, %v3980
        %v3988 = vadd.f32 %v3965, %v3980
        %v3989 = vadd.f32 %v3966, %v3980
        %v3990 = vadd.f32 %v3967, %v3980
        %v3991 = vadd.f32 %v3968, %v3980
        %v3992 = vadd.f32 %v3969, %v3980
        %v3993 = vadd.f32 %v3970, %v3980
        %v3994 = vadd.f32 %v3971, %v3980
        %v3995 = vadd.f32 %v3972, %v3980
        %v3996 = vadd.f32 %v3973, %v3980
        %v3997 = vadd.f32 %v3974, %v3980
        %v3998 = vmax.f32 %v3982, 0.0
        %v3999 = vmax.f32 %v3983, 0.0
        %v4000 = vmax.f32 %v3984, 0.0
        %v4001 = vmax.f32 %v3985, 0.0
        %v4002 = vmax.f32 %v3986, 0.0
        %v4003 = vmax.f32 %v3987, 0.0
        %v4004 = vmax.f32 %v3988, 0.0
        %v4005 = vmax.f32 %v3989, 0.0
        %v4006 = vmax.f32 %v3990, 0.0
        %v4007 = vmax.f32 %v3991, 0.0
        %v4008 = vmax.f32 %v3992, 0.0
        %v4009 = vmax.f32 %v3993, 0.0
        %v4010 = vmax.f32 %v3994, 0.0
        %v4011 = vmax.f32 %v3995, 0.0
        %v4012 = vmax.f32 %v3996, 0.0
        %v4013 = vmax.f32 %v3997, 0.0
        %v4014 = vld [vmem:[#allocation11] sm:$0xff]
        %v4015 = vld [vmem:[#allocation11 + $0x8] sm:$0xff]
        %v4016 = vld [vmem:[#allocation11 + $0x10] sm:$0xff]
        %v4017 = vld [vmem:[#allocation11 + $0x18] sm:$0xff]
        %v4018 = vld [vmem:[#allocation11 + $0x20] sm:$0xff]
        %v4019 = vld [vmem:[#allocation11 + $0x28] sm:$0xff]
        %v4020 = vld [vmem:[#allocation11 + $0x30] sm:$0xff]
        %v4021 = vld [vmem:[#allocation11 + $0x38] sm:$0xff]
        %v4022 = vld [vmem:[#allocation11 + $0x40] sm:$0xff]
        %v4023 = vld [vmem:[#allocation11 + $0x48] sm:$0xff]
        %v4024 = vld [vmem:[#allocation11 + $0x50] sm:$0xff]
        %v4025 = vld [vmem:[#allocation11 + $0x58] sm:$0xff]
        %v4026 = vld [vmem:[#allocation11 + $0x60] sm:$0xff]
        %v4027 = vld [vmem:[#allocation11 + $0x68] sm:$0xff]
        %v4028 = vld [vmem:[#allocation11 + $0x70] sm:$0xff]
        %v4029 = vld [vmem:[#allocation11 + $0x78] sm:$0xff]
        %4030 = vmatprep.subr.mxu0 0.0
        %4031 = vmatpush1.msra.mxu0 %v3998
        %4032 = vmatprep.subr.mxu0 0.0
        %4033 = vmatpush1.msra.mxu0 %v3999
        %4034 = vmatprep.subr.mxu0 0.0
        %4035 = vmatpush1.msra.mxu0 %v4000
        %4036 = vmatprep.subr.mxu0 0.0
        %4037 = vmatpush1.msra.mxu0 %v4001
        %4038 = vmatprep.subr.mxu0 0.0
        %4039 = vmatpush1.msra.mxu0 %v4002
        %4040 = vmatprep.subr.mxu0 0.0
        %4041 = vmatpush1.msra.mxu0 %v4003
        %4042 = vmatprep.subr.mxu0 0.0
        %4043 = vmatpush1.msra.mxu0 %v4004
        %4044 = vmatprep.subr.mxu0 0.0
        %4045 = vmatpush1.msra.mxu0 %v4005
        %4046 = vmatprep.subr.mxu0 0.0
        %4047 = vmatpush1.msra.mxu0 %v4006
        %4048 = vmatprep.subr.mxu0 0.0
        %4049 = vmatpush1.msra.mxu0 %v4007
        %4050 = vmatprep.subr.mxu0 0.0
        %4051 = vmatpush1.msra.mxu0 %v4008
        %4052 = vmatprep.subr.mxu0 0.0
        %4053 = vmatpush1.msra.mxu0 %v4009
        %4054 = vmatprep.subr.mxu0 0.0
        %4055 = vmatpush1.msra.mxu0 %v4010
        %4056 = vmatprep.subr.mxu0 0.0
        %4057 = vmatpush1.msra.mxu0 %v4011
        %4058 = vmatprep.subr.mxu0 0.0
        %4059 = vmatpush1.msra.mxu0 %v4012
        %4060 = vmatprep.subr.mxu0 0.0
        %4061 = vmatpush1.msra.mxu0 %v4013
        %4062 = vmatprep.subr.mxu0 0.0
        %4063 = vmatpush1.msra.mxu0 0.0
        %4064 = vmatprep.subr.mxu0 0.0
        %4065 = vmatpush1.msra.mxu0 0.0
        %4066 = vmatprep.subr.mxu0 0.0
        %4067 = vmatpush1.msra.mxu0 0.0
        %4068 = vmatprep.subr.mxu0 0.0
        %4069 = vmatpush1.msra.mxu0 0.0
        %4070 = vmatprep.subr.mxu0 0.0
        %4071 = vmatpush1.msra.mxu0 0.0
        %4072 = vmatprep.subr.mxu0 0.0
        %4073 = vmatpush1.msra.mxu0 0.0
        %4074 = vmatprep.subr.mxu0 0.0
        %4075 = vmatpush1.msra.mxu0 0.0
        %4076 = vmatprep.subr.mxu0 0.0
        %4077 = vmatpush1.msra.mxu0 0.0
        %4078 = vmatprep.subr.mxu0 0.0
        %4079 = vmatpush1.msra.mxu0 0.0
        %4080 = vmatprep.subr.mxu0 0.0
        %4081 = vmatpush1.msra.mxu0 0.0
        %4082 = vmatprep.subr.mxu0 0.0
        %4083 = vmatpush1.msra.mxu0 0.0
        %4084 = vmatprep.subr.mxu0 0.0
        %4085 = vmatpush1.msra.mxu0 0.0
        %4086 = vmatprep.subr.mxu0 0.0
        %4087 = vmatpush1.msra.mxu0 0.0
        %4088 = vmatprep.subr.mxu0 0.0
        %4089 = vmatpush1.msra.mxu0 0.0
        %4090 = vmatprep.subr.mxu0 0.0
        %4091 = vmatpush1.msra.mxu0 0.0
        %4092 = vmatprep.subr.mxu0 0.0
        %4093 = vmatpush1.msra.mxu0 0.0
        %4094 = vmatprep.mubr.f32.mxu0 0.0
        %4095 = vmatmul.mubr.f32.gmra.mrb[0].mxu0 %v4014
        %v4096 = vpop.f32.mrb[0].mxu0
        %v4097 = vadd.f32 0.0, %v4096
        %v4098 = vpop.f32.mrb[0].mxu0
        %4099 = vmatprep.mubr.f32.mxu0 0.0
        %4100 = vmatmul.mubr.f32.gmra.mrb[0].mxu0 %v4015
        %v4101 = vpop.f32.mrb[0].mxu0
        %v4102 = vadd.f32 0.0, %v4101
        %v4103 = vpop.f32.mrb[0].mxu0
        %4104 = vmatprep.mubr.f32.mxu0 0.0
        %4105 = vmatmul.mubr.f32.gmra.mrb[0].mxu0 %v4016
        %v4106 = vpop.f32.mrb[0].mxu0
        %v4107 = vadd.f32 0.0, %v4106
        %v4108 = vpop.f32.mrb[0].mxu0
        %4109 = vmatprep.mubr.f32.mxu0 0.0
        %4110 = vmatmul.mubr.f32.gmra.mrb[0].mxu0 %v4017
        %v4111 = vpop.f32.mrb[0].mxu0
        %v4112 = vadd.f32 0.0, %v4111
        %v4113 = vpop.f32.mrb[0].mxu0
        %4114 = vmatprep.mubr.f32.mxu0 0.0
        %4115 = vmatmul.mubr.f32.gmra.mrb[0].mxu0 %v4018
        %v4116 = vpop.f32.mrb[0].mxu0
        %v4117 = vadd.f32 0.0, %v4116
        %v4118 = vpop.f32.mrb[0].mxu0
        %4119 = vmatprep.mubr.f32.mxu0 0.0
        %4120 = vmatmul.mubr.f32.gmra.mrb[0].mxu0 %v4019
        %v4121 = vpop.f32.mrb[0].mxu0
        %v4122 = vadd.f32 0.0, %v4121
        %v4123 = vpop.f32.mrb[0].mxu0
        %4124 = vmatprep.mubr.f32.mxu0 0.0
        %4125 = vmatmul.mubr.f32.gmra.mrb[0].mxu0 %v4020
        %v4126 = vpop.f32.mrb[0].mxu0
        %v4127 = vadd.f32 0.0, %v4126
        %v4128 = vpop.f32.mrb[0].mxu0
        %4129 = vmatprep.mubr.f32.mxu0 0.0
        %4130 = vmatmul.mubr.f32.gmra.mrb[0].mxu0 %v4021
        %v4131 = vpop.f32.mrb[0].mxu0
        %v4132 = vadd.f32 0.0, %v4131
        %v4133 = vpop.f32.mrb[0].mxu0
        %4134 = vmatprep.mubr.f32.mxu0 0.0
        %4135 = vmatmul.mubr.f32.gmra.mrb[0].mxu0 %v4022
        %v4136 = vpop.f32.mrb[0].mxu0
        %v4137 = vadd.f32 0.0, %v4136
        %v4138 = vpop.f32.mrb[0].mxu0
        %4139 = vmatprep.mubr.f32.mxu0 0.0
        %4140 = vmatmul.mubr.f32.gmra.mrb[0].mxu0 %v4023
        %v4141 = vpop.f32.mrb[0].mxu0
        %v4142 = vadd.f32 0.0, %v4141
        %v4143 = vpop.f32.mrb[0].mxu0
        %4144 = vmatprep.mubr.f32.mxu0 0.0
        %4145 = vmatmul.mubr.f32.gmra.mrb[0].mxu0 %v4024
        %v4146 = vpop.f32.mrb[0].mxu0
        %v4147 = vadd.f32 0.0, %v4146
        %v4148 = vpop.f32.mrb[0].mxu0
        %4149 = vmatprep.mubr.f32.mxu0 0.0
        %4150 = vmatmul.mubr.f32.gmra.mrb[0].mxu0 %v4025
        %v4151 = vpop.f32.mrb[0].mxu0
        %v4152 = vadd.f32 0.0, %v4151
        %v4153 = vpop.f32.mrb[0].mxu0
        %4154 = vmatprep.mubr.f32.mxu0 0.0
        %4155 = vmatmul.mubr.f32.gmra.mrb[0].mxu0 %v4026
        %v4156 = vpop.f32.mrb[0].mxu0
        %v4157 = vadd.f32 0.0, %v4156
        %v4158 = vpop.f32.mrb[0].mxu0
        %4159 = vmatprep.mubr.f32.mxu0 0.0
        %4160 = vmatmul.mubr.f32.gmra.mrb[0].mxu0 %v4027
        %v4161 = vpop.f32.mrb[0].mxu0
        %v4162 = vadd.f32 0.0, %v4161
        %v4163 = vpop.f32.mrb[0].mxu0
        %4164 = vmatprep.mubr.f32.mxu0 0.0
        %4165 = vmatmul.mubr.f32.gmra.mrb[0].mxu0 %v4028
        %v4166 = vpop.f32.mrb[0].mxu0
        %v4167 = vadd.f32 0.0, %v4166
        %v4168 = vpop.f32.mrb[0].mxu0
        %4169 = vmatprep.mubr.f32.mxu0 0.0
        %4170 = vmatmul.mubr.f32.gmra.mrb[0].mxu0 %v4029
        %v4171 = vpop.f32.mrb[0].mxu0
        %v4172 = vadd.f32 0.0, %v4171
        %v4173 = vpop.f32.mrb[0].mxu0
        %4174 = vdwg.mxu0
        %v4175 = vld [vmem:[%s5] sm:$0xff]
        %v4176 = vld [vmem:[%s5 + $0x8] sm:$0xff]
        %v4177 = vld [vmem:[%s5 + $0x10] sm:$0xff]
        %v4178 = vld [vmem:[%s5 + $0x18] sm:$0xff]
        %v4179 = vld [vmem:[%s5 + $0x20] sm:$0xff]
        %v4180 = vld [vmem:[%s5 + $0x28] sm:$0xff]
        %v4181 = vld [vmem:[%s5 + $0x30] sm:$0xff]
        %v4182 = vld [vmem:[%s5 + $0x38] sm:$0xff]
        %v4183 = vld [vmem:[%s5 + $0x40] sm:$0xff]
        %v4184 = vld [vmem:[%s5 + $0x48] sm:$0xff]
        %v4185 = vld [vmem:[%s5 + $0x50] sm:$0xff]
        %v4186 = vld [vmem:[%s5 + $0x58] sm:$0xff]
        %v4187 = vld [vmem:[%s5 + $0x60] sm:$0xff]
        %v4188 = vld [vmem:[%s5 + $0x68] sm:$0xff]
        %v4189 = vld [vmem:[%s5 + $0x70] sm:$0xff]
        %v4190 = vld [vmem:[%s5 + $0x78] sm:$0xff]
        %v4192 = vsel %vm3154, %v4117, 0
        %v4195 = vsel %vm3154, %v4122, 0
        %v4198 = vsel %vm3154, %v4127, 0
        %v4201 = vsel %vm3154, %v4132, 0
        %4203 = vmatprep.subr.mxu0 0.0
        %4204 = vmatpush1.msra.mxu0 %v4183
        %4205 = vmatprep.subr.mxu0 0.0
        %4206 = vmatpush1.msra.mxu0 %v4184
        %4207 = vmatprep.subr.mxu0 0.0
        %4208 = vmatpush1.msra.mxu0 %v4185
        %4209 = vmatprep.subr.mxu0 0.0
        %4210 = vmatpush1.msra.mxu0 %v4186
        %4211 = vmatprep.subr.mxu0 0.0
        %4212 = vmatpush1.msra.mxu0 %v4187
        %4213 = vmatprep.subr.mxu0 0.0
        %4214 = vmatpush1.msra.mxu0 %v4188
        %4215 = vmatprep.subr.mxu0 0.0
        %4216 = vmatpush1.msra.mxu0 %v4189
        %4217 = vmatprep.subr.mxu0 0.0
        %4218 = vmatpush1.msra.mxu0 %v4190
        %4219 = vmatprep.subr.mxu0 0.0
        %4220 = vmatpush1.msra.mxu0 0.0
        %4221 = vmatprep.subr.mxu0 0.0
        %4222 = vmatpush1.msra.mxu0 0.0
        %4223 = vmatprep.subr.mxu0 0.0
        %4224 = vmatpush1.msra.mxu0 0.0
        %4225 = vmatprep.subr.mxu0 0.0
        %4226 = vmatpush1.msra.mxu0 0.0
        %4227 = vmatprep.subr.mxu0 0.0
        %4228 = vmatpush1.msra.mxu0 0.0
        %4229 = vmatprep.subr.mxu0 0.0
        %4230 = vmatpush1.msra.mxu0 0.0
        %4231 = vmatprep.subr.mxu0 0.0
        %4232 = vmatpush1.msra.mxu0 0.0
        %4233 = vmatprep.subr.mxu0 0.0
        %4234 = vmatpush1.msra.mxu0 0.0
        %4235 = vmatprep.subr.mxu0 0.0
        %4236 = vmatpush1.msra.mxu0 0.0
        %4237 = vmatprep.subr.mxu0 0.0
        %4238 = vmatpush1.msra.mxu0 0.0
        %4239 = vmatprep.subr.mxu0 0.0
        %4240 = vmatpush1.msra.mxu0 0.0
        %4241 = vmatprep.subr.mxu0 0.0
        %4242 = vmatpush1.msra.mxu0 0.0
        %4243 = vmatprep.subr.mxu0 0.0
        %4244 = vmatpush1.msra.mxu0 0.0
        %4245 = vmatprep.subr.mxu0 0.0
        %4246 = vmatpush1.msra.mxu0 0.0
        %4247 = vmatprep.subr.mxu0 0.0
        %4248 = vmatpush1.msra.mxu0 0.0
        %4249 = vmatprep.subr.mxu0 0.0
        %4250 = vmatpush1.msra.mxu0 0.0
        %4251 = vmatprep.subr.mxu0 0.0
        %4252 = vmatpush1.msra.mxu0 0.0
        %4253 = vmatprep.subr.mxu0 0.0
        %4254 = vmatpush1.msra.mxu0 0.0
        %4255 = vmatprep.subr.mxu0 0.0
        %4256 = vmatpush1.msra.mxu0 0.0
        %4257 = vmatprep.subr.mxu0 0.0
        %4258 = vmatpush1.msra.mxu0 0.0
        %4259 = vmatprep.subr.mxu0 0.0
        %4260 = vmatpush1.msra.mxu0 0.0
        %4261 = vmatprep.subr.mxu0 0.0
        %4262 = vmatpush1.msra.mxu0 0.0
        %4263 = vmatprep.subr.mxu0 0.0
        %4264 = vmatpush1.msra.mxu0 0.0
        %4265 = vmatprep.subr.mxu0 0.0
        %4266 = vmatpush1.msra.mxu0 0.0
        %4267 = vmatprep.mubr.f32.mxu0 0.0
        %4268 = vmatmul.mubr.f32.gmra.mrb[0].mxu0 %v4192
        %v4269 = vpop.f32.mrb[0].mxu0
        %v4270 = vadd.f32 0.0, %v4269
        %v4271 = vpop.f32.mrb[0].mxu0
        %4272 = vmatprep.mubr.f32.mxu0 0.0
        %4273 = vmatmul.mubr.f32.gmra.mrb[0].mxu0 %v4195
        %v4274 = vpop.f32.mrb[0].mxu0
        %v4275 = vadd.f32 0.0, %v4274
        %v4276 = vpop.f32.mrb[0].mxu0
        %4277 = vmatprep.mubr.f32.mxu0 0.0
        %4278 = vmatmul.mubr.f32.gmra.mrb[0].mxu0 %v4198
        %v4279 = vpop.f32.mrb[0].mxu0
        %v4280 = vadd.f32 0.0, %v4279
        %v4281 = vpop.f32.mrb[0].mxu0
        %4282 = vmatprep.mubr.f32.mxu0 0.0
        %4283 = vmatmul.mubr.f32.gmra.mrb[0].mxu0 %v4201
        %v4284 = vpop.f32.mrb[0].mxu0
        %v4285 = vadd.f32 0.0, %v4284
        %v4286 = vpop.f32.mrb[0].mxu0
        %4287 = vdwg.mxu0
        %v4289 = vsel %vm3154, %v4097, 0
        %v4292 = vsel %vm3154, %v4102, 0
        %v4295 = vsel %vm3154, %v4107, 0
        %v4298 = vsel %vm3154, %v4112, 0
        %4300 = vmatprep.subr.mxu0 0.0
        %4301 = vmatpush1.msra.mxu0 %v4175
        %4302 = vmatprep.subr.mxu0 0.0
        %4303 = vmatpush1.msra.mxu0 %v4176
        %4304 = vmatprep.subr.mxu0 0.0
        %4305 = vmatpush1.msra.mxu0 %v4177
        %4306 = vmatprep.subr.mxu0 0.0
        %4307 = vmatpush1.msra.mxu0 %v4178
        %4308 = vmatprep.subr.mxu0 0.0
        %4309 = vmatpush1.msra.mxu0 %v4179
        %4310 = vmatprep.subr.mxu0 0.0
        %4311 = vmatpush1.msra.mxu0 %v4180
        %4312 = vmatprep.subr.mxu0 0.0
        %4313 = vmatpush1.msra.mxu0 %v4181
        %4314 = vmatprep.subr.mxu0 0.0
        %4315 = vmatpush1.msra.mxu0 %v4182
        %4316 = vmatprep.subr.mxu0 0.0
        %4317 = vmatpush1.msra.mxu0 0.0
        %4318 = vmatprep.subr.mxu0 0.0
        %4319 = vmatpush1.msra.mxu0 0.0
        %4320 = vmatprep.subr.mxu0 0.0
        %4321 = vmatpush1.msra.mxu0 0.0
        %4322 = vmatprep.subr.mxu0 0.0
        %4323 = vmatpush1.msra.mxu0 0.0
        %4324 = vmatprep.subr.mxu0 0.0
        %4325 = vmatpush1.msra.mxu0 0.0
        %4326 = vmatprep.subr.mxu0 0.0
        %4327 = vmatpush1.msra.mxu0 0.0
        %4328 = vmatprep.subr.mxu0 0.0
        %4329 = vmatpush1.msra.mxu0 0.0
        %4330 = vmatprep.subr.mxu0 0.0
        %4331 = vmatpush1.msra.mxu0 0.0
        %4332 = vmatprep.subr.mxu0 0.0
        %4333 = vmatpush1.msra.mxu0 0.0
        %4334 = vmatprep.subr.mxu0 0.0
        %4335 = vmatpush1.msra.mxu0 0.0
        %4336 = vmatprep.subr.mxu0 0.0
        %4337 = vmatpush1.msra.mxu0 0.0
        %4338 = vmatprep.subr.mxu0 0.0
        %4339 = vmatpush1.msra.mxu0 0.0
        %4340 = vmatprep.subr.mxu0 0.0
        %4341 = vmatpush1.msra.mxu0 0.0
        %4342 = vmatprep.subr.mxu0 0.0
        %4343 = vmatpush1.msra.mxu0 0.0
        %4344 = vmatprep.subr.mxu0 0.0
        %4345 = vmatpush1.msra.mxu0 0.0
        %4346 = vmatprep.subr.mxu0 0.0
        %4347 = vmatpush1.msra.mxu0 0.0
        %4348 = vmatprep.subr.mxu0 0.0
        %4349 = vmatpush1.msra.mxu0 0.0
        %4350 = vmatprep.subr.mxu0 0.0
        %4351 = vmatpush1.msra.mxu0 0.0
        %4352 = vmatprep.subr.mxu0 0.0
        %4353 = vmatpush1.msra.mxu0 0.0
        %4354 = vmatprep.subr.mxu0 0.0
        %4355 = vmatpush1.msra.mxu0 0.0
        %4356 = vmatprep.subr.mxu0 0.0
        %4357 = vmatpush1.msra.mxu0 0.0
        %4358 = vmatprep.subr.mxu0 0.0
        %4359 = vmatpush1.msra.mxu0 0.0
        %4360 = vmatprep.subr.mxu0 0.0
        %4361 = vmatpush1.msra.mxu0 0.0
        %4362 = vmatprep.subr.mxu0 0.0
        %4363 = vmatpush1.msra.mxu0 0.0
        %4364 = vmatprep.mubr.f32.mxu0 0.0
        %4365 = vmatmul.mubr.f32.gmra.mrb[0].mxu0 %v4289
        %v4366 = vpop.f32.mrb[0].mxu0
        %v4367 = vadd.f32 %v4270, %v4366
        %v4368 = vpop.f32.mrb[0].mxu0
        %4369 = vmatprep.mubr.f32.mxu0 0.0
        %4370 = vmatmul.mubr.f32.gmra.mrb[0].mxu0 %v4292
        %v4371 = vpop.f32.mrb[0].mxu0
        %v4372 = vadd.f32 %v4275, %v4371
        %v4373 = vpop.f32.mrb[0].mxu0
        %4374 = vmatprep.mubr.f32.mxu0 0.0
        %4375 = vmatmul.mubr.f32.gmra.mrb[0].mxu0 %v4295
        %v4376 = vpop.f32.mrb[0].mxu0
        %v4377 = vadd.f32 %v4280, %v4376
        %v4378 = vpop.f32.mrb[0].mxu0
        %4379 = vmatprep.mubr.f32.mxu0 0.0
        %4380 = vmatmul.mubr.f32.gmra.mrb[0].mxu0 %v4298
        %v4381 = vpop.f32.mrb[0].mxu0
        %v4382 = vadd.f32 %v4285, %v4381
        %v4383 = vpop.f32.mrb[0].mxu0
        %4384 = vdwg.mxu0
        %v4385 = vld [vmem:[%s5 + $0x80] sm:$0xff]
        %v4386 = vld [vmem:[%s5 + $0x88] sm:$0xff]
        %v4387 = vld [vmem:[%s5 + $0x90] sm:$0xff]
        %v4388 = vld [vmem:[%s5 + $0x98] sm:$0xff]
        %v4389 = vld [vmem:[%s5 + $0xa0] sm:$0xff]
        %v4390 = vld [vmem:[%s5 + $0xa8] sm:$0xff]
        %v4391 = vld [vmem:[%s5 + $0xb0] sm:$0xff]
        %v4392 = vld [vmem:[%s5 + $0xb8] sm:$0xff]
        %v4394 = vsel %vm3154, %v4137, 0
        %v4397 = vsel %vm3154, %v4142, 0
        %v4400 = vsel %vm3154, %v4147, 0
        %v4403 = vsel %vm3154, %v4152, 0
        %4405 = vmatprep.subr.mxu0 0.0
        %4406 = vmatpush1.msra.mxu0 %v4385
        %4407 = vmatprep.subr.mxu0 0.0
        %4408 = vmatpush1.msra.mxu0 %v4386
        %4409 = vmatprep.subr.mxu0 0.0
        %4410 = vmatpush1.msra.mxu0 %v4387
        %4411 = vmatprep.subr.mxu0 0.0
        %4412 = vmatpush1.msra.mxu0 %v4388
        %4413 = vmatprep.subr.mxu0 0.0
        %4414 = vmatpush1.msra.mxu0 %v4389
        %4415 = vmatprep.subr.mxu0 0.0
        %4416 = vmatpush1.msra.mxu0 %v4390
        %4417 = vmatprep.subr.mxu0 0.0
        %4418 = vmatpush1.msra.mxu0 %v4391
        %4419 = vmatprep.subr.mxu0 0.0
        %4420 = vmatpush1.msra.mxu0 %v4392
        %4421 = vmatprep.subr.mxu0 0.0
        %4422 = vmatpush1.msra.mxu0 0.0
        %4423 = vmatprep.subr.mxu0 0.0
        %4424 = vmatpush1.msra.mxu0 0.0
        %4425 = vmatprep.subr.mxu0 0.0
        %4426 = vmatpush1.msra.mxu0 0.0
        %4427 = vmatprep.subr.mxu0 0.0
        %4428 = vmatpush1.msra.mxu0 0.0
        %4429 = vmatprep.subr.mxu0 0.0
        %4430 = vmatpush1.msra.mxu0 0.0
        %4431 = vmatprep.subr.mxu0 0.0
        %4432 = vmatpush1.msra.mxu0 0.0
        %4433 = vmatprep.subr.mxu0 0.0
        %4434 = vmatpush1.msra.mxu0 0.0
        %4435 = vmatprep.subr.mxu0 0.0
        %4436 = vmatpush1.msra.mxu0 0.0
        %4437 = vmatprep.subr.mxu0 0.0
        %4438 = vmatpush1.msra.mxu0 0.0
        %4439 = vmatprep.subr.mxu0 0.0
        %4440 = vmatpush1.msra.mxu0 0.0
        %4441 = vmatprep.subr.mxu0 0.0
        %4442 = vmatpush1.msra.mxu0 0.0
        %4443 = vmatprep.subr.mxu0 0.0
        %4444 = vmatpush1.msra.mxu0 0.0
        %4445 = vmatprep.subr.mxu0 0.0
        %4446 = vmatpush1.msra.mxu0 0.0
        %4447 = vmatprep.subr.mxu0 0.0
        %4448 = vmatpush1.msra.mxu0 0.0
        %4449 = vmatprep.subr.mxu0 0.0
        %4450 = vmatpush1.msra.mxu0 0.0
        %4451 = vmatprep.subr.mxu0 0.0
        %4452 = vmatpush1.msra.mxu0 0.0
        %4453 = vmatprep.subr.mxu0 0.0
        %4454 = vmatpush1.msra.mxu0 0.0
        %4455 = vmatprep.subr.mxu0 0.0
        %4456 = vmatpush1.msra.mxu0 0.0
        %4457 = vmatprep.subr.mxu0 0.0
        %4458 = vmatpush1.msra.mxu0 0.0
        %4459 = vmatprep.subr.mxu0 0.0
        %4460 = vmatpush1.msra.mxu0 0.0
        %4461 = vmatprep.subr.mxu0 0.0
        %4462 = vmatpush1.msra.mxu0 0.0
        %4463 = vmatprep.subr.mxu0 0.0
        %4464 = vmatpush1.msra.mxu0 0.0
        %4465 = vmatprep.subr.mxu0 0.0
        %4466 = vmatpush1.msra.mxu0 0.0
        %4467 = vmatprep.subr.mxu0 0.0
        %4468 = vmatpush1.msra.mxu0 0.0
        %4469 = vmatprep.mubr.f32.mxu0 0.0
        %4470 = vmatmul.mubr.f32.gmra.mrb[0].mxu0 %v4394
        %v4471 = vpop.f32.mrb[0].mxu0
        %v4472 = vadd.f32 0.0, %v4471
        %v4473 = vpop.f32.mrb[0].mxu0
        %4474 = vmatprep.mubr.f32.mxu0 0.0
        %4475 = vmatmul.mubr.f32.gmra.mrb[0].mxu0 %v4397
        %v4476 = vpop.f32.mrb[0].mxu0
        %v4477 = vadd.f32 0.0, %v4476
        %v4478 = vpop.f32.mrb[0].mxu0
        %4479 = vmatprep.mubr.f32.mxu0 0.0
        %4480 = vmatmul.mubr.f32.gmra.mrb[0].mxu0 %v4400
        %v4481 = vpop.f32.mrb[0].mxu0
        %v4482 = vadd.f32 0.0, %v4481
        %v4483 = vpop.f32.mrb[0].mxu0
        %4484 = vmatprep.mubr.f32.mxu0 0.0
        %4485 = vmatmul.mubr.f32.gmra.mrb[0].mxu0 %v4403
        %v4486 = vpop.f32.mrb[0].mxu0
        %v4487 = vadd.f32 0.0, %v4486
        %v4488 = vpop.f32.mrb[0].mxu0
        %4489 = vdwg.mxu0
        %v4490 = vadd.f32 %v4367, %v4472
        %v4491 = vadd.f32 %v4372, %v4477
        %v4492 = vadd.f32 %v4377, %v4482
        %v4493 = vadd.f32 %v4382, %v4487
        %v4494 = vld [vmem:[%s5 + $0xc0] sm:$0xff]
        %v4495 = vld [vmem:[%s5 + $0xc8] sm:$0xff]
        %v4496 = vld [vmem:[%s5 + $0xd0] sm:$0xff]
        %v4497 = vld [vmem:[%s5 + $0xd8] sm:$0xff]
        %v4498 = vld [vmem:[%s5 + $0xe0] sm:$0xff]
        %v4499 = vld [vmem:[%s5 + $0xe8] sm:$0xff]
        %v4500 = vld [vmem:[%s5 + $0xf0] sm:$0xff]
        %v4501 = vld [vmem:[%s5 + $0xf8] sm:$0xff]
        %v4503 = vsel %vm3154, %v4157, 0
        %v4506 = vsel %vm3154, %v4162, 0
        %v4509 = vsel %vm3154, %v4167, 0
        %v4512 = vsel %vm3154, %v4172, 0
        %4514 = vmatprep.subr.mxu0 0.0
        %4515 = vmatpush1.msra.mxu0 %v4494
        %4516 = vmatprep.subr.mxu0 0.0
        %4517 = vmatpush1.msra.mxu0 %v4495
        %4518 = vmatprep.subr.mxu0 0.0
        %4519 = vmatpush1.msra.mxu0 %v4496
        %4520 = vmatprep.subr.mxu0 0.0
        %4521 = vmatpush1.msra.mxu0 %v4497
        %4522 = vmatprep.subr.mxu0 0.0
        %4523 = vmatpush1.msra.mxu0 %v4498
        %4524 = vmatprep.subr.mxu0 0.0
        %4525 = vmatpush1.msra.mxu0 %v4499
        %4526 = vmatprep.subr.mxu0 0.0
        %4527 = vmatpush1.msra.mxu0 %v4500
        %4528 = vmatprep.subr.mxu0 0.0
        %4529 = vmatpush1.msra.mxu0 %v4501
        %4530 = vmatprep.subr.mxu0 0.0
        %4531 = vmatpush1.msra.mxu0 0.0
        %4532 = vmatprep.subr.mxu0 0.0
        %4533 = vmatpush1.msra.mxu0 0.0
        %4534 = vmatprep.subr.mxu0 0.0
        %4535 = vmatpush1.msra.mxu0 0.0
        %4536 = vmatprep.subr.mxu0 0.0
        %4537 = vmatpush1.msra.mxu0 0.0
        %4538 = vmatprep.subr.mxu0 0.0
        %4539 = vmatpush1.msra.mxu0 0.0
        %4540 = vmatprep.subr.mxu0 0.0
        %4541 = vmatpush1.msra.mxu0 0.0
        %4542 = vmatprep.subr.mxu0 0.0
        %4543 = vmatpush1.msra.mxu0 0.0
        %4544 = vmatprep.subr.mxu0 0.0
        %4545 = vmatpush1.msra.mxu0 0.0
        %4546 = vmatprep.subr.mxu0 0.0
        %4547 = vmatpush1.msra.mxu0 0.0
        %4548 = vmatprep.subr.mxu0 0.0
        %4549 = vmatpush1.msra.mxu0 0.0
        %4550 = vmatprep.subr.mxu0 0.0
        %4551 = vmatpush1.msra.mxu0 0.0
        %4552 = vmatprep.subr.mxu0 0.0
        %4553 = vmatpush1.msra.mxu0 0.0
        %4554 = vmatprep.subr.mxu0 0.0
        %4555 = vmatpush1.msra.mxu0 0.0
        %4556 = vmatprep.subr.mxu0 0.0
        %4557 = vmatpush1.msra.mxu0 0.0
        %4558 = vmatprep.subr.mxu0 0.0
        %4559 = vmatpush1.msra.mxu0 0.0
        %4560 = vmatprep.subr.mxu0 0.0
        %4561 = vmatpush1.msra.mxu0 0.0
        %4562 = vmatprep.subr.mxu0 0.0
        %4563 = vmatpush1.msra.mxu0 0.0
        %4564 = vmatprep.subr.mxu0 0.0
        %4565 = vmatpush1.msra.mxu0 0.0
        %4566 = vmatprep.subr.mxu0 0.0
        %4567 = vmatpush1.msra.mxu0 0.0
        %4568 = vmatprep.subr.mxu0 0.0
        %4569 = vmatpush1.msra.mxu0 0.0
        %4570 = vmatprep.subr.mxu0 0.0
        %4571 = vmatpush1.msra.mxu0 0.0
        %4572 = vmatprep.subr.mxu0 0.0
        %4573 = vmatpush1.msra.mxu0 0.0
        %4574 = vmatprep.subr.mxu0 0.0
        %4575 = vmatpush1.msra.mxu0 0.0
        %4576 = vmatprep.subr.mxu0 0.0
        %4577 = vmatpush1.msra.mxu0 0.0
        %4578 = vmatprep.mubr.f32.mxu0 0.0
        %4579 = vmatmul.mubr.f32.gmra.mrb[0].mxu0 %v4503
        %v4580 = vpop.f32.mrb[0].mxu0
        %v4581 = vadd.f32 0.0, %v4580
        %v4582 = vpop.f32.mrb[0].mxu0
        %4583 = vmatprep.mubr.f32.mxu0 0.0
        %4584 = vmatmul.mubr.f32.gmra.mrb[0].mxu0 %v4506
        %v4585 = vpop.f32.mrb[0].mxu0
        %v4586 = vadd.f32 0.0, %v4585
        %v4587 = vpop.f32.mrb[0].mxu0
        %4588 = vmatprep.mubr.f32.mxu0 0.0
        %4589 = vmatmul.mubr.f32.gmra.mrb[0].mxu0 %v4509
        %v4590 = vpop.f32.mrb[0].mxu0
        %v4591 = vadd.f32 0.0, %v4590
        %v4592 = vpop.f32.mrb[0].mxu0
        %4593 = vmatprep.mubr.f32.mxu0 0.0
        %4594 = vmatmul.mubr.f32.gmra.mrb[0].mxu0 %v4512
        %v4595 = vpop.f32.mrb[0].mxu0
        %v4596 = vadd.f32 0.0, %v4595
        %v4597 = vpop.f32.mrb[0].mxu0
        %4598 = vdwg.mxu0
        %v4599 = vadd.f32 %v4490, %v4581
        %v4600 = vadd.f32 %v4491, %v4586
        %v4601 = vadd.f32 %v4492, %v4591
        %v4602 = vadd.f32 %v4493, %v4596
        %v4603 = vld [vmem:[#allocation8] sm:$0x1]
        %v4605 = vlaneseq
        %v4606 = vshrl.u32 %v4605, 7
        %v4607 = vsub.s32 0, %v4606
        %v4608 = vrot.slane %v4603, %v4607
        %v4610 = vadd.f32 %v4599, %v4608
        %v4611 = vadd.f32 %v4600, %v4608
        %v4612 = vadd.f32 %v4601, %v4608
        %v4613 = vadd.f32 %v4602, %v4608
        %v4614 = vmax.f32 %v4610, 0.0
        %v4615 = vmax.f32 %v4611, 0.0
        %v4616 = vmax.f32 %v4612, 0.0
        %v4617 = vmax.f32 %v4613, 0.0
        %v4618 = vld [vmem:[#allocation13] sm:$0xff]
        %v4619 = vld [vmem:[#allocation13 + $0x8] sm:$0xff]
        %v4620 = vld [vmem:[#allocation13 + $0x10] sm:$0xff]
        %v4621 = vld [vmem:[#allocation13 + $0x18] sm:$0xff]
        %vm4622 = vcmask 261120
        %v4624 = vsel %vm4622, %v4618, 0
        %v4627 = vsel %vm4622, %v4619, 0
        %v4630 = vsel %vm4622, %v4620, 0
        %v4633 = vsel %vm4622, %v4621, 0
        %4635 = vmatprep.subr.mxu0 0.0
        %4636 = vmatpush1.msra.mxu0 %v4614
        %4637 = vmatprep.subr.mxu0 0.0
        %4638 = vmatpush1.msra.mxu0 %v4615
        %4639 = vmatprep.subr.mxu0 0.0
        %4640 = vmatpush1.msra.mxu0 %v4616
        %4641 = vmatprep.subr.mxu0 0.0
        %4642 = vmatpush1.msra.mxu0 %v4617
        %4643 = vmatprep.subr.mxu0 0.0
        %4644 = vmatpush1.msra.mxu0 0.0
        %4645 = vmatprep.subr.mxu0 0.0
        %4646 = vmatpush1.msra.mxu0 0.0
        %4647 = vmatprep.subr.mxu0 0.0
        %4648 = vmatpush1.msra.mxu0 0.0
        %4649 = vmatprep.subr.mxu0 0.0
        %4650 = vmatpush1.msra.mxu0 0.0
        %4651 = vmatprep.subr.mxu0 0.0
        %4652 = vmatpush1.msra.mxu0 0.0
        %4653 = vmatprep.subr.mxu0 0.0
        %4654 = vmatpush1.msra.mxu0 0.0
        %4655 = vmatprep.subr.mxu0 0.0
        %4656 = vmatpush1.msra.mxu0 0.0
        %4657 = vmatprep.subr.mxu0 0.0
        %4658 = vmatpush1.msra.mxu0 0.0
        %4659 = vmatprep.subr.mxu0 0.0
        %4660 = vmatpush1.msra.mxu0 0.0
        %4661 = vmatprep.subr.mxu0 0.0
        %4662 = vmatpush1.msra.mxu0 0.0
        %4663 = vmatprep.subr.mxu0 0.0
        %4664 = vmatpush1.msra.mxu0 0.0
        %4665 = vmatprep.subr.mxu0 0.0
        %4666 = vmatpush1.msra.mxu0 0.0
        %4667 = vmatprep.subr.mxu0 0.0
        %4668 = vmatpush1.msra.mxu0 0.0
        %4669 = vmatprep.subr.mxu0 0.0
        %4670 = vmatpush1.msra.mxu0 0.0
        %4671 = vmatprep.subr.mxu0 0.0
        %4672 = vmatpush1.msra.mxu0 0.0
        %4673 = vmatprep.subr.mxu0 0.0
        %4674 = vmatpush1.msra.mxu0 0.0
        %4675 = vmatprep.subr.mxu0 0.0
        %4676 = vmatpush1.msra.mxu0 0.0
        %4677 = vmatprep.subr.mxu0 0.0
        %4678 = vmatpush1.msra.mxu0 0.0
        %4679 = vmatprep.subr.mxu0 0.0
        %4680 = vmatpush1.msra.mxu0 0.0
        %4681 = vmatprep.subr.mxu0 0.0
        %4682 = vmatpush1.msra.mxu0 0.0
        %4683 = vmatprep.subr.mxu0 0.0
        %4684 = vmatpush1.msra.mxu0 0.0
        %4685 = vmatprep.subr.mxu0 0.0
        %4686 = vmatpush1.msra.mxu0 0.0
        %4687 = vmatprep.subr.mxu0 0.0
        %4688 = vmatpush1.msra.mxu0 0.0
        %4689 = vmatprep.subr.mxu0 0.0
        %4690 = vmatpush1.msra.mxu0 0.0
        %4691 = vmatprep.subr.mxu0 0.0
        %4692 = vmatpush1.msra.mxu0 0.0
        %4693 = vmatprep.subr.mxu0 0.0
        %4694 = vmatpush1.msra.mxu0 0.0
        %4695 = vmatprep.subr.mxu0 0.0
        %4696 = vmatpush1.msra.mxu0 0.0
        %4697 = vmatprep.subr.mxu0 0.0
        %4698 = vmatpush1.msra.mxu0 0.0
        %4699 = vmatprep.mubr.f32.mxu0 0.0
        %4700 = vmatmul.mubr.f32.gmra.mrb[0].mxu0 %v4624
        %v4701 = vpop.f32.mrb[0].mxu0
        %v4702 = vadd.f32 0.0, %v4701
        %v4703 = vpop.f32.mrb[0].mxu0
        %4704 = vmatprep.mubr.f32.mxu0 0.0
        %4705 = vmatmul.mubr.f32.gmra.mrb[0].mxu0 %v4627
        %v4706 = vpop.f32.mrb[0].mxu0
        %v4707 = vadd.f32 0.0, %v4706
        %v4708 = vpop.f32.mrb[0].mxu0
        %4709 = vmatprep.mubr.f32.mxu0 0.0
        %4710 = vmatmul.mubr.f32.gmra.mrb[0].mxu0 %v4630
        %v4711 = vpop.f32.mrb[0].mxu0
        %v4712 = vadd.f32 0.0, %v4711
        %v4713 = vpop.f32.mrb[0].mxu0
        %4714 = vmatprep.mubr.f32.mxu0 0.0
        %4715 = vmatmul.mubr.f32.gmra.mrb[0].mxu0 %v4633
        %v4716 = vpop.f32.mrb[0].mxu0
        %v4717 = vadd.f32 0.0, %v4716
        %v4718 = vpop.f32.mrb[0].mxu0
        %4719 = vdwg.mxu0
        %v4720 = vld [vmem:[%s7] sm:$0xff]
        %v4721 = vld [vmem:[%s7 + $0x8] sm:$0xff]
        %v4722 = vld [vmem:[%s7 + $0x10] sm:$0xff]
        %v4723 = vld [vmem:[%s7 + $0x18] sm:$0xff]
        %vm4724 = vcmask 130048
        %v4726 = vsel %vm4724, %v4707, 0
        %4728 = vmatprep.subr.mxu0 0.0
        %4729 = vmatpush1.msra.mxu0 %v4722
        %4730 = vmatprep.subr.mxu0 0.0
        %4731 = vmatpush1.msra.mxu0 %v4723
        %4732 = vmatprep.subr.mxu0 0.0
        %4733 = vmatpush1.msra.mxu0 0.0
        %4734 = vmatprep.subr.mxu0 0.0
        %4735 = vmatpush1.msra.mxu0 0.0
        %4736 = vmatprep.subr.mxu0 0.0
        %4737 = vmatpush1.msra.mxu0 0.0
        %4738 = vmatprep.subr.mxu0 0.0
        %4739 = vmatpush1.msra.mxu0 0.0
        %4740 = vmatprep.subr.mxu0 0.0
        %4741 = vmatpush1.msra.mxu0 0.0
        %4742 = vmatprep.subr.mxu0 0.0
        %4743 = vmatpush1.msra.mxu0 0.0
        %4744 = vmatprep.subr.mxu0 0.0
        %4745 = vmatpush1.msra.mxu0 0.0
        %4746 = vmatprep.subr.mxu0 0.0
        %4747 = vmatpush1.msra.mxu0 0.0
        %4748 = vmatprep.subr.mxu0 0.0
        %4749 = vmatpush1.msra.mxu0 0.0
        %4750 = vmatprep.subr.mxu0 0.0
        %4751 = vmatpush1.msra.mxu0 0.0
        %4752 = vmatprep.subr.mxu0 0.0
        %4753 = vmatpush1.msra.mxu0 0.0
        %4754 = vmatprep.subr.mxu0 0.0
        %4755 = vmatpush1.msra.mxu0 0.0
        %4756 = vmatprep.subr.mxu0 0.0
        %4757 = vmatpush1.msra.mxu0 0.0
        %4758 = vmatprep.subr.mxu0 0.0
        %4759 = vmatpush1.msra.mxu0 0.0
        %4760 = vmatprep.subr.mxu0 0.0
        %4761 = vmatpush1.msra.mxu0 0.0
        %4762 = vmatprep.subr.mxu0 0.0
        %4763 = vmatpush1.msra.mxu0 0.0
        %4764 = vmatprep.subr.mxu0 0.0
        %4765 = vmatpush1.msra.mxu0 0.0
        %4766 = vmatprep.subr.mxu0 0.0
        %4767 = vmatpush1.msra.mxu0 0.0
        %4768 = vmatprep.subr.mxu0 0.0
        %4769 = vmatpush1.msra.mxu0 0.0
        %4770 = vmatprep.subr.mxu0 0.0
        %4771 = vmatpush1.msra.mxu0 0.0
        %4772 = vmatprep.subr.mxu0 0.0
        %4773 = vmatpush1.msra.mxu0 0.0
        %4774 = vmatprep.subr.mxu0 0.0
        %4775 = vmatpush1.msra.mxu0 0.0
        %4776 = vmatprep.subr.mxu0 0.0
        %4777 = vmatpush1.msra.mxu0 0.0
        %4778 = vmatprep.subr.mxu0 0.0
        %4779 = vmatpush1.msra.mxu0 0.0
        %4780 = vmatprep.subr.mxu0 0.0
        %4781 = vmatpush1.msra.mxu0 0.0
        %4782 = vmatprep.subr.mxu0 0.0
        %4783 = vmatpush1.msra.mxu0 0.0
        %4784 = vmatprep.subr.mxu0 0.0
        %4785 = vmatpush1.msra.mxu0 0.0
        %4786 = vmatprep.subr.mxu0 0.0
        %4787 = vmatpush1.msra.mxu0 0.0
        %4788 = vmatprep.subr.mxu0 0.0
        %4789 = vmatpush1.msra.mxu0 0.0
        %4790 = vmatprep.subr.mxu0 0.0
        %4791 = vmatpush1.msra.mxu0 0.0
        %4792 = vmatprep.mubr.f32.mxu0 0.0
        %4793 = vmatmul.mubr.f32.gmra.mrb[0].mxu0 %v4726
        %v4794 = vpop.f32.mrb[0].mxu0
        %v4795 = vadd.f32 0.0, %v4794
        %v4796 = vpop.f32.mrb[0].mxu0
        %4797 = vdwg.mxu0
        %v4799 = vsel %vm4724, %v4702, 0
        %4801 = vmatprep.subr.mxu0 0.0
        %4802 = vmatpush1.msra.mxu0 %v4720
        %4803 = vmatprep.subr.mxu0 0.0
        %4804 = vmatpush1.msra.mxu0 %v4721
        %4805 = vmatprep.subr.mxu0 0.0
        %4806 = vmatpush1.msra.mxu0 0.0
        %4807 = vmatprep.subr.mxu0 0.0
        %4808 = vmatpush1.msra.mxu0 0.0
        %4809 = vmatprep.subr.mxu0 0.0
        %4810 = vmatpush1.msra.mxu0 0.0
        %4811 = vmatprep.subr.mxu0 0.0
        %4812 = vmatpush1.msra.mxu0 0.0
        %4813 = vmatprep.subr.mxu0 0.0
        %4814 = vmatpush1.msra.mxu0 0.0
        %4815 = vmatprep.subr.mxu0 0.0
        %4816 = vmatpush1.msra.mxu0 0.0
        %4817 = vmatprep.subr.mxu0 0.0
        %4818 = vmatpush1.msra.mxu0 0.0
        %4819 = vmatprep.subr.mxu0 0.0
        %4820 = vmatpush1.msra.mxu0 0.0
        %4821 = vmatprep.subr.mxu0 0.0
        %4822 = vmatpush1.msra.mxu0 0.0
        %4823 = vmatprep.subr.mxu0 0.0
        %4824 = vmatpush1.msra.mxu0 0.0
        %4825 = vmatprep.subr.mxu0 0.0
        %4826 = vmatpush1.msra.mxu0 0.0
        %4827 = vmatprep.subr.mxu0 0.0
        %4828 = vmatpush1.msra.mxu0 0.0
        %4829 = vmatprep.subr.mxu0 0.0
        %4830 = vmatpush1.msra.mxu0 0.0
        %4831 = vmatprep.subr.mxu0 0.0
        %4832 = vmatpush1.msra.mxu0 0.0
        %4833 = vmatprep.subr.mxu0 0.0
        %4834 = vmatpush1.msra.mxu0 0.0
        %4835 = vmatprep.subr.mxu0 0.0
        %4836 = vmatpush1.msra.mxu0 0.0
        %4837 = vmatprep.subr.mxu0 0.0
        %4838 = vmatpush1.msra.mxu0 0.0
        %4839 = vmatprep.subr.mxu0 0.0
        %4840 = vmatpush1.msra.mxu0 0.0
        %4841 = vmatprep.subr.mxu0 0.0
        %4842 = vmatpush1.msra.mxu0 0.0
        %4843 = vmatprep.subr.mxu0 0.0
        %4844 = vmatpush1.msra.mxu0 0.0
        %4845 = vmatprep.subr.mxu0 0.0
        %4846 = vmatpush1.msra.mxu0 0.0
        %4847 = vmatprep.subr.mxu0 0.0
        %4848 = vmatpush1.msra.mxu0 0.0
        %4849 = vmatprep.subr.mxu0 0.0
        %4850 = vmatpush1.msra.mxu0 0.0
        %4851 = vmatprep.subr.mxu0 0.0
        %4852 = vmatpush1.msra.mxu0 0.0
        %4853 = vmatprep.subr.mxu0 0.0
        %4854 = vmatpush1.msra.mxu0 0.0
        %4855 = vmatprep.subr.mxu0 0.0
        %4856 = vmatpush1.msra.mxu0 0.0
        %4857 = vmatprep.subr.mxu0 0.0
        %4858 = vmatpush1.msra.mxu0 0.0
        %4859 = vmatprep.subr.mxu0 0.0
        %4860 = vmatpush1.msra.mxu0 0.0
        %4861 = vmatprep.subr.mxu0 0.0
        %4862 = vmatpush1.msra.mxu0 0.0
        %4863 = vmatprep.subr.mxu0 0.0
        %4864 = vmatpush1.msra.mxu0 0.0
        %4865 = vmatprep.mubr.f32.mxu0 0.0
        %4866 = vmatmul.mubr.f32.gmra.mrb[0].mxu0 %v4799
        %v4867 = vpop.f32.mrb[0].mxu0
        %v4868 = vadd.f32 %v4795, %v4867
        %v4869 = vpop.f32.mrb[0].mxu0
        %4870 = vdwg.mxu0
        %v4871 = vld [vmem:[%s7 + $0x20] sm:$0xff]
        %v4872 = vld [vmem:[%s7 + $0x28] sm:$0xff]
        %v4874 = vsel %vm4724, %v4712, 0
        %4876 = vmatprep.subr.mxu0 0.0
        %4877 = vmatpush1.msra.mxu0 %v4871
        %4878 = vmatprep.subr.mxu0 0.0
        %4879 = vmatpush1.msra.mxu0 %v4872
        %4880 = vmatprep.subr.mxu0 0.0
        %4881 = vmatpush1.msra.mxu0 0.0
        %4882 = vmatprep.subr.mxu0 0.0
        %4883 = vmatpush1.msra.mxu0 0.0
        %4884 = vmatprep.subr.mxu0 0.0
        %4885 = vmatpush1.msra.mxu0 0.0
        %4886 = vmatprep.subr.mxu0 0.0
        %4887 = vmatpush1.msra.mxu0 0.0
        %4888 = vmatprep.subr.mxu0 0.0
        %4889 = vmatpush1.msra.mxu0 0.0
        %4890 = vmatprep.subr.mxu0 0.0
        %4891 = vmatpush1.msra.mxu0 0.0
        %4892 = vmatprep.subr.mxu0 0.0
        %4893 = vmatpush1.msra.mxu0 0.0
        %4894 = vmatprep.subr.mxu0 0.0
        %4895 = vmatpush1.msra.mxu0 0.0
        %4896 = vmatprep.subr.mxu0 0.0
        %4897 = vmatpush1.msra.mxu0 0.0
        %4898 = vmatprep.subr.mxu0 0.0
        %4899 = vmatpush1.msra.mxu0 0.0
        %4900 = vmatprep.subr.mxu0 0.0
        %4901 = vmatpush1.msra.mxu0 0.0
        %4902 = vmatprep.subr.mxu0 0.0
        %4903 = vmatpush1.msra.mxu0 0.0
        %4904 = vmatprep.subr.mxu0 0.0
        %4905 = vmatpush1.msra.mxu0 0.0
        %4906 = vmatprep.subr.mxu0 0.0
        %4907 = vmatpush1.msra.mxu0 0.0
        %4908 = vmatprep.subr.mxu0 0.0
        %4909 = vmatpush1.msra.mxu0 0.0
        %4910 = vmatprep.subr.mxu0 0.0
        %4911 = vmatpush1.msra.mxu0 0.0
        %4912 = vmatprep.subr.mxu0 0.0
        %4913 = vmatpush1.msra.mxu0 0.0
        %4914 = vmatprep.subr.mxu0 0.0
        %4915 = vmatpush1.msra.mxu0 0.0
        %4916 = vmatprep.subr.mxu0 0.0
        %4917 = vmatpush1.msra.mxu0 0.0
        %4918 = vmatprep.subr.mxu0 0.0
        %4919 = vmatpush1.msra.mxu0 0.0
        %4920 = vmatprep.subr.mxu0 0.0
        %4921 = vmatpush1.msra.mxu0 0.0
        %4922 = vmatprep.subr.mxu0 0.0
        %4923 = vmatpush1.msra.mxu0 0.0
        %4924 = vmatprep.subr.mxu0 0.0
        %4925 = vmatpush1.msra.mxu0 0.0
        %4926 = vmatprep.subr.mxu0 0.0
        %4927 = vmatpush1.msra.mxu0 0.0
        %4928 = vmatprep.subr.mxu0 0.0
        %4929 = vmatpush1.msra.mxu0 0.0
        %4930 = vmatprep.subr.mxu0 0.0
        %4931 = vmatpush1.msra.mxu0 0.0
        %4932 = vmatprep.subr.mxu0 0.0
        %4933 = vmatpush1.msra.mxu0 0.0
        %4934 = vmatprep.subr.mxu0 0.0
        %4935 = vmatpush1.msra.mxu0 0.0
        %4936 = vmatprep.subr.mxu0 0.0
        %4937 = vmatpush1.msra.mxu0 0.0
        %4938 = vmatprep.subr.mxu0 0.0
        %4939 = vmatpush1.msra.mxu0 0.0
        %4940 = vmatprep.mubr.f32.mxu0 0.0
        %4941 = vmatmul.mubr.f32.gmra.mrb[0].mxu0 %v4874
        %v4942 = vpop.f32.mrb[0].mxu0
        %v4943 = vadd.f32 0.0, %v4942
        %v4944 = vpop.f32.mrb[0].mxu0
        %4945 = vdwg.mxu0
        %v4946 = vadd.f32 %v4868, %v4943
        %v4947 = vld [vmem:[%s7 + $0x30] sm:$0xff]
        %v4948 = vld [vmem:[%s7 + $0x38] sm:$0xff]
        %v4950 = vsel %vm4724, %v4717, 0
        %4952 = vmatprep.subr.mxu0 0.0
        %4953 = vmatpush1.msra.mxu0 %v4947
        %4954 = vmatprep.subr.mxu0 0.0
        %4955 = vmatpush1.msra.mxu0 %v4948
        %4956 = vmatprep.subr.mxu0 0.0
        %4957 = vmatpush1.msra.mxu0 0.0
        %4958 = vmatprep.subr.mxu0 0.0
        %4959 = vmatpush1.msra.mxu0 0.0
        %4960 = vmatprep.subr.mxu0 0.0
        %4961 = vmatpush1.msra.mxu0 0.0
        %4962 = vmatprep.subr.mxu0 0.0
        %4963 = vmatpush1.msra.mxu0 0.0
        %4964 = vmatprep.subr.mxu0 0.0
        %4965 = vmatpush1.msra.mxu0 0.0
        %4966 = vmatprep.subr.mxu0 0.0
        %4967 = vmatpush1.msra.mxu0 0.0
        %4968 = vmatprep.subr.mxu0 0.0
        %4969 = vmatpush1.msra.mxu0 0.0
        %4970 = vmatprep.subr.mxu0 0.0
        %4971 = vmatpush1.msra.mxu0 0.0
        %4972 = vmatprep.subr.mxu0 0.0
        %4973 = vmatpush1.msra.mxu0 0.0
        %4974 = vmatprep.subr.mxu0 0.0
        %4975 = vmatpush1.msra.mxu0 0.0
        %4976 = vmatprep.subr.mxu0 0.0
        %4977 = vmatpush1.msra.mxu0 0.0
        %4978 = vmatprep.subr.mxu0 0.0
        %4979 = vmatpush1.msra.mxu0 0.0
        %4980 = vmatprep.subr.mxu0 0.0
        %4981 = vmatpush1.msra.mxu0 0.0
        %4982 = vmatprep.subr.mxu0 0.0
        %4983 = vmatpush1.msra.mxu0 0.0
        %4984 = vmatprep.subr.mxu0 0.0
        %4985 = vmatpush1.msra.mxu0 0.0
        %4986 = vmatprep.subr.mxu0 0.0
        %4987 = vmatpush1.msra.mxu0 0.0
        %4988 = vmatprep.subr.mxu0 0.0
        %4989 = vmatpush1.msra.mxu0 0.0
        %4990 = vmatprep.subr.mxu0 0.0
        %4991 = vmatpush1.msra.mxu0 0.0
        %4992 = vmatprep.subr.mxu0 0.0
        %4993 = vmatpush1.msra.mxu0 0.0
        %4994 = vmatprep.subr.mxu0 0.0
        %4995 = vmatpush1.msra.mxu0 0.0
        %4996 = vmatprep.subr.mxu0 0.0
        %4997 = vmatpush1.msra.mxu0 0.0
        %4998 = vmatprep.subr.mxu0 0.0
        %4999 = vmatpush1.msra.mxu0 0.0
        %5000 = vmatprep.subr.mxu0 0.0
        %5001 = vmatpush1.msra.mxu0 0.0
        %5002 = vmatprep.subr.mxu0 0.0
        %5003 = vmatpush1.msra.mxu0 0.0
        %5004 = vmatprep.subr.mxu0 0.0
        %5005 = vmatpush1.msra.mxu0 0.0
        %5006 = vmatprep.subr.mxu0 0.0
        %5007 = vmatpush1.msra.mxu0 0.0
        %5008 = vmatprep.subr.mxu0 0.0
        %5009 = vmatpush1.msra.mxu0 0.0
        %5010 = vmatprep.subr.mxu0 0.0
        %5011 = vmatpush1.msra.mxu0 0.0
        %5012 = vmatprep.subr.mxu0 0.0
        %5013 = vmatpush1.msra.mxu0 0.0
        %5014 = vmatprep.subr.mxu0 0.0
        %5015 = vmatpush1.msra.mxu0 0.0
        %5016 = vmatprep.mubr.f32.mxu0 0.0
        %5017 = vmatmul.mubr.f32.gmra.mrb[0].mxu0 %v4950
        %v5018 = vpop.f32.mrb[0].mxu0
        %v5019 = vadd.f32 0.0, %v5018
        %v5020 = vpop.f32.mrb[0].mxu0
        %5021 = vdwg.mxu0
        %v5022 = vadd.f32 %v4946, %v5019
        %v5023 = vld [vmem:[#allocation10] sm:$0x1]
        %v5025 = vlaneseq
        %v5026 = vshrl.u32 %v5025, 7
        %v5027 = vsub.s32 0, %v5026
        %v5028 = vrot.slane %v5023, %v5027
        %v5030 = vadd.f32 %v5022, %v5028
        %v5031 = vmax.f32 %v5030, 0.0
        %vm5032 = vcmask 15360
        %v5033 = vsel %vm5032, %v5031, -inf
        %5034 = vmax.xlane.f32.xlu0 %v5033
        %v5035 = vpop.xlane.xlu0 %5034
        %v5036 = vsub.f32 %v5031, %v5035
        %v5037 = vmul.f32 %v5036, 1.442695
        %v5038 = vpow.pop %v5037
        %v5039 = vsel %vm5032, %v5038, 0.0
        %5040 = vadd.xlane.f32.xlu0 %v5039
        %v5041 = vpop.xlane.xlu0 %5040
        %v5042 = vrcp.pop %v5041
        %v5043 = vmul.f32 %v5038, %v5042
        %v5044 = vlaneseq
        %v5045 = vand.u32 %v5044, 127
        %vm5046 = vcmp.eq.s32.totalorder %v5045, 0
        %vm5047 = vcmp.eq.s32.totalorder %v5045, 1
        %5049 = vset.pattern.permute.xlu0 1
        %5050 = vperm.xlu0 %5049, %v5043
        %v5051 = vpop.permute.xlu0 %5050
        %v5053 = vsel %vm5047, %v5051, 0.0
        %5054 = vset.pattern.permute.xlu0 0
        %5055 = vperm.xlu0 %5054, %v5043
        %v5056 = vpop.permute.xlu0 %5055
        %v5058 = vsel %vm5046, %v5056, %v5053
        %5059 = vst [vmem:[%s486] sm:$0xff] %v5058
        %s5060 = sand.u32 %s275, 1
        %s5061 = scalar_lea.sflag [#allocation4], %s5060
        %s5062 = sand.u32 %s275, 1
        %s5063 = smul.addr %s5062, 8
        %s5064 = scalar_lea.vmem [#allocation14], %s5063
        // Predicated region
        $region93: #{tpu_custom_call.1} parent=63 // pred_check
          %p5065 = pneg %p285
        $region94: #{tpu_custom_call.1} parent=63 // pred_check_branch
          %5067 = sbr.rel (%p5065) target = $region96
        $region95: #{tpu_custom_call.1} parent=63 // pred_region
          %s5069 = ssub.s32 128, 128
          %5070 = vsyncadd %s5061, %s5069
          %s5071 = smul.addr %s31, 128
          %s5072 = scalar_lea.hbm %s11, %s5071
          %s5074 = sshll.u32 %s5064, 4
          %s5075 = int_to_ptr.vmem [resolvable:$true] %s5074
          %5077 = dma.vmem_to_hbm [thread:$0]  %s5075, 128, %s5072, %s5061
        $region96: #{tpu_custom_call.1} parent=63 // pred_fallthru
          _
      $region64: #{tpu_custom_call.1} parent=5 // pred_fallthru
        _
      %p5078 = scmp.le.s32.totalorder 2, %s26
      // Predicated region
      $region97: #{tpu_custom_call.1} parent=5 // pred_check
        %p5079 = pneg %p5078
      $region98: #{tpu_custom_call.1} parent=5 // pred_check_branch
        %5081 = sbr.rel (%p5079) target = $region100
      $region99: #{tpu_custom_call.1} parent=5 // pred_region
        %s5082 = ssub.s32 %s26, 2
        // Predicated region
        $region101: #{tpu_custom_call.1} parent=99 // pred_check
          %p5083 = pneg %p291
        $region102: #{tpu_custom_call.1} parent=99 // pred_check_branch
          %5085 = sbr.rel (%p5083) target = $region104
        $region103: #{tpu_custom_call.1} parent=99 // pred_region
          %s5086 = sand.u32 %s276, 1
          %s5087 = scalar_lea.sflag [#allocation4], %s5086
          %s5088 = sand.u32 %s276, 1
          %s5089 = smul.addr %s5088, 8
          %s5090 = scalar_lea.vmem [#allocation14], %s5089
          %5091 = dma.done %s5087, 128
        $region104: #{tpu_custom_call.1} parent=99 // pred_fallthru
          _
      $region100: #{tpu_custom_call.1} parent=5 // pred_fallthru
        _
    $region6: #{tpu_custom_call.1} parent=1 // loop_footer
      %s30 = sadd.s32 1, %s26
    $region7: #{tpu_custom_call.1} parent=1 // loop_footer_branch
      %25 = sbr.rel target = $region3
    $region8: #{tpu_custom_call.1} parent=1 // loop_exit
      _
    %5092 = vsyncpa [#allocation3], 1
    %s5093 = scalar_lea.sflag [#allocation3], 1
    %5094 = vsyncpa %s5093, 1
    %5095 = vsyncpa [#allocation6], 1
    %5096 = vsyncpa [#allocation9], 1
    %5097 = vsyncpa [#allocation12], 1
    %5098 = vsyncpa [#allocation4], 1
    %s5099 = scalar_lea.sflag [#allocation4], 1
    %5100 = vsyncpa %s5099, 1

</llo_original>
